<compile_context>
chip_gen: v7x
topology: tpu7x:2x2x1
jax: 0.10.0
libtpu: 0.0.40
codegen_flags: <defaults>
</compile_context>

<pallas_src>
import functools

import jax
import jax.numpy as jnp
from jax.experimental import pallas as pl
from jax.experimental.pallas import tpu as pltpu


# ----------------------------------------------------------------------------
# helpers
# ----------------------------------------------------------------------------
def _round_up(x, m):
    return (x + m - 1) // m * m


def _pick_divisor(n, target, quantum):
    """Largest divisor of n that is a multiple of `quantum` and <= target.
    Falls back to n (full dim) -- always satisfies the block-shape rule."""
    if n <= target:
        return n
    b = (target // quantum) * quantum
    while b >= quantum:
        if n % b == 0:
            return b
        b -= quantum
    return n


@functools.lru_cache(maxsize=1)
def _vmem_budget_bytes():
    """Per-generation scoped-VMEM budget (conservative if the query fails)."""
    try:
        cap = int(pltpu.get_tpu_info().vmem_capacity_bytes)
    except Exception:
        cap = 64 * 1024 * 1024           # v7x per-core VMEM (worst case)
    return int(max(32 * 1024 * 1024, min(96 * 1024 * 1024, cap * 2 // 3)))


# ----------------------------------------------------------------------------
# Pallas kernels
# ----------------------------------------------------------------------------
def _make_matmul_kernel(activation, has_residual):
    """Tiled matmul with fused epilogue: + bias (+ residual) (+ relu|sigmoid)."""

    def kernel(a_ref, b_ref, bias_ref, *rest):
        if has_residual:
            res_ref, o_ref, acc_ref = rest
        else:
            o_ref, acc_ref = rest
            res_ref = None

        @pl.when(pl.program_id(2) == 0)
        def _():
            acc_ref[...] = jnp.zeros_like(acc_ref)

        acc_ref[...] += jnp.dot(a_ref[...], b_ref[...],
                                preferred_element_type=jnp.float32)

        @pl.when(pl.program_id(2) == pl.num_programs(2) - 1)
        def _():
            y = acc_ref[...] + bias_ref[...]          # (1,tn) broadcast, f32
            if has_residual:
                y = y + res_ref[...].astype(jnp.float32)
            if activation == "relu":
                y = jnp.maximum(y, 0.0)
            elif activation == "sigmoid":
                y = pl.reciprocal(1.0 + jnp.exp(-y), approx=True)  # EUP slot
                y = jnp.clip(y, 0.0, 1.0)
            o_ref[...] = y.astype(o_ref.dtype)

    return kernel


def _add_kernel(a_ref, b_ref, o_ref):
    o_ref[...] = a_ref[...] + b_ref[...]


# ----------------------------------------------------------------------------
# Fused matmul wrapper (bf16 operands/output, f32 accumulation, fused epilogue)
# ----------------------------------------------------------------------------
def _tile_vmem_bytes(tm, tn, tk, has_res):
    b = 2 * (tm * tk + tk * tn) * 2          # double-buffered bf16 A / B tiles
    b += 2 * tm * tn * 2                     # double-buffered bf16 output tile
    b += tm * tn * 4                         # f32 accumulator
    b += 2 * tn * 4                          # bias
    if has_res:
        b += 2 * tm * tn * 2                 # bf16 residual tile
    return b


def _select_tiles(M, Kp, Np, has_res, budget):
    tk = Kp if Kp <= 4608 else next(
        t for t in (2048, 1024, 512, 256, 128) if Kp % t == 0)
    tn_opts = [t for t in (512, 256, 128) if Np % t == 0] or [Np]
    tm_cap = min(1024, _round_up(M, 128))
    tm_opts = [tm_cap] + [t for t in (512, 256, 128) if t < tm_cap]

    tm, tn, done = tm_opts[-1], tn_opts[-1], False
    for cand_tn in tn_opts:
        for cand_tm in tm_opts:
            if _tile_vmem_bytes(cand_tm, cand_tn, tk, has_res) <= budget:
                tm, tn, done = cand_tm, cand_tn, True
                break
        if done:
            break
    while (not done and tk % 256 == 0 and
           _tile_vmem_bytes(tm, tn, tk, has_res) > budget):
        tk //= 2

    # Expose >=2 output tiles so both v7x TensorCores get work.
    if (_round_up(M, tm) // tm) * (Np // tn) < 2:
        if tm >= 256 and (tm // 2) % 128 == 0:
            tm //= 2
        elif tn >= 256 and (tn // 2) % 128 == 0:
            tn //= 2
    return tm, tn, tk


def fused_matmul(a, pack, residual=None, activation=None):
    """a: (M, K) activations; pack['w']: pre-padded (Kp, Np) bf16 weights;
    pack['bias']: (1, Np) f32.  Returns (M, Cout) bf16."""
    M, K = a.shape
    w, bias = pack["w"], pack["bias"]
    Kp, Np = w.shape
    Cout = pack["n"]

    budget = _vmem_budget_bytes()
    tm, tn, tk = _select_tiles(M, Kp, Np, residual is not None,
                               budget - 4 * 1024 * 1024)
    Mp = _round_up(M, tm)

    a = a.astype(jnp.bfloat16)
    if Mp != M or Kp != K:
        a = jnp.pad(a, ((0, Mp - M), (0, Kp - K)))

    in_specs = [pl.BlockSpec((tm, tk), lambda i, j, k: (i, k)),
                pl.BlockSpec((tk, tn), lambda i, j, k: (k, j)),
                pl.BlockSpec((1, tn), lambda i, j, k: (0, j))]
    operands = [a, w, bias]

    if residual is not None:
        r = residual.astype(jnp.bfloat16)
        if Mp != M or Np != Cout:
            r = jnp.pad(r, ((0, Mp - M), (0, Np - Cout)))
        in_specs.append(pl.BlockSpec((tm, tn), lambda i, j, k: (i, j)))
        operands.append(r)

    res_bytes = Mp * Np * 2 if residual is not None else 0
    cost = pl.CostEstimate(
        flops=2 * Mp * Np * Kp,
        transcendentals=Mp * Np if activation == "sigmoid" else 0,
        bytes_accessed=Mp * Kp * 2 + Kp * Np * 2 + Mp * Np * 2 + Np * 4
        + res_bytes)

    out = pl.pallas_call(
        _make_matmul_kernel(activation, residual is not None),
        out_shape=jax.ShapeDtypeStruct((Mp, Np), jnp.bfloat16),
        grid_spec=pltpu.PrefetchScalarGridSpec(
            num_scalar_prefetch=0,
            grid=(Mp // tm, Np // tn, Kp // tk),
            in_specs=in_specs,
            out_specs=pl.BlockSpec((tm, tn), lambda i, j, k: (i, j)),
            scratch_shapes=[pltpu.VMEM((tm, tn), jnp.float32)]),
        compiler_params=pltpu.CompilerParams(
            dimension_semantics=("parallel", "parallel", "arbitrary"),
            vmem_limit_bytes=budget),
        cost_estimate=cost,
    )(*operands)

    if Mp != M or Np != Cout:
        out = out[:M, :Cout]
    return out


# ----------------------------------------------------------------------------
# Gridded elementwise add (lane-dense 2D layout) -- decoder fallback path only
# ----------------------------------------------------------------------------
def _ew_pallas(kernel, arrays):
    R, C = arrays[0].shape
    dt = arrays[0].dtype
    qr = 16 if jnp.dtype(dt).itemsize == 2 else 8
    bC = _pick_divisor(C, 4096, 128)
    row_target = max(qr, (4 * 1024 * 1024) // max(bC * jnp.dtype(dt).itemsize, 1))
    bR = _pick_divisor(R, row_target, qr)
    spec = pl.BlockSpec((bR, bC), lambda i, j: (i, j))
    return pl.pallas_call(
        kernel,
        out_shape=jax.ShapeDtypeStruct((R, C), dt),
        grid=(R // bR, C // bC),
        in_specs=[spec] * len(arrays),
        out_specs=spec,
        compiler_params=pltpu.CompilerParams(
            dimension_semantics=("parallel", "parallel")),
    )(*arrays)


def ew_add(a, b):
    N, H, W, C = a.shape
    y = _ew_pallas(_add_kernel, [a.reshape(N * H, W * C),
                                 b.astype(a.dtype).reshape(N * H, W * C)])
    return y.reshape(N, H, W, C)


# ----------------------------------------------------------------------------
# Conv / transposed conv / pooling built on the fused matmul
# ----------------------------------------------------------------------------
def conv2d_fused(x, pack, stride=1, padding=0, residual=None, activation=None):
    """x: NHWC bf16.  pack: prepared weight (BN folded, padded, bf16)."""
    N, H, W, Cin = x.shape
    KH, KW = pack["kh"], pack["kw"]
    x = x.astype(jnp.bfloat16)
    if padding > 0:
        x = jnp.pad(x, ((0, 0), (padding, padding), (padding, padding), (0, 0)))
    Hp, Wp = x.shape[1], x.shape[2]
    Ho = (Hp - KH) // stride + 1
    Wo = (Wp - KW) // stride + 1
    # TODO(synk): stream the KHxKW taps straight from the padded NHWC tensor via
    #             extra 'arbitrary' K-grid steps + window index_map instead of
    #             materializing the (bf16) im2col buffer in HBM.
    cols = []
    for kh in range(KH):
        for kw in range(KW):
            cols.append(x[:, kh:kh + stride * (Ho - 1) + 1:stride,
                          kw:kw + stride * (Wo - 1) + 1:stride, :])
    a = cols[0] if len(cols) == 1 else jnp.concatenate(cols, axis=-1)
    a = a.reshape(N * Ho * Wo, KH * KW * Cin)
    res2 = None
    if residual is not None:
        res2 = residual.reshape(N * Ho * Wo, pack["n"])
    y = fused_matmul(a, pack, residual=res2, activation=activation)
    return y.reshape(N, Ho, Wo, pack["n"])


def conv_transpose2d_fused(x, packs, residual=None, activation=None):
    """ConvTranspose2d(k=3, s=2, p=1, op=1) via the 4-phase sub-pixel
    decomposition (four small stride-1 convs, then interleave).  If `residual`
    (NHWC, shape (N,2H,2W,Cout)) is given, the skip-add is fused into each
    phase matmul's epilogue."""
    N, H, W, Cin = x.shape
    Cout = packs["ee"]["n"]
    r = {}
    for name, (dy, dx) in (("ee", (0, 0)), ("eo", (0, 1)),
                           ("oe", (1, 0)), ("oo", (1, 1))):
        r[name] = residual[:, dy::2, dx::2, :] if residual is not None else None
    xpr = jnp.pad(x, ((0, 0), (0, 0), (0, 1), (0, 0)))       # pad right
    xpb = jnp.pad(x, ((0, 0), (0, 1), (0, 0), (0, 0)))       # pad bottom
    xpbr = jnp.pad(x, ((0, 0), (0, 1), (0, 1), (0, 0)))      # pad both
    y_ee = conv2d_fused(x, packs["ee"], residual=r["ee"], activation=activation)
    y_eo = conv2d_fused(xpr, packs["eo"], residual=r["eo"], activation=activation)
    y_oe = conv2d_fused(xpb, packs["oe"], residual=r["oe"], activation=activation)
    y_oo = conv2d_fused(xpbr, packs["oo"], residual=r["oo"], activation=activation)
    row_e = jnp.stack([y_ee, y_eo], axis=3).reshape(N, H, 2 * W, Cout)
    row_o = jnp.stack([y_oe, y_oo], axis=3).reshape(N, H, 2 * W, Cout)
    return jnp.stack([row_e, row_o], axis=2).reshape(N, 2 * H, 2 * W, Cout)


def maxpool_3x3_s2_p1(x):
    """3x3 / stride-2 / pad-1 max pool as ONE Pallas kernel: the padded
    activation is read once; both the H (outer-dim slices of a free (Ho+1,2)
    split) and W (strided pl.ds reads) reductions happen in VMEM."""
    N, H, W, C = x.shape
    Ho = (H - 1) // 2 + 1
    Wo = (W - 1) // 2 + 1
    Hp = 2 * Ho + 2                      # even -> row-major split is a bitcast
    Wp = W + 2
    xp = jnp.pad(x, ((0, 0), (1, Hp - H - 1), (1, 1), (0, 0)),
                 constant_values=-jnp.inf)
    xr = xp.reshape(N, Ho + 1, 2, Wp, C)

    def kernel(x_ref, o_ref, row_ref):
        a = x_ref[0, 0:Ho, 0, :, :]                       # rows 2r
        b = x_ref[0, 0:Ho, 1, :, :]                       # rows 2r+1
        c = x_ref[0, 1:Ho + 1, 0, :, :]                   # rows 2r+2
        row_ref[...] = jnp.maximum(jnp.maximum(a, b), c).astype(jnp.float32)
        aw = row_ref[:, pl.ds(0, Wo, stride=2), :]        # cols 2c
        bw = row_ref[:, pl.ds(1, Wo, stride=2), :]        # cols 2c+1
        cw = row_ref[:, pl.ds(2, Wo, stride=2), :]        # cols 2c+2
        o_ref[0, :, :, :] = jnp.maximum(jnp.maximum(aw, bw), cw
                                        ).astype(o_ref.dtype)

    return pl.pallas_call(
        kernel,
        out_shape=jax.ShapeDtypeStruct((N, Ho, Wo, C), x.dtype),
        grid_spec=pltpu.PrefetchScalarGridSpec(
            num_scalar_prefetch=0,
            grid=(N,),
            in_specs=[pl.BlockSpec((1, Ho + 1, 2, Wp, C),
                                   lambda n: (n, 0, 0, 0, 0))],
            out_specs=pl.BlockSpec((1, Ho, Wo, C), lambda n: (n, 0, 0, 0)),
            scratch_shapes=[pltpu.VMEM((Ho, Wp, C), jnp.float32)]),
        compiler_params=pltpu.CompilerParams(
            dimension_semantics=("parallel",)),
    )(xr)


def align_shape(x, desired_shape):
    # NHWC analogue of FCNBase.align_shape (center-crop H/W)
    left = (x.shape[1] - desired_shape[1]) // 2
    top = (x.shape[2] - desired_shape[2]) // 2
    return x[:, left:left + desired_shape[1], top:top + desired_shape[2], :]


def deconv_skip(x, packs, pool):
    """deconv -> align_shape -> + pool, with the add fused into the deconv
    epilogues whenever the crop is a no-op (the common case)."""
    N, H, W, _ = x.shape
    if pool.shape[1] == 2 * H and pool.shape[2] == 2 * W:
        return conv_transpose2d_fused(x, packs, residual=pool)
    y = conv_transpose2d_fused(x, packs)
    y = align_shape(y, pool.shape)
    return ew_add(y, pool)


# ----------------------------------------------------------------------------
# Parameters (same shapes as the PyTorch module's __init__)
# ----------------------------------------------------------------------------
def _kaiming_conv(key, kh, kw, cin, cout):
    fan_out = cout * kh * kw
    std = (2.0 / fan_out) ** 0.5
    return std * jax.random.normal(key, (kh, kw, cin, cout), jnp.float32)


def _bn_params(c):
    return dict(gamma=jnp.ones((c,), jnp.float32),
                beta=jnp.zeros((c,), jnp.float32),
                mean=jnp.zeros((c,), jnp.float32),
                var=jnp.ones((c,), jnp.float32))


def _deconv_params(key, cin, cout):
    # PyTorch ConvTranspose2d layout: weight (Cin, Cout, 3, 3), default init.
    k1, k2 = jax.random.split(key)
    bound = 1.0 / ((cout * 9) ** 0.5)
    w = jax.random.uniform(k1, (cin, cout, 3, 3), jnp.float32, -bound, bound)
    b = jax.random.uniform(k2, (cout,), jnp.float32, -bound, bound)
    return dict(w=w, b=b)


def _make_layer(keys, inplanes, planes, blocks, stride):
    layer = []
    for bidx in range(blocks):
        s = stride if bidx == 0 else 1
        p = dict(stride=s,
                 conv1_w=_kaiming_conv(next(keys), 3, 3, inplanes, planes),
                 bn1=_bn_params(planes),
                 conv2_w=_kaiming_conv(next(keys), 3, 3, planes, planes),
                 bn2=_bn_params(planes))
        if s != 1 or inplanes != planes:            # BasicBlock.expansion == 1
            p["down_w"] = _kaiming_conv(next(keys), 1, 1, inplanes, planes)
            p["down_bn"] = _bn_params(planes)
        layer.append(p)
        inplanes = planes
    return layer, inplanes


def init_params(key):
    keys = iter(jax.random.split(key, 64))
    params = {}
    params["conv1_w"] = _kaiming_conv(next(keys), 7, 7, 4, 64)
    params["bn1"] = _bn_params(64)
    inplanes = 64
    params["layer1"], inplanes = _make_layer(keys, inplanes, 64, 3, 1)
    params["layer2"], inplanes = _make_layer(keys, inplanes, 128, 4, 2)
    params["layer3"], inplanes = _make_layer(keys, inplanes, 256, 6, 2)
    params["layer4"], inplanes = _make_layer(keys, inplanes, 512, 3, 2)
    params["deconv1"] = _deconv_params(next(keys), 512, 256)
    params["deconv2"] = _deconv_params(next(keys), 256, 128)
    params["deconv3"] = _deconv_params(next(keys), 128, 64)
    params["deconv4a"] = _deconv_params(next(keys), 64, 64)   # stride-4 path
    params["deconv4b"] = _deconv_params(next(keys), 64, 1)
    return params


# ---- one-time inference prep: fold BN, reshape/pad/cast weights to bf16 -----
def _fold_bn(w_hwio, bn, eps=1e-5):
    scale = bn["gamma"] * jax.lax.rsqrt(bn["var"] + eps)
    w = w_hwio * scale[None, None, None, :]
    bias = bn["beta"] - bn["mean"] * scale
    return w, bias


def _pack_conv(w_hwio, bias):
    KH, KW, Cin, Cout = w_hwio.shape
    K = KH * KW * Cin
    Kp, Np = _round_up(K, 128), _round_up(Cout, 128)
    wm = w_hwio.reshape(K, Cout).astype(jnp.float32)
    wm = jnp.pad(wm, ((0, Kp - K), (0, Np - Cout))).astype(jnp.bfloat16)
    b = jnp.pad(bias.astype(jnp.float32), (0, Np - Cout)).reshape(1, Np)
    return dict(w=wm, bias=b, kh=KH, kw=KW, n=Cout)


def _pack_deconv(w_pt, bias):
    # equivalent-conv (cross-correlation) kernel of the transposed conv:
    # spatial flip of the PyTorch (Cin,Cout,3,3) weight, moved to HWIO, then
    # split into the 4-phase sub-kernels.
    wc = jnp.transpose(w_pt[:, :, ::-1, ::-1], (2, 3, 0, 1))   # (3,3,Cin,Cout)
    ee = wc[1:2, 1:2]
    eo = jnp.stack([wc[1, 0], wc[1, 2]], axis=0)[None, :, :, :]      # (1,2,..)
    oe = jnp.stack([wc[0, 1], wc[2, 1]], axis=0)[:, None, :, :]      # (2,1,..)
    oo = jnp.stack([jnp.stack([wc[0, 0], wc[0, 2]], axis=0),
                    jnp.stack([wc[2, 0], wc[2, 2]], axis=0)], axis=0)  # (2,2,..)
    return dict(ee=_pack_conv(ee, bias), eo=_pack_conv(eo, bias),
                oe=_pack_conv(oe, bias), oo=_pack_conv(oo, bias))


def prepare_params(params):
    prep = {"stem": _pack_conv(*_fold_bn(params["conv1_w"], params["bn1"]))}
    for lname in ("layer1", "layer2", "layer3", "layer4"):
        blocks = []
        for p in params[lname]:
            b = dict(stride=p["stride"],
                     conv1=_pack_conv(*_fold_bn(p["conv1_w"], p["bn1"])),
                     conv2=_pack_conv(*_fold_bn(p["conv2_w"], p["bn2"])))
            if "down_w" in p:
                b["down"] = _pack_conv(*_fold_bn(p["down_w"], p["down_bn"]))
            blocks.append(b)
        prep[lname] = blocks
    for d in ("deconv1", "deconv2", "deconv3", "deconv4a", "deconv4b"):
        prep[d] = _pack_deconv(params[d]["w"], params[d]["b"])
    return prep


# ----------------------------------------------------------------------------
# Forward pass
# ----------------------------------------------------------------------------
def basic_block_fwd(x, p):
    h = conv2d_fused(x, p["conv1"], stride=p["stride"], padding=1,
                     activation="relu")
    if "down" in p:
        identity = conv2d_fused(x, p["down"], stride=p["stride"], padding=0)
    else:
        identity = x
    # bn2 + residual add + relu fused into conv2's matmul epilogue
    return conv2d_fused(h, p["conv2"], stride=1, padding=1,
                        residual=identity, activation="relu")


def run_layer(x, layer_params):
    for p in layer_params:
        x = basic_block_fwd(x, p)
    return x


def rgb_mask_net_forward(prep, x_nchw):
    x = jnp.transpose(x_nchw, (0, 2, 3, 1)).astype(jnp.bfloat16)  # NCHW->NHWC
    input_shape = x.shape

    x = conv2d_fused(x, prep["stem"], stride=2, padding=3, activation="relu")
    x = maxpool_3x3_s2_p1(x)
    pool0 = x
    x = run_layer(x, prep["layer1"])
    x = run_layer(x, prep["layer2"]); pool1 = x
    x = run_layer(x, prep["layer3"]); pool2 = x
    x = run_layer(x, prep["layer4"])

    x = deconv_skip(x, prep["deconv1"], pool2)
    x = deconv_skip(x, prep["deconv2"], pool1)
    x = deconv_skip(x, prep["deconv3"], pool0)
    x = conv_transpose2d_fused(x, prep["deconv4a"])
    x = conv_transpose2d_fused(x, prep["deconv4b"], activation="sigmoid")
    x = align_shape(x, input_shape)

    return jnp.transpose(x, (0, 3, 1, 2)).astype(jnp.float32)  # NHWC -> NCHW


# ----------------------------------------------------------------------------
if __name__ == "__main__":
    key = jax.random.PRNGKey(0)
    pkey, xkey = jax.random.split(key)
    raw_params = init_params(pkey)
    params = prepare_params(raw_params)     # fold BN, pad & cast weights once

    # Smallest spatial size where every encoder stage stays non-degenerate.
    x = jax.random.normal(xkey, (2, 4, 64, 64), jnp.float32)  # NCHW like PyTorch

    y = rgb_mask_net_forward(params, x)
    y = jax.block_until_ready(y)

    assert y.shape == (2, 1, 64, 64), y.shape
    assert bool(jnp.all(jnp.isfinite(y)))
    assert bool(jnp.all((y >= 0.0) & (y <= 1.0)))
    print("KERNEL_OK")
</pallas_src>

<mosaic_0001>
module attributes {stable_mosaic.version = 11 : i64} {
  func.func @kernel(%arg0: i32, %arg1: i32, %arg2: i32, %arg3: memref<1024x256xbf16, #tpu.memory_space<vmem>>, %arg4: memref<256x128xbf16, #tpu.memory_space<vmem>>, %arg5: memref<1x128xf32, #tpu.memory_space<vmem>>, %arg6: memref<1024x128xbf16, #tpu.memory_space<vmem>>, %arg7: memref<1024x128xf32, #tpu.memory_space<vmem>>) attributes {dimension_semantics = [#tpu.dimension_semantics<parallel>, #tpu.dimension_semantics<parallel>, #tpu.dimension_semantics<arbitrary>], iteration_bounds = array<i64: 2, 1, 1>, scalar_prefetch = 0 : i64, scratch_operands = 1 : i64, tpu.core_type = #tpu.core_type<tc>, window_params = [{transform_indices = @transform_0, window_bounds = array<i64: 1024, 256>}, {transform_indices = @transform_1, window_bounds = array<i64: 256, 128>}, {transform_indices = @transform_2, window_bounds = array<i64: 1, 128>}, {transform_indices = @transform_3, window_bounds = array<i64: 1024, 128>}]} {
    %c0_i32 = arith.constant 0 : i32
    %0 = arith.cmpi eq, %arg2, %c0_i32 : i32
    %1 = arith.extui %0 : i1 to i32
    %c0_i32_0 = arith.constant 0 : i32
    %2 = arith.cmpi ne, %1, %c0_i32_0 : i32
    scf.if %2 {
      %cst_10 = arith.constant 0.000000e+00 : f32
      %12 = vector.broadcast %cst_10 : f32 to vector<1024x128xf32>
      %c0_11 = arith.constant 0 : index
      %c0_12 = arith.constant 0 : index
      %13 = vector.load %arg7[%c0_11, %c0_12] : memref<1024x128xf32, #tpu.memory_space<vmem>>, vector<1024x128xf32>
      tpu.vector_store %arg7[%c0_11, %c0_12], %12 {strides = array<i32>} : memref<1024x128xf32, #tpu.memory_space<vmem>>, vector<1024x128xf32>,
    } else {
    }
    %c0 = arith.constant 0 : index
    %c0_1 = arith.constant 0 : index
    %3 = vector.load %arg7[%c0, %c0_1] : memref<1024x128xf32, #tpu.memory_space<vmem>>, vector<1024x128xf32>
    %c0_2 = arith.constant 0 : index
    %c0_3 = arith.constant 0 : index
    %4 = vector.load %arg3[%c0_2, %c0_3] : memref<1024x256xbf16, #tpu.memory_space<vmem>>, vector<1024x256xbf16>
    %c0_4 = arith.constant 0 : index
    %c0_5 = arith.constant 0 : index
    %5 = vector.load %arg4[%c0_4, %c0_5] : memref<256x128xbf16, #tpu.memory_space<vmem>>, vector<256x128xbf16>
    %cst = arith.constant dense<0.000000e+00> : vector<1024x128xf32>
    %6 = tpu.matmul %4, %5, %cst {dimension_numbers = #tpu.dot_dimension_numbers<[1], [0], [0], [1], [0, 0, 1, 1], [], []>} : vector<1024x256xbf16>, vector<256x128xbf16>, vector<1024x128xf32> -> vector<1024x128xf32>
    %7 = arith.addf %3, %6 : vector<1024x128xf32>
    %c0_6 = arith.constant 0 : index
    %c0_7 = arith.constant 0 : index
    %8 = vector.load %arg7[%c0_6, %c0_7] : memref<1024x128xf32, #tpu.memory_space<vmem>>, vector<1024x128xf32>
    tpu.vector_store %arg7[%c0_6, %c0_7], %7 {strides = array<i32>} : memref<1024x128xf32, #tpu.memory_space<vmem>>, vector<1024x128xf32>,
    %c0_i32_8 = arith.constant 0 : i32
    %9 = arith.cmpi eq, %arg2, %c0_i32_8 : i32
    %10 = arith.extui %9 : i1 to i32
    %c0_i32_9 = arith.constant 0 : i32
    %11 = arith.cmpi ne, %10, %c0_i32_9 : i32
    scf.if %11 {
      %c0_10 = arith.constant 0 : index
      %c0_11 = arith.constant 0 : index
      %12 = vector.load %arg7[%c0_10, %c0_11] : memref<1024x128xf32, #tpu.memory_space<vmem>>, vector<1024x128xf32>
      %c0_12 = arith.constant 0 : index
      %c0_13 = arith.constant 0 : index
      %13 = vector.load %arg5[%c0_12, %c0_13] : memref<1x128xf32, #tpu.memory_space<vmem>>, vector<1x128xf32>
      %14 = vector.broadcast %13 : vector<1x128xf32> to vector<1024x128xf32>
      %15 = arith.addf %12, %14 : vector<1024x128xf32>
      %cst_14 = arith.constant 0.000000e+00 : f32
      %16 = vector.broadcast %cst_14 : f32 to vector<1024x128xf32>
      %17 = arith.maximumf %15, %16 : vector<1024x128xf32>
      %18 = arith.truncf %17 : vector<1024x128xf32> to vector<1024x128xbf16>
      %c0_15 = arith.constant 0 : index
      %c0_16 = arith.constant 0 : index
      %19 = vector.load %arg6[%c0_15, %c0_16] : memref<1024x128xbf16, #tpu.memory_space<vmem>>, vector<1024x128xbf16>
      tpu.vector_store %arg6[%c0_15, %c0_16], %18 {strides = array<i32>} : memref<1024x128xbf16, #tpu.memory_space<vmem>>, vector<1024x128xbf16>,
    } else {
    }
    return
  }
  func.func @transform_0(%arg0: i32, %arg1: i32, %arg2: i32) -> (i32, i32) {
    %c0_i32 = arith.constant 0 : i32
    return %arg0, %arg2 : i32, i32
  }
  func.func @transform_1(%arg0: i32, %arg1: i32, %arg2: i32) -> (i32, i32) {
    %c0_i32 = arith.constant 0 : i32
    return %arg2, %arg1 : i32, i32
  }
  func.func @transform_2(%arg0: i32, %arg1: i32, %arg2: i32) -> (i32, i32) {
    %c0_i32 = arith.constant 0 : i32
    %c0_i32_0 = arith.constant 0 : i32
    return %c0_i32, %arg1 : i32, i32
  }
  func.func @transform_3(%arg0: i32, %arg1: i32, %arg2: i32) -> (i32, i32) {
    %c0_i32 = arith.constant 0 : i32
    return %arg0, %arg1 : i32, i32
  }
}

</mosaic_0001>

<llo_original>
// kernel: tpu_custom_call.1
$region0: #{tpu_custom_call.1}
  #allocation0 [shape = 'u32[]', space=smem, size = 0x4, offset = 0x4, fixed_abs, tag = 'smem constant byte address 0x4 - core index']
  #allocation1 [shape = 'u32[144,128]{1,0:T(1,128)}', space=vmem, size = 0x12000, scoped, tag = 'internal scratch']
  #allocation2 [shape = 'f32[1024,128]{1,0:T(8,128)}', space=vmem, size = 0x80000, scoped, tag = 'scratch operand']
  %s0 = inlined_call_operand.hbm [shape: bf16[2048,256], index: 0, kind: input, shape index: {}]
  %s1 = inlined_call_operand.hbm [shape: bf16[256,128], index: 1, kind: input, shape index: {}]
  %s2 = inlined_call_operand.vmem [shape: f32[1,128], index: 2, kind: input, shape index: {}]
  %s3 = inlined_call_operand.hbm [shape: bf16[2048,128], index: 3, kind: output, shape index: {}]
  %s4 = sld [smem:[#allocation0]]
  $region61: #{tpu_custom_call.1} parent=0
    _
  %s6 = ssub.s32 1, %s4
  %s7 = scalar_select 0, %s6, %s4
  $region1: #{tpu_custom_call.1} parent=0
    #allocation3 [shape = 'u8[1048576]{0}', space=vmem, size = 0x100000, scoped, tag = 'input window, operand 0']
    #allocation4 [shape = 's32[2]{0}', space=sflag, size = 0x8, scoped, tag = 'scoped memory for tpu_custom_call.1']
    #allocation5 [shape = 's32[2]{0}', space=sflag, size = 0x8, scoped, tag = 'scoped memory for tpu_custom_call.1']
    #allocation6 [shape = 'u8[65536]{0}', space=vmem, size = 0x10000, scoped, tag = 'input window, operand 1, single buffered']
    #allocation7 [shape = 's32[1]{0}', space=sflag, size = 0x4, scoped, tag = 'scoped memory for tpu_custom_call.1']
    #allocation8 [shape = 'u8[524288]{0}', space=vmem, size = 0x80000, scoped, tag = 'output window, operand 0']
    %8 = vsyncpa [#allocation4], 0
    %s9 = scalar_lea.sflag [#allocation4], 1
    %10 = vsyncpa %s9, 0
    %11 = vsyncpa [#allocation7], 0
    %12 = vsyncpa [#allocation5], 0
    %s13 = scalar_lea.sflag [#allocation5], 1
    %14 = vsyncpa %s13, 0
    loop: start=0, step=1, limit=4
    $region2: #{tpu_custom_call.1} parent=1 // loop_pre_header
      _
    $region3: #{tpu_custom_call.1} parent=1 // loop_header
      %s16 = sphi 0, %s20
      %p17 = scmp.ge.s32.totalorder %s16, 4
      %s23 = sphi 0, %s42
      %s24 = sphi 0, %s38
      %s25 = sphi 0, %s34
      %s26 = sphi 0, %s23
      %s27 = sphi 0, %s24
      %s28 = sphi 0, %s25
      %s29 = sphi 0, %s26
      %s30 = sphi 0, %s27
      %s31 = sphi 0, %s28
      %s47 = sphi 0, %s49
      %s50 = sphi 0, %s47
      %s51 = sphi 0, %s50
      %s67 = sphi 0, %s51
      %s75 = sphi 0, %s77
      %s78 = sphi 0, %s75
      %s79 = sphi 0, %s78
      %s95 = sphi 0, %s79
      %s101 = sphi 0, %s103
      %s104 = sphi 0, %s101
      %s105 = sphi 0, %s104
      %s121 = sphi 0, %s105
      %s129 = sphi 0, %s131
      %s132 = sphi 0, %s129
      %s133 = sphi 0, %s132
      %s149 = sphi 0, %s133
    $region4: #{tpu_custom_call.1} parent=1 // loop_header_branch
      %19 = sbr.rel (%p17) target = $region8
    $region5: #{tpu_custom_call.1} parent=1 // loop_body
      %s21 = ssub.s32 %s16, 1
      %s22 = ssub.s32 %s16, 2
      %s32 = sadd.s32 1, %s25
      %p33 = scmp.ge.s32.totalorder %s32, 1
      %s34 = scalar_select %p33, 0, %s32
      %s35 = sadd.s32 1, %s24
      %s36 = scalar_select %p33, %s35, %s24
      %p37 = scmp.ge.s32.totalorder %s36, 1
      %s38 = scalar_select %p37, 0, %s36
      %s39 = sadd.s32 1, %s23
      %s40 = scalar_select %p37, %s39, %s23
      %p41 = scmp.ge.s32.totalorder %s40, 2
      %s42 = scalar_select %p41, 0, %s40
      %s43 = ssub.s32 %s23, %s42
      %s44 = ssub.s32 %s25, %s34
      %s45 = sor.u32 %s43, %s44
      %p46 = scmp.eq.s32.totalorder %s45, 0
      %s48 = sadd.s32 %s47, 1
      %s49 = scalar_select %p46, %s47, %s48
      %p52 = pneg %p46
      %p53 = scmp.eq.s32.totalorder %s16, 1
      %p54 = por %p52, %p53
      %p55 = scmp.ne.s32.totalorder %s47, %s50
      %p56 = scmp.eq.s32.totalorder %s16, 0
      %p57 = por %p55, %p56
      %p58 = scmp.ne.s32.totalorder %s47, %s50
      %p59 = scmp.eq.s32.totalorder %s21, 1
      %p60 = por %p58, %p59
      %p61 = scmp.ne.s32.totalorder %s50, %s51
      %p62 = scmp.eq.s32.totalorder %s21, 0
      %p63 = por %p61, %p62
      %p64 = scmp.ne.s32.totalorder %s50, %s51
      %p65 = scmp.eq.s32.totalorder %s22, 1
      %p66 = por %p64, %p65
      %p68 = scmp.ne.s32.totalorder %s51, %s67
      %p69 = scmp.eq.s32.totalorder %s22, 0
      %p70 = por %p68, %p69
      %s71 = ssub.s32 %s25, %s34
      %s72 = ssub.s32 %s24, %s38
      %s73 = sor.u32 %s71, %s72
      %p74 = scmp.eq.s32.totalorder %s73, 0
      %s76 = sadd.s32 %s75, 1
      %s77 = scalar_select %p74, %s75, %s76
      %p80 = pneg %p74
      %p81 = scmp.eq.s32.totalorder %s16, 1
      %p82 = por %p80, %p81
      %p83 = scmp.ne.s32.totalorder %s75, %s78
      %p84 = scmp.eq.s32.totalorder %s16, 0
      %p85 = por %p83, %p84
      %p86 = scmp.ne.s32.totalorder %s75, %s78
      %p87 = scmp.eq.s32.totalorder %s21, 1
      %p88 = por %p86, %p87
      %p89 = scmp.ne.s32.totalorder %s78, %s79
      %p90 = scmp.eq.s32.totalorder %s21, 0
      %p91 = por %p89, %p90
      %p92 = scmp.ne.s32.totalorder %s78, %s79
      %p93 = scmp.eq.s32.totalorder %s22, 1
      %p94 = por %p92, %p93
      %p96 = scmp.ne.s32.totalorder %s79, %s95
      %p97 = scmp.eq.s32.totalorder %s22, 0
      %p98 = por %p96, %p97
      %s99 = ssub.s32 %s24, %s38
      %p100 = scmp.eq.s32.totalorder %s99, 0
      %s102 = sadd.s32 %s101, 1
      %s103 = scalar_select %p100, %s101, %s102
      %p106 = pneg %p100
      %p107 = scmp.eq.s32.totalorder %s16, 1
      %p108 = por %p106, %p107
      %p109 = scmp.ne.s32.totalorder %s101, %s104
      %p110 = scmp.eq.s32.totalorder %s16, 0
      %p111 = por %p109, %p110
      %p112 = scmp.ne.s32.totalorder %s101, %s104
      %p113 = scmp.eq.s32.totalorder %s21, 1
      %p114 = por %p112, %p113
      %p115 = scmp.ne.s32.totalorder %s104, %s105
      %p116 = scmp.eq.s32.totalorder %s21, 0
      %p117 = por %p115, %p116
      %p118 = scmp.ne.s32.totalorder %s104, %s105
      %p119 = scmp.eq.s32.totalorder %s22, 1
      %p120 = por %p118, %p119
      %p122 = scmp.ne.s32.totalorder %s105, %s121
      %p123 = scmp.eq.s32.totalorder %s22, 0
      %p124 = por %p122, %p123
      %s125 = ssub.s32 %s23, %s42
      %s126 = ssub.s32 %s24, %s38
      %s127 = sor.u32 %s125, %s126
      %p128 = scmp.eq.s32.totalorder %s127, 0
      %s130 = sadd.s32 %s129, 1
      %s131 = scalar_select %p128, %s129, %s130
      %p134 = pneg %p128
      %p135 = scmp.eq.s32.totalorder %s16, 1
      %p136 = por %p134, %p135
      %p137 = scmp.ne.s32.totalorder %s129, %s132
      %p138 = scmp.eq.s32.totalorder %s16, 0
      %p139 = por %p137, %p138
      %p140 = scmp.ne.s32.totalorder %s129, %s132
      %p141 = scmp.eq.s32.totalorder %s21, 1
      %p142 = por %p140, %p141
      %p143 = scmp.ne.s32.totalorder %s132, %s133
      %p144 = scmp.eq.s32.totalorder %s21, 0
      %p145 = por %p143, %p144
      %p146 = scmp.ne.s32.totalorder %s132, %s133
      %p147 = scmp.eq.s32.totalorder %s22, 1
      %p148 = por %p146, %p147
      %p150 = scmp.ne.s32.totalorder %s133, %s149
      %p151 = scmp.eq.s32.totalorder %s22, 0
      %p152 = por %p150, %p151
      %p153 = scmp.le.s32.totalorder 1, %s16
      %p154 = scmp.lt.s32.totalorder %s16, 3
      %p155 = pnand %p153, %p154
      %p156 = pneg %p155
      // Predicated region
      $region9: #{tpu_custom_call.1} parent=5 // pred_check
        _
      $region10: #{tpu_custom_call.1} parent=5 // pred_check_branch
        %158 = sbr.rel (%p155) target = $region12
      $region11: #{tpu_custom_call.1} parent=5 // pred_region
        %s159 = ssub.s32 %s16, 1
        // Predicated region
        $region13: #{tpu_custom_call.1} parent=11 // pred_check
          %p160 = pneg %p91
        $region14: #{tpu_custom_call.1} parent=11 // pred_check_branch
          %162 = sbr.rel (%p160) target = $region16
        $region15: #{tpu_custom_call.1} parent=11 // pred_region
          %s163 = smul.u32 32, %s28
          %s165 = ssub.s32 2048, 2048
          %166 = vsyncadd [#allocation7], %s165
          %s167 = sadd.s32 %s27, %s163
          %s168 = smul.addr %s167, 64
          %s169 = scalar_lea.hbm %s1, %s168
          %s170 = sshll.u32 [#allocation6], 4
          %s171 = int_to_ptr.vmem [resolvable:$true] %s170
          %176 = dma.hbm_to_vmem [thread:$0]  %s169, 2048, %s171, [#allocation7], 64, 64, 4
        $region16: #{tpu_custom_call.1} parent=11 // pred_fallthru
          _
        // Predicated region
        $region17: #{tpu_custom_call.1} parent=11 // pred_check
          %p177 = pneg %p117
        $region18: #{tpu_custom_call.1} parent=11 // pred_check_branch
          %179 = sbr.rel (%p177) target = $region20
        $region19: #{tpu_custom_call.1} parent=11 // pred_region
          %p180 = scmp.lt.s32.totalorder %s27, 0
          %s181 = scalar_select %p180, %s27, 0
          %s182 = scalar_lea.vmem %s2, %s181
        $region20: #{tpu_custom_call.1} parent=11 // pred_fallthru
          _
      $region12: #{tpu_custom_call.1} parent=5 // pred_fallthru
        _
      %p183 = scmp.lt.s32.totalorder %s16, 2
      // Predicated region
      $region21: #{tpu_custom_call.1} parent=5 // pred_check
        %p184 = pneg %p183
      $region22: #{tpu_custom_call.1} parent=5 // pred_check_branch
        %186 = sbr.rel (%p184) target = $region24
      $region23: #{tpu_custom_call.1} parent=5 // pred_region
        // Predicated region
        $region25: #{tpu_custom_call.1} parent=23 // pred_check
          %p187 = pneg %p57
        $region26: #{tpu_custom_call.1} parent=23 // pred_check_branch
          %189 = sbr.rel (%p187) target = $region28
        $region27: #{tpu_custom_call.1} parent=23 // pred_region
          %s190 = sand.u32 %s47, 1
          %s191 = scalar_lea.sflag [#allocation4], %s190
          %s192 = sand.u32 %s47, 1
          %s193 = smul.addr %s192, 1024
          %s194 = scalar_lea.vmem [#allocation3], %s193
          %s195 = smul.u32 128, %s23
          %s196 = smul.u32 2, %s25
          %s198 = ssub.s32 16384, 16384
          %199 = vsyncadd %s191, %s198
          %s200 = smul.addr %s195, 2
          %s201 = sadd.s32 %s196, %s200
          %s202 = smul.addr %s201, 64
          %s203 = scalar_lea.hbm %s0, %s202
          %s204 = sshll.u32 %s194, 4
          %s205 = int_to_ptr.vmem [resolvable:$true] %s204
          %210 = dma.hbm_to_vmem [thread:$0]  %s203, 16384, %s205, %s191, 128, 128, 8
        $region28: #{tpu_custom_call.1} parent=23 // pred_fallthru
          _
      $region24: #{tpu_custom_call.1} parent=5 // pred_fallthru
        _
      %p211 = scmp.le.s32.totalorder 1, %s16
      %p212 = scmp.lt.s32.totalorder %s16, 3
      %p213 = pnand %p211, %p212
      %p214 = pneg %p213
      // Predicated region
      $region29: #{tpu_custom_call.1} parent=5 // pred_check
        _
      $region30: #{tpu_custom_call.1} parent=5 // pred_check_branch
        %216 = sbr.rel (%p213) target = $region32
      $region31: #{tpu_custom_call.1} parent=5 // pred_region
        %s217 = ssub.s32 %s16, 1
        %s218 = sand.u32 %s50, 1
        %s219 = scalar_lea.sflag [#allocation4], %s218
        %s220 = sand.u32 %s50, 1
        %s221 = smul.addr %s220, 1024
        %s222 = scalar_lea.vmem [#allocation3], %s221
        // Predicated region
        $region33: #{tpu_custom_call.1} parent=31 // pred_check
          %p223 = pneg %p63
        $region34: #{tpu_custom_call.1} parent=31 // pred_check_branch
          %225 = sbr.rel (%p223) target = $region36
        $region35: #{tpu_custom_call.1} parent=31 // pred_region
          %226 = dma.done %s219, 16384
        $region36: #{tpu_custom_call.1} parent=31 // pred_fallthru
          _
        // Predicated region
        $region37: #{tpu_custom_call.1} parent=31 // pred_check
          %p227 = pneg %p91
        $region38: #{tpu_custom_call.1} parent=31 // pred_check_branch
          %229 = sbr.rel (%p227) target = $region40
        $region39: #{tpu_custom_call.1} parent=31 // pred_region
          %230 = dma.done [#allocation7], 2048
        $region40: #{tpu_custom_call.1} parent=31 // pred_fallthru
          _
        %s231 = sand.u32 %s50, 1
        %s232 = scalar_lea.sflag [#allocation4], %s231
        %s233 = sand.u32 %s50, 1
        %s234 = smul.addr %s233, 1024
        %s235 = scalar_lea.vmem [#allocation3], %s234
        %p236 = pneg %p63
        %p237 = pneg %p60
        %p238 = pneg %p91
        %p239 = pneg %p88
        %p240 = scmp.lt.s32.totalorder %s27, 0
        %s241 = scalar_select %p240, %s27, 0
        %s242 = scalar_lea.vmem %s2, %s241
        %p243 = pneg %p117
        %p244 = pneg %p114
        %p245 = pneg %p145
        %p246 = pneg %p142
        %s247 = sand.u32 %s132, 1
        %s248 = scalar_lea.sflag [#allocation5], %s247
        %s249 = sand.u32 %s132, 1
        %s250 = smul.addr %s249, 512
        %s251 = scalar_lea.vmem [#allocation8], %s250
        %s252 = smul.u32 128, %s26
        %s253 = smul.u32 2, %s28
        %s254 = smul.u32 32, %s28
        %p255 = scmp.lt.s32.totalorder %s27, 0
        %s256 = scalar_select %p255, %s27, 0
        %s257 = scalar_lea.vmem %s2, %s256
        %s258 = smul.u32 128, %s26
        %p260 = scmp.eq.s32.totalorder %s28, 0
        // Predicated region
        $region41: #{tpu_custom_call.1} parent=31 // pred_check
          %p261 = pneg %p260
        $region42: #{tpu_custom_call.1} parent=31 // pred_check_branch
          %263 = sbr.rel (%p261) target = $region44
        $region43: #{tpu_custom_call.1} parent=31 // pred_region
          %264 = vst [vmem:[#allocation2] sm:$0xff] 0.0
          %265 = vst [vmem:[#allocation2 + $0x8] sm:$0xff] 0.0
          %266 = vst [vmem:[#allocation2 + $0x10] sm:$0xff] 0.0
          %267 = vst [vmem:[#allocation2 + $0x18] sm:$0xff] 0.0
          %268 = vst [vmem:[#allocation2 + $0x20] sm:$0xff] 0.0
          %269 = vst [vmem:[#allocation2 + $0x28] sm:$0xff] 0.0
          %270 = vst [vmem:[#allocation2 + $0x30] sm:$0xff] 0.0
          %271 = vst [vmem:[#allocation2 + $0x38] sm:$0xff] 0.0
          %272 = vst [vmem:[#allocation2 + $0x40] sm:$0xff] 0.0
          %273 = vst [vmem:[#allocation2 + $0x48] sm:$0xff] 0.0
          %274 = vst [vmem:[#allocation2 + $0x50] sm:$0xff] 0.0
          %275 = vst [vmem:[#allocation2 + $0x58] sm:$0xff] 0.0
          %276 = vst [vmem:[#allocation2 + $0x60] sm:$0xff] 0.0
          %277 = vst [vmem:[#allocation2 + $0x68] sm:$0xff] 0.0
          %278 = vst [vmem:[#allocation2 + $0x70] sm:$0xff] 0.0
          %279 = vst [vmem:[#allocation2 + $0x78] sm:$0xff] 0.0
          %280 = vst [vmem:[#allocation2 + $0x80] sm:$0xff] 0.0
          %281 = vst [vmem:[#allocation2 + $0x88] sm:$0xff] 0.0
          %282 = vst [vmem:[#allocation2 + $0x90] sm:$0xff] 0.0
          %283 = vst [vmem:[#allocation2 + $0x98] sm:$0xff] 0.0
          %284 = vst [vmem:[#allocation2 + $0xa0] sm:$0xff] 0.0
          %285 = vst [vmem:[#allocation2 + $0xa8] sm:$0xff] 0.0
          %286 = vst [vmem:[#allocation2 + $0xb0] sm:$0xff] 0.0
          %287 = vst [vmem:[#allocation2 + $0xb8] sm:$0xff] 0.0
          %288 = vst [vmem:[#allocation2 + $0xc0] sm:$0xff] 0.0
          %289 = vst [vmem:[#allocation2 + $0xc8] sm:$0xff] 0.0
          %290 = vst [vmem:[#allocation2 + $0xd0] sm:$0xff] 0.0
          %291 = vst [vmem:[#allocation2 + $0xd8] sm:$0xff] 0.0
          %292 = vst [vmem:[#allocation2 + $0xe0] sm:$0xff] 0.0
          %293 = vst [vmem:[#allocation2 + $0xe8] sm:$0xff] 0.0
          %294 = vst [vmem:[#allocation2 + $0xf0] sm:$0xff] 0.0
          %295 = vst [vmem:[#allocation2 + $0xf8] sm:$0xff] 0.0
          %296 = vst [vmem:[#allocation2 + $0x100] sm:$0xff] 0.0
          %297 = vst [vmem:[#allocation2 + $0x108] sm:$0xff] 0.0
          %298 = vst [vmem:[#allocation2 + $0x110] sm:$0xff] 0.0
          %299 = vst [vmem:[#allocation2 + $0x118] sm:$0xff] 0.0
          %300 = vst [vmem:[#allocation2 + $0x120] sm:$0xff] 0.0
          %301 = vst [vmem:[#allocation2 + $0x128] sm:$0xff] 0.0
          %302 = vst [vmem:[#allocation2 + $0x130] sm:$0xff] 0.0
          %303 = vst [vmem:[#allocation2 + $0x138] sm:$0xff] 0.0
          %304 = vst [vmem:[#allocation2 + $0x140] sm:$0xff] 0.0
          %305 = vst [vmem:[#allocation2 + $0x148] sm:$0xff] 0.0
          %306 = vst [vmem:[#allocation2 + $0x150] sm:$0xff] 0.0
          %307 = vst [vmem:[#allocation2 + $0x158] sm:$0xff] 0.0
          %308 = vst [vmem:[#allocation2 + $0x160] sm:$0xff] 0.0
          %309 = vst [vmem:[#allocation2 + $0x168] sm:$0xff] 0.0
          %310 = vst [vmem:[#allocation2 + $0x170] sm:$0xff] 0.0
          %311 = vst [vmem:[#allocation2 + $0x178] sm:$0xff] 0.0
          %312 = vst [vmem:[#allocation2 + $0x180] sm:$0xff] 0.0
          %313 = vst [vmem:[#allocation2 + $0x188] sm:$0xff] 0.0
          %314 = vst [vmem:[#allocation2 + $0x190] sm:$0xff] 0.0
          %315 = vst [vmem:[#allocation2 + $0x198] sm:$0xff] 0.0
          %316 = vst [vmem:[#allocation2 + $0x1a0] sm:$0xff] 0.0
          %317 = vst [vmem:[#allocation2 + $0x1a8] sm:$0xff] 0.0
          %318 = vst [vmem:[#allocation2 + $0x1b0] sm:$0xff] 0.0
          %319 = vst [vmem:[#allocation2 + $0x1b8] sm:$0xff] 0.0
          %320 = vst [vmem:[#allocation2 + $0x1c0] sm:$0xff] 0.0
          %321 = vst [vmem:[#allocation2 + $0x1c8] sm:$0xff] 0.0
          %322 = vst [vmem:[#allocation2 + $0x1d0] sm:$0xff] 0.0
          %323 = vst [vmem:[#allocation2 + $0x1d8] sm:$0xff] 0.0
          %324 = vst [vmem:[#allocation2 + $0x1e0] sm:$0xff] 0.0
          %325 = vst [vmem:[#allocation2 + $0x1e8] sm:$0xff] 0.0
          %326 = vst [vmem:[#allocation2 + $0x1f0] sm:$0xff] 0.0
          %327 = vst [vmem:[#allocation2 + $0x1f8] sm:$0xff] 0.0
          %328 = vst [vmem:[#allocation2 + $0x200] sm:$0xff] 0.0
          %329 = vst [vmem:[#allocation2 + $0x208] sm:$0xff] 0.0
          %330 = vst [vmem:[#allocation2 + $0x210] sm:$0xff] 0.0
          %331 = vst [vmem:[#allocation2 + $0x218] sm:$0xff] 0.0
          %332 = vst [vmem:[#allocation2 + $0x220] sm:$0xff] 0.0
          %333 = vst [vmem:[#allocation2 + $0x228] sm:$0xff] 0.0
          %334 = vst [vmem:[#allocation2 + $0x230] sm:$0xff] 0.0
          %335 = vst [vmem:[#allocation2 + $0x238] sm:$0xff] 0.0
          %336 = vst [vmem:[#allocation2 + $0x240] sm:$0xff] 0.0
          %337 = vst [vmem:[#allocation2 + $0x248] sm:$0xff] 0.0
          %338 = vst [vmem:[#allocation2 + $0x250] sm:$0xff] 0.0
          %339 = vst [vmem:[#allocation2 + $0x258] sm:$0xff] 0.0
          %340 = vst [vmem:[#allocation2 + $0x260] sm:$0xff] 0.0
          %341 = vst [vmem:[#allocation2 + $0x268] sm:$0xff] 0.0
          %342 = vst [vmem:[#allocation2 + $0x270] sm:$0xff] 0.0
          %343 = vst [vmem:[#allocation2 + $0x278] sm:$0xff] 0.0
          %344 = vst [vmem:[#allocation2 + $0x280] sm:$0xff] 0.0
          %345 = vst [vmem:[#allocation2 + $0x288] sm:$0xff] 0.0
          %346 = vst [vmem:[#allocation2 + $0x290] sm:$0xff] 0.0
          %347 = vst [vmem:[#allocation2 + $0x298] sm:$0xff] 0.0
          %348 = vst [vmem:[#allocation2 + $0x2a0] sm:$0xff] 0.0
          %349 = vst [vmem:[#allocation2 + $0x2a8] sm:$0xff] 0.0
          %350 = vst [vmem:[#allocation2 + $0x2b0] sm:$0xff] 0.0
          %351 = vst [vmem:[#allocation2 + $0x2b8] sm:$0xff] 0.0
          %352 = vst [vmem:[#allocation2 + $0x2c0] sm:$0xff] 0.0
          %353 = vst [vmem:[#allocation2 + $0x2c8] sm:$0xff] 0.0
          %354 = vst [vmem:[#allocation2 + $0x2d0] sm:$0xff] 0.0
          %355 = vst [vmem:[#allocation2 + $0x2d8] sm:$0xff] 0.0
          %356 = vst [vmem:[#allocation2 + $0x2e0] sm:$0xff] 0.0
          %357 = vst [vmem:[#allocation2 + $0x2e8] sm:$0xff] 0.0
          %358 = vst [vmem:[#allocation2 + $0x2f0] sm:$0xff] 0.0
          %359 = vst [vmem:[#allocation2 + $0x2f8] sm:$0xff] 0.0
          %360 = vst [vmem:[#allocation2 + $0x300] sm:$0xff] 0.0
          %361 = vst [vmem:[#allocation2 + $0x308] sm:$0xff] 0.0
          %362 = vst [vmem:[#allocation2 + $0x310] sm:$0xff] 0.0
          %363 = vst [vmem:[#allocation2 + $0x318] sm:$0xff] 0.0
          %364 = vst [vmem:[#allocation2 + $0x320] sm:$0xff] 0.0
          %365 = vst [vmem:[#allocation2 + $0x328] sm:$0xff] 0.0
          %366 = vst [vmem:[#allocation2 + $0x330] sm:$0xff] 0.0
          %367 = vst [vmem:[#allocation2 + $0x338] sm:$0xff] 0.0
          %368 = vst [vmem:[#allocation2 + $0x340] sm:$0xff] 0.0
          %369 = vst [vmem:[#allocation2 + $0x348] sm:$0xff] 0.0
          %370 = vst [vmem:[#allocation2 + $0x350] sm:$0xff] 0.0
          %371 = vst [vmem:[#allocation2 + $0x358] sm:$0xff] 0.0
          %372 = vst [vmem:[#allocation2 + $0x360] sm:$0xff] 0.0
          %373 = vst [vmem:[#allocation2 + $0x368] sm:$0xff] 0.0
          %374 = vst [vmem:[#allocation2 + $0x370] sm:$0xff] 0.0
          %375 = vst [vmem:[#allocation2 + $0x378] sm:$0xff] 0.0
          %376 = vst [vmem:[#allocation2 + $0x380] sm:$0xff] 0.0
          %377 = vst [vmem:[#allocation2 + $0x388] sm:$0xff] 0.0
          %378 = vst [vmem:[#allocation2 + $0x390] sm:$0xff] 0.0
          %379 = vst [vmem:[#allocation2 + $0x398] sm:$0xff] 0.0
          %380 = vst [vmem:[#allocation2 + $0x3a0] sm:$0xff] 0.0
          %381 = vst [vmem:[#allocation2 + $0x3a8] sm:$0xff] 0.0
          %382 = vst [vmem:[#allocation2 + $0x3b0] sm:$0xff] 0.0
          %383 = vst [vmem:[#allocation2 + $0x3b8] sm:$0xff] 0.0
          %384 = vst [vmem:[#allocation2 + $0x3c0] sm:$0xff] 0.0
          %385 = vst [vmem:[#allocation2 + $0x3c8] sm:$0xff] 0.0
          %386 = vst [vmem:[#allocation2 + $0x3d0] sm:$0xff] 0.0
          %387 = vst [vmem:[#allocation2 + $0x3d8] sm:$0xff] 0.0
          %388 = vst [vmem:[#allocation2 + $0x3e0] sm:$0xff] 0.0
          %389 = vst [vmem:[#allocation2 + $0x3e8] sm:$0xff] 0.0
          %390 = vst [vmem:[#allocation2 + $0x3f0] sm:$0xff] 0.0
          %391 = vst [vmem:[#allocation2 + $0x3f8] sm:$0xff] 0.0
        $region44: #{tpu_custom_call.1} parent=31 // pred_fallthru
          _
        %v392 = vld [vmem:[#allocation2] sm:$0xff]
        %v393 = vld [vmem:[#allocation2 + $0x8] sm:$0xff]
        %v394 = vld [vmem:[#allocation2 + $0x10] sm:$0xff]
        %v395 = vld [vmem:[#allocation2 + $0x18] sm:$0xff]
        %v396 = vld [vmem:[#allocation2 + $0x20] sm:$0xff]
        %v397 = vld [vmem:[#allocation2 + $0x28] sm:$0xff]
        %v398 = vld [vmem:[#allocation2 + $0x30] sm:$0xff]
        %v399 = vld [vmem:[#allocation2 + $0x38] sm:$0xff]
        %v400 = vld [vmem:[#allocation2 + $0x40] sm:$0xff]
        %v401 = vld [vmem:[#allocation2 + $0x48] sm:$0xff]
        %v402 = vld [vmem:[#allocation2 + $0x50] sm:$0xff]
        %v403 = vld [vmem:[#allocation2 + $0x58] sm:$0xff]
        %v404 = vld [vmem:[#allocation2 + $0x60] sm:$0xff]
        %v405 = vld [vmem:[#allocation2 + $0x68] sm:$0xff]
        %v406 = vld [vmem:[#allocation2 + $0x70] sm:$0xff]
        %v407 = vld [vmem:[#allocation2 + $0x78] sm:$0xff]
        %v408 = vld [vmem:[#allocation2 + $0x80] sm:$0xff]
        %v409 = vld [vmem:[#allocation2 + $0x88] sm:$0xff]
        %v410 = vld [vmem:[#allocation2 + $0x90] sm:$0xff]
        %v411 = vld [vmem:[#allocation2 + $0x98] sm:$0xff]
        %v412 = vld [vmem:[#allocation2 + $0xa0] sm:$0xff]
        %v413 = vld [vmem:[#allocation2 + $0xa8] sm:$0xff]
        %v414 = vld [vmem:[#allocation2 + $0xb0] sm:$0xff]
        %v415 = vld [vmem:[#allocation2 + $0xb8] sm:$0xff]
        %v416 = vld [vmem:[#allocation2 + $0xc0] sm:$0xff]
        %v417 = vld [vmem:[#allocation2 + $0xc8] sm:$0xff]
        %v418 = vld [vmem:[#allocation2 + $0xd0] sm:$0xff]
        %v419 = vld [vmem:[#allocation2 + $0xd8] sm:$0xff]
        %v420 = vld [vmem:[#allocation2 + $0xe0] sm:$0xff]
        %v421 = vld [vmem:[#allocation2 + $0xe8] sm:$0xff]
        %v422 = vld [vmem:[#allocation2 + $0xf0] sm:$0xff]
        %v423 = vld [vmem:[#allocation2 + $0xf8] sm:$0xff]
        %v424 = vld [vmem:[#allocation2 + $0x100] sm:$0xff]
        %v425 = vld [vmem:[#allocation2 + $0x108] sm:$0xff]
        %v426 = vld [vmem:[#allocation2 + $0x110] sm:$0xff]
        %v427 = vld [vmem:[#allocation2 + $0x118] sm:$0xff]
        %v428 = vld [vmem:[#allocation2 + $0x120] sm:$0xff]
        %v429 = vld [vmem:[#allocation2 + $0x128] sm:$0xff]
        %v430 = vld [vmem:[#allocation2 + $0x130] sm:$0xff]
        %v431 = vld [vmem:[#allocation2 + $0x138] sm:$0xff]
        %v432 = vld [vmem:[#allocation2 + $0x140] sm:$0xff]
        %v433 = vld [vmem:[#allocation2 + $0x148] sm:$0xff]
        %v434 = vld [vmem:[#allocation2 + $0x150] sm:$0xff]
        %v435 = vld [vmem:[#allocation2 + $0x158] sm:$0xff]
        %v436 = vld [vmem:[#allocation2 + $0x160] sm:$0xff]
        %v437 = vld [vmem:[#allocation2 + $0x168] sm:$0xff]
        %v438 = vld [vmem:[#allocation2 + $0x170] sm:$0xff]
        %v439 = vld [vmem:[#allocation2 + $0x178] sm:$0xff]
        %v440 = vld [vmem:[#allocation2 + $0x180] sm:$0xff]
        %v441 = vld [vmem:[#allocation2 + $0x188] sm:$0xff]
        %v442 = vld [vmem:[#allocation2 + $0x190] sm:$0xff]
        %v443 = vld [vmem:[#allocation2 + $0x198] sm:$0xff]
        %v444 = vld [vmem:[#allocation2 + $0x1a0] sm:$0xff]
        %v445 = vld [vmem:[#allocation2 + $0x1a8] sm:$0xff]
        %v446 = vld [vmem:[#allocation2 + $0x1b0] sm:$0xff]
        %v447 = vld [vmem:[#allocation2 + $0x1b8] sm:$0xff]
        %v448 = vld [vmem:[#allocation2 + $0x1c0] sm:$0xff]
        %v449 = vld [vmem:[#allocation2 + $0x1c8] sm:$0xff]
        %v450 = vld [vmem:[#allocation2 + $0x1d0] sm:$0xff]
        %v451 = vld [vmem:[#allocation2 + $0x1d8] sm:$0xff]
        %v452 = vld [vmem:[#allocation2 + $0x1e0] sm:$0xff]
        %v453 = vld [vmem:[#allocation2 + $0x1e8] sm:$0xff]
        %v454 = vld [vmem:[#allocation2 + $0x1f0] sm:$0xff]
        %v455 = vld [vmem:[#allocation2 + $0x1f8] sm:$0xff]
        %v456 = vld [vmem:[#allocation2 + $0x200] sm:$0xff]
        %v457 = vld [vmem:[#allocation2 + $0x208] sm:$0xff]
        %v458 = vld [vmem:[#allocation2 + $0x210] sm:$0xff]
        %v459 = vld [vmem:[#allocation2 + $0x218] sm:$0xff]
        %v460 = vld [vmem:[#allocation2 + $0x220] sm:$0xff]
        %v461 = vld [vmem:[#allocation2 + $0x228] sm:$0xff]
        %v462 = vld [vmem:[#allocation2 + $0x230] sm:$0xff]
        %v463 = vld [vmem:[#allocation2 + $0x238] sm:$0xff]
        %v464 = vld [vmem:[#allocation2 + $0x240] sm:$0xff]
        %v465 = vld [vmem:[#allocation2 + $0x248] sm:$0xff]
        %v466 = vld [vmem:[#allocation2 + $0x250] sm:$0xff]
        %v467 = vld [vmem:[#allocation2 + $0x258] sm:$0xff]
        %v468 = vld [vmem:[#allocation2 + $0x260] sm:$0xff]
        %v469 = vld [vmem:[#allocation2 + $0x268] sm:$0xff]
        %v470 = vld [vmem:[#allocation2 + $0x270] sm:$0xff]
        %v471 = vld [vmem:[#allocation2 + $0x278] sm:$0xff]
        %v472 = vld [vmem:[#allocation2 + $0x280] sm:$0xff]
        %v473 = vld [vmem:[#allocation2 + $0x288] sm:$0xff]
        %v474 = vld [vmem:[#allocation2 + $0x290] sm:$0xff]
        %v475 = vld [vmem:[#allocation2 + $0x298] sm:$0xff]
        %v476 = vld [vmem:[#allocation2 + $0x2a0] sm:$0xff]
        %v477 = vld [vmem:[#allocation2 + $0x2a8] sm:$0xff]
        %v478 = vld [vmem:[#allocation2 + $0x2b0] sm:$0xff]
        %v479 = vld [vmem:[#allocation2 + $0x2b8] sm:$0xff]
        %v480 = vld [vmem:[#allocation2 + $0x2c0] sm:$0xff]
        %v481 = vld [vmem:[#allocation2 + $0x2c8] sm:$0xff]
        %v482 = vld [vmem:[#allocation2 + $0x2d0] sm:$0xff]
        %v483 = vld [vmem:[#allocation2 + $0x2d8] sm:$0xff]
        %v484 = vld [vmem:[#allocation2 + $0x2e0] sm:$0xff]
        %v485 = vld [vmem:[#allocation2 + $0x2e8] sm:$0xff]
        %v486 = vld [vmem:[#allocation2 + $0x2f0] sm:$0xff]
        %v487 = vld [vmem:[#allocation2 + $0x2f8] sm:$0xff]
        %v488 = vld [vmem:[#allocation2 + $0x300] sm:$0xff]
        %v489 = vld [vmem:[#allocation2 + $0x308] sm:$0xff]
        %v490 = vld [vmem:[#allocation2 + $0x310] sm:$0xff]
        %v491 = vld [vmem:[#allocation2 + $0x318] sm:$0xff]
        %v492 = vld [vmem:[#allocation2 + $0x320] sm:$0xff]
        %v493 = vld [vmem:[#allocation2 + $0x328] sm:$0xff]
        %v494 = vld [vmem:[#allocation2 + $0x330] sm:$0xff]
        %v495 = vld [vmem:[#allocation2 + $0x338] sm:$0xff]
        %v496 = vld [vmem:[#allocation2 + $0x340] sm:$0xff]
        %v497 = vld [vmem:[#allocation2 + $0x348] sm:$0xff]
        %v498 = vld [vmem:[#allocation2 + $0x350] sm:$0xff]
        %v499 = vld [vmem:[#allocation2 + $0x358] sm:$0xff]
        %v500 = vld [vmem:[#allocation2 + $0x360] sm:$0xff]
        %v501 = vld [vmem:[#allocation2 + $0x368] sm:$0xff]
        %v502 = vld [vmem:[#allocation2 + $0x370] sm:$0xff]
        %v503 = vld [vmem:[#allocation2 + $0x378] sm:$0xff]
        %v504 = vld [vmem:[#allocation2 + $0x380] sm:$0xff]
        %v505 = vld [vmem:[#allocation2 + $0x388] sm:$0xff]
        %v506 = vld [vmem:[#allocation2 + $0x390] sm:$0xff]
        %v507 = vld [vmem:[#allocation2 + $0x398] sm:$0xff]
        %v508 = vld [vmem:[#allocation2 + $0x3a0] sm:$0xff]
        %v509 = vld [vmem:[#allocation2 + $0x3a8] sm:$0xff]
        %v510 = vld [vmem:[#allocation2 + $0x3b0] sm:$0xff]
        %v511 = vld [vmem:[#allocation2 + $0x3b8] sm:$0xff]
        %v512 = vld [vmem:[#allocation2 + $0x3c0] sm:$0xff]
        %v513 = vld [vmem:[#allocation2 + $0x3c8] sm:$0xff]
        %v514 = vld [vmem:[#allocation2 + $0x3d0] sm:$0xff]
        %v515 = vld [vmem:[#allocation2 + $0x3d8] sm:$0xff]
        %v516 = vld [vmem:[#allocation2 + $0x3e0] sm:$0xff]
        %v517 = vld [vmem:[#allocation2 + $0x3e8] sm:$0xff]
        %v518 = vld [vmem:[#allocation2 + $0x3f0] sm:$0xff]
        %v519 = vld [vmem:[#allocation2 + $0x3f8] sm:$0xff]
        %v520 = vld [vmem:[%s222] sm:$0xff]
        %v521 = vld [vmem:[%s222 + $0x8] sm:$0xff]
        %v522 = vld [vmem:[%s222 + $0x10] sm:$0xff]
        %v523 = vld [vmem:[%s222 + $0x18] sm:$0xff]
        %v524 = vld [vmem:[%s222 + $0x20] sm:$0xff]
        %v525 = vld [vmem:[%s222 + $0x28] sm:$0xff]
        %v526 = vld [vmem:[%s222 + $0x30] sm:$0xff]
        %v527 = vld [vmem:[%s222 + $0x38] sm:$0xff]
        %v528 = vld [vmem:[%s222 + $0x40] sm:$0xff]
        %v529 = vld [vmem:[%s222 + $0x48] sm:$0xff]
        %v530 = vld [vmem:[%s222 + $0x50] sm:$0xff]
        %v531 = vld [vmem:[%s222 + $0x58] sm:$0xff]
        %v532 = vld [vmem:[%s222 + $0x60] sm:$0xff]
        %v533 = vld [vmem:[%s222 + $0x68] sm:$0xff]
        %v534 = vld [vmem:[%s222 + $0x70] sm:$0xff]
        %v535 = vld [vmem:[%s222 + $0x78] sm:$0xff]
        %v536 = vld [vmem:[%s222 + $0x80] sm:$0xff]
        %v537 = vld [vmem:[%s222 + $0x88] sm:$0xff]
        %v538 = vld [vmem:[%s222 + $0x90] sm:$0xff]
        %v539 = vld [vmem:[%s222 + $0x98] sm:$0xff]
        %v540 = vld [vmem:[%s222 + $0xa0] sm:$0xff]
        %v541 = vld [vmem:[%s222 + $0xa8] sm:$0xff]
        %v542 = vld [vmem:[%s222 + $0xb0] sm:$0xff]
        %v543 = vld [vmem:[%s222 + $0xb8] sm:$0xff]
        %v544 = vld [vmem:[%s222 + $0xc0] sm:$0xff]
        %v545 = vld [vmem:[%s222 + $0xc8] sm:$0xff]
        %v546 = vld [vmem:[%s222 + $0xd0] sm:$0xff]
        %v547 = vld [vmem:[%s222 + $0xd8] sm:$0xff]
        %v548 = vld [vmem:[%s222 + $0xe0] sm:$0xff]
        %v549 = vld [vmem:[%s222 + $0xe8] sm:$0xff]
        %v550 = vld [vmem:[%s222 + $0xf0] sm:$0xff]
        %v551 = vld [vmem:[%s222 + $0xf8] sm:$0xff]
        %v552 = vld [vmem:[%s222 + $0x100] sm:$0xff]
        %v553 = vld [vmem:[%s222 + $0x108] sm:$0xff]
        %v554 = vld [vmem:[%s222 + $0x110] sm:$0xff]
        %v555 = vld [vmem:[%s222 + $0x118] sm:$0xff]
        %v556 = vld [vmem:[%s222 + $0x120] sm:$0xff]
        %v557 = vld [vmem:[%s222 + $0x128] sm:$0xff]
        %v558 = vld [vmem:[%s222 + $0x130] sm:$0xff]
        %v559 = vld [vmem:[%s222 + $0x138] sm:$0xff]
        %v560 = vld [vmem:[%s222 + $0x140] sm:$0xff]
        %v561 = vld [vmem:[%s222 + $0x148] sm:$0xff]
        %v562 = vld [vmem:[%s222 + $0x150] sm:$0xff]
        %v563 = vld [vmem:[%s222 + $0x158] sm:$0xff]
        %v564 = vld [vmem:[%s222 + $0x160] sm:$0xff]
        %v565 = vld [vmem:[%s222 + $0x168] sm:$0xff]
        %v566 = vld [vmem:[%s222 + $0x170] sm:$0xff]
        %v567 = vld [vmem:[%s222 + $0x178] sm:$0xff]
        %v568 = vld [vmem:[%s222 + $0x180] sm:$0xff]
        %v569 = vld [vmem:[%s222 + $0x188] sm:$0xff]
        %v570 = vld [vmem:[%s222 + $0x190] sm:$0xff]
        %v571 = vld [vmem:[%s222 + $0x198] sm:$0xff]
        %v572 = vld [vmem:[%s222 + $0x1a0] sm:$0xff]
        %v573 = vld [vmem:[%s222 + $0x1a8] sm:$0xff]
        %v574 = vld [vmem:[%s222 + $0x1b0] sm:$0xff]
        %v575 = vld [vmem:[%s222 + $0x1b8] sm:$0xff]
        %v576 = vld [vmem:[%s222 + $0x1c0] sm:$0xff]
        %v577 = vld [vmem:[%s222 + $0x1c8] sm:$0xff]
        %v578 = vld [vmem:[%s222 + $0x1d0] sm:$0xff]
        %v579 = vld [vmem:[%s222 + $0x1d8] sm:$0xff]
        %v580 = vld [vmem:[%s222 + $0x1e0] sm:$0xff]
        %v581 = vld [vmem:[%s222 + $0x1e8] sm:$0xff]
        %v582 = vld [vmem:[%s222 + $0x1f0] sm:$0xff]
        %v583 = vld [vmem:[%s222 + $0x1f8] sm:$0xff]
        %v584 = vld [vmem:[%s222 + $0x200] sm:$0xff]
        %v585 = vld [vmem:[%s222 + $0x208] sm:$0xff]
        %v586 = vld [vmem:[%s222 + $0x210] sm:$0xff]
        %v587 = vld [vmem:[%s222 + $0x218] sm:$0xff]
        %v588 = vld [vmem:[%s222 + $0x220] sm:$0xff]
        %v589 = vld [vmem:[%s222 + $0x228] sm:$0xff]
        %v590 = vld [vmem:[%s222 + $0x230] sm:$0xff]
        %v591 = vld [vmem:[%s222 + $0x238] sm:$0xff]
        %v592 = vld [vmem:[%s222 + $0x240] sm:$0xff]
        %v593 = vld [vmem:[%s222 + $0x248] sm:$0xff]
        %v594 = vld [vmem:[%s222 + $0x250] sm:$0xff]
        %v595 = vld [vmem:[%s222 + $0x258] sm:$0xff]
        %v596 = vld [vmem:[%s222 + $0x260] sm:$0xff]
        %v597 = vld [vmem:[%s222 + $0x268] sm:$0xff]
        %v598 = vld [vmem:[%s222 + $0x270] sm:$0xff]
        %v599 = vld [vmem:[%s222 + $0x278] sm:$0xff]
        %v600 = vld [vmem:[%s222 + $0x280] sm:$0xff]
        %v601 = vld [vmem:[%s222 + $0x288] sm:$0xff]
        %v602 = vld [vmem:[%s222 + $0x290] sm:$0xff]
        %v603 = vld [vmem:[%s222 + $0x298] sm:$0xff]
        %v604 = vld [vmem:[%s222 + $0x2a0] sm:$0xff]
        %v605 = vld [vmem:[%s222 + $0x2a8] sm:$0xff]
        %v606 = vld [vmem:[%s222 + $0x2b0] sm:$0xff]
        %v607 = vld [vmem:[%s222 + $0x2b8] sm:$0xff]
        %v608 = vld [vmem:[%s222 + $0x2c0] sm:$0xff]
        %v609 = vld [vmem:[%s222 + $0x2c8] sm:$0xff]
        %v610 = vld [vmem:[%s222 + $0x2d0] sm:$0xff]
        %v611 = vld [vmem:[%s222 + $0x2d8] sm:$0xff]
        %v612 = vld [vmem:[%s222 + $0x2e0] sm:$0xff]
        %v613 = vld [vmem:[%s222 + $0x2e8] sm:$0xff]
        %v614 = vld [vmem:[%s222 + $0x2f0] sm:$0xff]
        %v615 = vld [vmem:[%s222 + $0x2f8] sm:$0xff]
        %v616 = vld [vmem:[%s222 + $0x300] sm:$0xff]
        %v617 = vld [vmem:[%s222 + $0x308] sm:$0xff]
        %v618 = vld [vmem:[%s222 + $0x310] sm:$0xff]
        %v619 = vld [vmem:[%s222 + $0x318] sm:$0xff]
        %v620 = vld [vmem:[%s222 + $0x320] sm:$0xff]
        %v621 = vld [vmem:[%s222 + $0x328] sm:$0xff]
        %v622 = vld [vmem:[%s222 + $0x330] sm:$0xff]
        %v623 = vld [vmem:[%s222 + $0x338] sm:$0xff]
        %v624 = vld [vmem:[%s222 + $0x340] sm:$0xff]
        %v625 = vld [vmem:[%s222 + $0x348] sm:$0xff]
        %v626 = vld [vmem:[%s222 + $0x350] sm:$0xff]
        %v627 = vld [vmem:[%s222 + $0x358] sm:$0xff]
        %v628 = vld [vmem:[%s222 + $0x360] sm:$0xff]
        %v629 = vld [vmem:[%s222 + $0x368] sm:$0xff]
        %v630 = vld [vmem:[%s222 + $0x370] sm:$0xff]
        %v631 = vld [vmem:[%s222 + $0x378] sm:$0xff]
        %v632 = vld [vmem:[%s222 + $0x380] sm:$0xff]
        %v633 = vld [vmem:[%s222 + $0x388] sm:$0xff]
        %v634 = vld [vmem:[%s222 + $0x390] sm:$0xff]
        %v635 = vld [vmem:[%s222 + $0x398] sm:$0xff]
        %v636 = vld [vmem:[%s222 + $0x3a0] sm:$0xff]
        %v637 = vld [vmem:[%s222 + $0x3a8] sm:$0xff]
        %v638 = vld [vmem:[%s222 + $0x3b0] sm:$0xff]
        %v639 = vld [vmem:[%s222 + $0x3b8] sm:$0xff]
        %v640 = vld [vmem:[%s222 + $0x3c0] sm:$0xff]
        %v641 = vld [vmem:[%s222 + $0x3c8] sm:$0xff]
        %v642 = vld [vmem:[%s222 + $0x3d0] sm:$0xff]
        %v643 = vld [vmem:[%s222 + $0x3d8] sm:$0xff]
        %v644 = vld [vmem:[%s222 + $0x3e0] sm:$0xff]
        %v645 = vld [vmem:[%s222 + $0x3e8] sm:$0xff]
        %v646 = vld [vmem:[%s222 + $0x3f0] sm:$0xff]
        %v647 = vld [vmem:[%s222 + $0x3f8] sm:$0xff]
        %v648 = vld [vmem:[#allocation6] sm:$0xf]
        %v649 = vld [vmem:[#allocation6 + $0x4] sm:$0xf]
        %v650 = vld [vmem:[#allocation6 + $0x8] sm:$0xf]
        %v651 = vld [vmem:[#allocation6 + $0xc] sm:$0xf]
        %v652 = vld [vmem:[#allocation6 + $0x10] sm:$0xf]
        %v653 = vld [vmem:[#allocation6 + $0x14] sm:$0xf]
        %v654 = vld [vmem:[#allocation6 + $0x18] sm:$0xf]
        %v655 = vld [vmem:[#allocation6 + $0x1c] sm:$0xf]
        %v656 = vld [vmem:[#allocation6 + $0x20] sm:$0xf]
        %v657 = vld [vmem:[#allocation6 + $0x24] sm:$0xf]
        %v658 = vld [vmem:[#allocation6 + $0x28] sm:$0xf]
        %v659 = vld [vmem:[#allocation6 + $0x2c] sm:$0xf]
        %v660 = vld [vmem:[#allocation6 + $0x30] sm:$0xf]
        %v661 = vld [vmem:[#allocation6 + $0x34] sm:$0xf]
        %v662 = vld [vmem:[#allocation6 + $0x38] sm:$0xf]
        %v663 = vld [vmem:[#allocation6 + $0x3c] sm:$0xf]
        %v664 = vld [vmem:[#allocation6 + $0x40] sm:$0xf]
        %v665 = vld [vmem:[#allocation6 + $0x44] sm:$0xf]
        %v666 = vld [vmem:[#allocation6 + $0x48] sm:$0xf]
        %v667 = vld [vmem:[#allocation6 + $0x4c] sm:$0xf]
        %v668 = vld [vmem:[#allocation6 + $0x50] sm:$0xf]
        %v669 = vld [vmem:[#allocation6 + $0x54] sm:$0xf]
        %v670 = vld [vmem:[#allocation6 + $0x58] sm:$0xf]
        %v671 = vld [vmem:[#allocation6 + $0x5c] sm:$0xf]
        %v672 = vld [vmem:[#allocation6 + $0x60] sm:$0xf]
        %v673 = vld [vmem:[#allocation6 + $0x64] sm:$0xf]
        %v674 = vld [vmem:[#allocation6 + $0x68] sm:$0xf]
        %v675 = vld [vmem:[#allocation6 + $0x6c] sm:$0xf]
        %v676 = vld [vmem:[#allocation6 + $0x70] sm:$0xf]
        %v677 = vld [vmem:[#allocation6 + $0x74] sm:$0xf]
        %v678 = vld [vmem:[#allocation6 + $0x78] sm:$0xf]
        %v679 = vld [vmem:[#allocation6 + $0x7c] sm:$0xf]
        %v808 = vunpack.c.l.b16 %v520
        %v809 = vunpack.c.h.b16 %v520
        %v810 = vunpack.c.l.b16 %v521
        %v811 = vunpack.c.h.b16 %v521
        %v812 = vunpack.c.l.b16 %v522
        %v813 = vunpack.c.h.b16 %v522
        %v814 = vunpack.c.l.b16 %v523
        %v815 = vunpack.c.h.b16 %v523
        %v816 = vunpack.c.l.b16 %v524
        %v817 = vunpack.c.h.b16 %v524
        %v818 = vunpack.c.l.b16 %v525
        %v819 = vunpack.c.h.b16 %v525
        %v820 = vunpack.c.l.b16 %v526
        %v821 = vunpack.c.h.b16 %v526
        %v822 = vunpack.c.l.b16 %v527
        %v823 = vunpack.c.h.b16 %v527
        %v824 = vunpack.c.l.b16 %v528
        %v825 = vunpack.c.h.b16 %v528
        %v826 = vunpack.c.l.b16 %v529
        %v827 = vunpack.c.h.b16 %v529
        %v828 = vunpack.c.l.b16 %v530
        %v829 = vunpack.c.h.b16 %v530
        %v830 = vunpack.c.l.b16 %v531
        %v831 = vunpack.c.h.b16 %v531
        %v832 = vunpack.c.l.b16 %v532
        %v833 = vunpack.c.h.b16 %v532
        %v834 = vunpack.c.l.b16 %v533
        %v835 = vunpack.c.h.b16 %v533
        %v836 = vunpack.c.l.b16 %v534
        %v837 = vunpack.c.h.b16 %v534
        %v838 = vunpack.c.l.b16 %v535
        %v839 = vunpack.c.h.b16 %v535
        %v840 = vunpack.c.l.b16 %v536
        %v841 = vunpack.c.h.b16 %v536
        %v842 = vunpack.c.l.b16 %v537
        %v843 = vunpack.c.h.b16 %v537
        %v844 = vunpack.c.l.b16 %v538
        %v845 = vunpack.c.h.b16 %v538
        %v846 = vunpack.c.l.b16 %v539
        %v847 = vunpack.c.h.b16 %v539
        %v848 = vunpack.c.l.b16 %v540
        %v849 = vunpack.c.h.b16 %v540
        %v850 = vunpack.c.l.b16 %v541
        %v851 = vunpack.c.h.b16 %v541
        %v852 = vunpack.c.l.b16 %v542
        %v853 = vunpack.c.h.b16 %v542
        %v854 = vunpack.c.l.b16 %v543
        %v855 = vunpack.c.h.b16 %v543
        %v856 = vunpack.c.l.b16 %v544
        %v857 = vunpack.c.h.b16 %v544
        %v858 = vunpack.c.l.b16 %v545
        %v859 = vunpack.c.h.b16 %v545
        %v860 = vunpack.c.l.b16 %v546
        %v861 = vunpack.c.h.b16 %v546
        %v862 = vunpack.c.l.b16 %v547
        %v863 = vunpack.c.h.b16 %v547
        %v864 = vunpack.c.l.b16 %v548
        %v865 = vunpack.c.h.b16 %v548
        %v866 = vunpack.c.l.b16 %v549
        %v867 = vunpack.c.h.b16 %v549
        %v868 = vunpack.c.l.b16 %v550
        %v869 = vunpack.c.h.b16 %v550
        %v870 = vunpack.c.l.b16 %v551
        %v871 = vunpack.c.h.b16 %v551
        %v872 = vunpack.c.l.b16 %v552
        %v873 = vunpack.c.h.b16 %v552
        %v874 = vunpack.c.l.b16 %v553
        %v875 = vunpack.c.h.b16 %v553
        %v876 = vunpack.c.l.b16 %v554
        %v877 = vunpack.c.h.b16 %v554
        %v878 = vunpack.c.l.b16 %v555
        %v879 = vunpack.c.h.b16 %v555
        %v880 = vunpack.c.l.b16 %v556
        %v881 = vunpack.c.h.b16 %v556
        %v882 = vunpack.c.l.b16 %v557
        %v883 = vunpack.c.h.b16 %v557
        %v884 = vunpack.c.l.b16 %v558
        %v885 = vunpack.c.h.b16 %v558
        %v886 = vunpack.c.l.b16 %v559
        %v887 = vunpack.c.h.b16 %v559
        %v888 = vunpack.c.l.b16 %v560
        %v889 = vunpack.c.h.b16 %v560
        %v890 = vunpack.c.l.b16 %v561
        %v891 = vunpack.c.h.b16 %v561
        %v892 = vunpack.c.l.b16 %v562
        %v893 = vunpack.c.h.b16 %v562
        %v894 = vunpack.c.l.b16 %v563
        %v895 = vunpack.c.h.b16 %v563
        %v896 = vunpack.c.l.b16 %v564
        %v897 = vunpack.c.h.b16 %v564
        %v898 = vunpack.c.l.b16 %v565
        %v899 = vunpack.c.h.b16 %v565
        %v900 = vunpack.c.l.b16 %v566
        %v901 = vunpack.c.h.b16 %v566
        %v902 = vunpack.c.l.b16 %v567
        %v903 = vunpack.c.h.b16 %v567
        %v904 = vunpack.c.l.b16 %v568
        %v905 = vunpack.c.h.b16 %v568
        %v906 = vunpack.c.l.b16 %v569
        %v907 = vunpack.c.h.b16 %v569
        %v908 = vunpack.c.l.b16 %v570
        %v909 = vunpack.c.h.b16 %v570
        %v910 = vunpack.c.l.b16 %v571
        %v911 = vunpack.c.h.b16 %v571
        %v912 = vunpack.c.l.b16 %v572
        %v913 = vunpack.c.h.b16 %v572
        %v914 = vunpack.c.l.b16 %v573
        %v915 = vunpack.c.h.b16 %v573
        %v916 = vunpack.c.l.b16 %v574
        %v917 = vunpack.c.h.b16 %v574
        %v918 = vunpack.c.l.b16 %v575
        %v919 = vunpack.c.h.b16 %v575
        %v920 = vunpack.c.l.b16 %v576
        %v921 = vunpack.c.h.b16 %v576
        %v922 = vunpack.c.l.b16 %v577
        %v923 = vunpack.c.h.b16 %v577
        %v924 = vunpack.c.l.b16 %v578
        %v925 = vunpack.c.h.b16 %v578
        %v926 = vunpack.c.l.b16 %v579
        %v927 = vunpack.c.h.b16 %v579
        %v928 = vunpack.c.l.b16 %v580
        %v929 = vunpack.c.h.b16 %v580
        %v930 = vunpack.c.l.b16 %v581
        %v931 = vunpack.c.h.b16 %v581
        %v932 = vunpack.c.l.b16 %v582
        %v933 = vunpack.c.h.b16 %v582
        %v934 = vunpack.c.l.b16 %v583
        %v935 = vunpack.c.h.b16 %v583
        %v936 = vunpack.c.l.b16 %v584
        %v937 = vunpack.c.h.b16 %v584
        %v938 = vunpack.c.l.b16 %v585
        %v939 = vunpack.c.h.b16 %v585
        %v940 = vunpack.c.l.b16 %v586
        %v941 = vunpack.c.h.b16 %v586
        %v942 = vunpack.c.l.b16 %v587
        %v943 = vunpack.c.h.b16 %v587
        %v944 = vunpack.c.l.b16 %v588
        %v945 = vunpack.c.h.b16 %v588
        %v946 = vunpack.c.l.b16 %v589
        %v947 = vunpack.c.h.b16 %v589
        %v948 = vunpack.c.l.b16 %v590
        %v949 = vunpack.c.h.b16 %v590
        %v950 = vunpack.c.l.b16 %v591
        %v951 = vunpack.c.h.b16 %v591
        %v952 = vunpack.c.l.b16 %v592
        %v953 = vunpack.c.h.b16 %v592
        %v954 = vunpack.c.l.b16 %v593
        %v955 = vunpack.c.h.b16 %v593
        %v956 = vunpack.c.l.b16 %v594
        %v957 = vunpack.c.h.b16 %v594
        %v958 = vunpack.c.l.b16 %v595
        %v959 = vunpack.c.h.b16 %v595
        %v960 = vunpack.c.l.b16 %v596
        %v961 = vunpack.c.h.b16 %v596
        %v962 = vunpack.c.l.b16 %v597
        %v963 = vunpack.c.h.b16 %v597
        %v964 = vunpack.c.l.b16 %v598
        %v965 = vunpack.c.h.b16 %v598
        %v966 = vunpack.c.l.b16 %v599
        %v967 = vunpack.c.h.b16 %v599
        %v968 = vunpack.c.l.b16 %v600
        %v969 = vunpack.c.h.b16 %v600
        %v970 = vunpack.c.l.b16 %v601
        %v971 = vunpack.c.h.b16 %v601
        %v972 = vunpack.c.l.b16 %v602
        %v973 = vunpack.c.h.b16 %v602
        %v974 = vunpack.c.l.b16 %v603
        %v975 = vunpack.c.h.b16 %v603
        %v976 = vunpack.c.l.b16 %v604
        %v977 = vunpack.c.h.b16 %v604
        %v978 = vunpack.c.l.b16 %v605
        %v979 = vunpack.c.h.b16 %v605
        %v980 = vunpack.c.l.b16 %v606
        %v981 = vunpack.c.h.b16 %v606
        %v982 = vunpack.c.l.b16 %v607
        %v983 = vunpack.c.h.b16 %v607
        %v984 = vunpack.c.l.b16 %v608
        %v985 = vunpack.c.h.b16 %v608
        %v986 = vunpack.c.l.b16 %v609
        %v987 = vunpack.c.h.b16 %v609
        %v988 = vunpack.c.l.b16 %v610
        %v989 = vunpack.c.h.b16 %v610
        %v990 = vunpack.c.l.b16 %v611
        %v991 = vunpack.c.h.b16 %v611
        %v992 = vunpack.c.l.b16 %v612
        %v993 = vunpack.c.h.b16 %v612
        %v994 = vunpack.c.l.b16 %v613
        %v995 = vunpack.c.h.b16 %v613
        %v996 = vunpack.c.l.b16 %v614
        %v997 = vunpack.c.h.b16 %v614
        %v998 = vunpack.c.l.b16 %v615
        %v999 = vunpack.c.h.b16 %v615
        %v1000 = vunpack.c.l.b16 %v616
        %v1001 = vunpack.c.h.b16 %v616
        %v1002 = vunpack.c.l.b16 %v617
        %v1003 = vunpack.c.h.b16 %v617
        %v1004 = vunpack.c.l.b16 %v618
        %v1005 = vunpack.c.h.b16 %v618
        %v1006 = vunpack.c.l.b16 %v619
        %v1007 = vunpack.c.h.b16 %v619
        %v1008 = vunpack.c.l.b16 %v620
        %v1009 = vunpack.c.h.b16 %v620
        %v1010 = vunpack.c.l.b16 %v621
        %v1011 = vunpack.c.h.b16 %v621
        %v1012 = vunpack.c.l.b16 %v622
        %v1013 = vunpack.c.h.b16 %v622
        %v1014 = vunpack.c.l.b16 %v623
        %v1015 = vunpack.c.h.b16 %v623
        %v1016 = vunpack.c.l.b16 %v624
        %v1017 = vunpack.c.h.b16 %v624
        %v1018 = vunpack.c.l.b16 %v625
        %v1019 = vunpack.c.h.b16 %v625
        %v1020 = vunpack.c.l.b16 %v626
        %v1021 = vunpack.c.h.b16 %v626
        %v1022 = vunpack.c.l.b16 %v627
        %v1023 = vunpack.c.h.b16 %v627
        %v1024 = vunpack.c.l.b16 %v628
        %v1025 = vunpack.c.h.b16 %v628
        %v1026 = vunpack.c.l.b16 %v629
        %v1027 = vunpack.c.h.b16 %v629
        %v1028 = vunpack.c.l.b16 %v630
        %v1029 = vunpack.c.h.b16 %v630
        %v1030 = vunpack.c.l.b16 %v631
        %v1031 = vunpack.c.h.b16 %v631
        %v1032 = vunpack.c.l.b16 %v632
        %v1033 = vunpack.c.h.b16 %v632
        %v1034 = vunpack.c.l.b16 %v633
        %v1035 = vunpack.c.h.b16 %v633
        %v1036 = vunpack.c.l.b16 %v634
        %v1037 = vunpack.c.h.b16 %v634
        %v1038 = vunpack.c.l.b16 %v635
        %v1039 = vunpack.c.h.b16 %v635
        %v1040 = vunpack.c.l.b16 %v636
        %v1041 = vunpack.c.h.b16 %v636
        %v1042 = vunpack.c.l.b16 %v637
        %v1043 = vunpack.c.h.b16 %v637
        %v1044 = vunpack.c.l.b16 %v638
        %v1045 = vunpack.c.h.b16 %v638
        %v1046 = vunpack.c.l.b16 %v639
        %v1047 = vunpack.c.h.b16 %v639
        %v1048 = vunpack.c.l.b16 %v640
        %v1049 = vunpack.c.h.b16 %v640
        %v1050 = vunpack.c.l.b16 %v641
        %v1051 = vunpack.c.h.b16 %v641
        %v1052 = vunpack.c.l.b16 %v642
        %v1053 = vunpack.c.h.b16 %v642
        %v1054 = vunpack.c.l.b16 %v643
        %v1055 = vunpack.c.h.b16 %v643
        %v1056 = vunpack.c.l.b16 %v644
        %v1057 = vunpack.c.h.b16 %v644
        %v1058 = vunpack.c.l.b16 %v645
        %v1059 = vunpack.c.h.b16 %v645
        %v1060 = vunpack.c.l.b16 %v646
        %v1061 = vunpack.c.h.b16 %v646
        %v1062 = vunpack.c.l.b16 %v647
        %v1063 = vunpack.c.h.b16 %v647
        %v1064 = vpack.c.b16 %v810, %v808
        %v1065 = vpack.c.b16 %v811, %v809
        %v1066 = vpack.c.b16 %v814, %v812
        %v1067 = vpack.c.b16 %v815, %v813
        %v1068 = vpack.c.b16 %v818, %v816
        %v1069 = vpack.c.b16 %v819, %v817
        %v1070 = vpack.c.b16 %v822, %v820
        %v1071 = vpack.c.b16 %v823, %v821
        %v1072 = vpack.c.b16 %v826, %v824
        %v1073 = vpack.c.b16 %v827, %v825
        %v1074 = vpack.c.b16 %v830, %v828
        %v1075 = vpack.c.b16 %v831, %v829
        %v1076 = vpack.c.b16 %v834, %v832
        %v1077 = vpack.c.b16 %v835, %v833
        %v1078 = vpack.c.b16 %v838, %v836
        %v1079 = vpack.c.b16 %v839, %v837
        %v1080 = vpack.c.b16 %v842, %v840
        %v1081 = vpack.c.b16 %v843, %v841
        %v1082 = vpack.c.b16 %v846, %v844
        %v1083 = vpack.c.b16 %v847, %v845
        %v1084 = vpack.c.b16 %v850, %v848
        %v1085 = vpack.c.b16 %v851, %v849
        %v1086 = vpack.c.b16 %v854, %v852
        %v1087 = vpack.c.b16 %v855, %v853
        %v1088 = vpack.c.b16 %v858, %v856
        %v1089 = vpack.c.b16 %v859, %v857
        %v1090 = vpack.c.b16 %v862, %v860
        %v1091 = vpack.c.b16 %v863, %v861
        %v1092 = vpack.c.b16 %v866, %v864
        %v1093 = vpack.c.b16 %v867, %v865
        %v1094 = vpack.c.b16 %v870, %v868
        %v1095 = vpack.c.b16 %v871, %v869
        %v1096 = vpack.c.b16 %v874, %v872
        %v1097 = vpack.c.b16 %v875, %v873
        %v1098 = vpack.c.b16 %v878, %v876
        %v1099 = vpack.c.b16 %v879, %v877
        %v1100 = vpack.c.b16 %v882, %v880
        %v1101 = vpack.c.b16 %v883, %v881
        %v1102 = vpack.c.b16 %v886, %v884
        %v1103 = vpack.c.b16 %v887, %v885
        %v1104 = vpack.c.b16 %v890, %v888
        %v1105 = vpack.c.b16 %v891, %v889
        %v1106 = vpack.c.b16 %v894, %v892
        %v1107 = vpack.c.b16 %v895, %v893
        %v1108 = vpack.c.b16 %v898, %v896
        %v1109 = vpack.c.b16 %v899, %v897
        %v1110 = vpack.c.b16 %v902, %v900
        %v1111 = vpack.c.b16 %v903, %v901
        %v1112 = vpack.c.b16 %v906, %v904
        %v1113 = vpack.c.b16 %v907, %v905
        %v1114 = vpack.c.b16 %v910, %v908
        %v1115 = vpack.c.b16 %v911, %v909
        %v1116 = vpack.c.b16 %v914, %v912
        %v1117 = vpack.c.b16 %v915, %v913
        %v1118 = vpack.c.b16 %v918, %v916
        %v1119 = vpack.c.b16 %v919, %v917
        %v1120 = vpack.c.b16 %v922, %v920
        %v1121 = vpack.c.b16 %v923, %v921
        %v1122 = vpack.c.b16 %v926, %v924
        %v1123 = vpack.c.b16 %v927, %v925
        %v1124 = vpack.c.b16 %v930, %v928
        %v1125 = vpack.c.b16 %v931, %v929
        %v1126 = vpack.c.b16 %v934, %v932
        %v1127 = vpack.c.b16 %v935, %v933
        %v1128 = vpack.c.b16 %v938, %v936
        %v1129 = vpack.c.b16 %v939, %v937
        %v1130 = vpack.c.b16 %v942, %v940
        %v1131 = vpack.c.b16 %v943, %v941
        %v1132 = vpack.c.b16 %v946, %v944
        %v1133 = vpack.c.b16 %v947, %v945
        %v1134 = vpack.c.b16 %v950, %v948
        %v1135 = vpack.c.b16 %v951, %v949
        %v1136 = vpack.c.b16 %v954, %v952
        %v1137 = vpack.c.b16 %v955, %v953
        %v1138 = vpack.c.b16 %v958, %v956
        %v1139 = vpack.c.b16 %v959, %v957
        %v1140 = vpack.c.b16 %v962, %v960
        %v1141 = vpack.c.b16 %v963, %v961
        %v1142 = vpack.c.b16 %v966, %v964
        %v1143 = vpack.c.b16 %v967, %v965
        %v1144 = vpack.c.b16 %v970, %v968
        %v1145 = vpack.c.b16 %v971, %v969
        %v1146 = vpack.c.b16 %v974, %v972
        %v1147 = vpack.c.b16 %v975, %v973
        %v1148 = vpack.c.b16 %v978, %v976
        %v1149 = vpack.c.b16 %v979, %v977
        %v1150 = vpack.c.b16 %v982, %v980
        %v1151 = vpack.c.b16 %v983, %v981
        %v1152 = vpack.c.b16 %v986, %v984
        %v1153 = vpack.c.b16 %v987, %v985
        %v1154 = vpack.c.b16 %v990, %v988
        %v1155 = vpack.c.b16 %v991, %v989
        %v1156 = vpack.c.b16 %v994, %v992
        %v1157 = vpack.c.b16 %v995, %v993
        %v1158 = vpack.c.b16 %v998, %v996
        %v1159 = vpack.c.b16 %v999, %v997
        %v1160 = vpack.c.b16 %v1002, %v1000
        %v1161 = vpack.c.b16 %v1003, %v1001
        %v1162 = vpack.c.b16 %v1006, %v1004
        %v1163 = vpack.c.b16 %v1007, %v1005
        %v1164 = vpack.c.b16 %v1010, %v1008
        %v1165 = vpack.c.b16 %v1011, %v1009
        %v1166 = vpack.c.b16 %v1014, %v1012
        %v1167 = vpack.c.b16 %v1015, %v1013
        %v1168 = vpack.c.b16 %v1018, %v1016
        %v1169 = vpack.c.b16 %v1019, %v1017
        %v1170 = vpack.c.b16 %v1022, %v1020
        %v1171 = vpack.c.b16 %v1023, %v1021
        %v1172 = vpack.c.b16 %v1026, %v1024
        %v1173 = vpack.c.b16 %v1027, %v1025
        %v1174 = vpack.c.b16 %v1030, %v1028
        %v1175 = vpack.c.b16 %v1031, %v1029
        %v1176 = vpack.c.b16 %v1034, %v1032
        %v1177 = vpack.c.b16 %v1035, %v1033
        %v1178 = vpack.c.b16 %v1038, %v1036
        %v1179 = vpack.c.b16 %v1039, %v1037
        %v1180 = vpack.c.b16 %v1042, %v1040
        %v1181 = vpack.c.b16 %v1043, %v1041
        %v1182 = vpack.c.b16 %v1046, %v1044
        %v1183 = vpack.c.b16 %v1047, %v1045
        %v1184 = vpack.c.b16 %v1050, %v1048
        %v1185 = vpack.c.b16 %v1051, %v1049
        %v1186 = vpack.c.b16 %v1054, %v1052
        %v1187 = vpack.c.b16 %v1055, %v1053
        %v1188 = vpack.c.b16 %v1058, %v1056
        %v1189 = vpack.c.b16 %v1059, %v1057
        %v1190 = vpack.c.b16 %v1062, %v1060
        %v1191 = vpack.c.b16 %v1063, %v1061
        %v1352 = vunpack.c.l.b16 %v648
        %v1353 = vunpack.c.l.b16 %v649
        %v1354 = vunpack.c.l.b16 %v650
        %v1355 = vunpack.c.l.b16 %v651
        %v1356 = vunpack.c.l.b16 %v652
        %v1357 = vunpack.c.l.b16 %v653
        %v1358 = vunpack.c.l.b16 %v654
        %v1359 = vunpack.c.l.b16 %v655
        %v1360 = vunpack.c.l.b16 %v656
        %v1361 = vunpack.c.l.b16 %v657
        %v1362 = vunpack.c.l.b16 %v658
        %v1363 = vunpack.c.l.b16 %v659
        %v1364 = vunpack.c.l.b16 %v660
        %v1365 = vunpack.c.l.b16 %v661
        %v1366 = vunpack.c.l.b16 %v662
        %v1367 = vunpack.c.l.b16 %v663
        %v1368 = vunpack.c.l.b16 %v664
        %v1369 = vunpack.c.l.b16 %v665
        %v1370 = vunpack.c.l.b16 %v666
        %v1371 = vunpack.c.l.b16 %v667
        %v1372 = vunpack.c.l.b16 %v668
        %v1373 = vunpack.c.l.b16 %v669
        %v1374 = vunpack.c.l.b16 %v670
        %v1375 = vunpack.c.l.b16 %v671
        %v1376 = vunpack.c.l.b16 %v672
        %v1377 = vunpack.c.l.b16 %v673
        %v1378 = vunpack.c.l.b16 %v674
        %v1379 = vunpack.c.l.b16 %v675
        %v1380 = vunpack.c.l.b16 %v676
        %v1381 = vunpack.c.l.b16 %v677
        %v1382 = vunpack.c.l.b16 %v678
        %v1383 = vunpack.c.l.b16 %v679
        %v1384 = vpack.c.b16 %v1353, %v1352
        %v1385 = vpack.c.b16 %v1355, %v1354
        %v1386 = vpack.c.b16 %v1357, %v1356
        %v1387 = vpack.c.b16 %v1359, %v1358
        %v1388 = vpack.c.b16 %v1361, %v1360
        %v1389 = vpack.c.b16 %v1363, %v1362
        %v1390 = vpack.c.b16 %v1365, %v1364
        %v1391 = vpack.c.b16 %v1367, %v1366
        %v1392 = vpack.c.b16 %v1369, %v1368
        %v1393 = vpack.c.b16 %v1371, %v1370
        %v1394 = vpack.c.b16 %v1373, %v1372
        %v1395 = vpack.c.b16 %v1375, %v1374
        %v1396 = vpack.c.b16 %v1377, %v1376
        %v1397 = vpack.c.b16 %v1379, %v1378
        %v1398 = vpack.c.b16 %v1381, %v1380
        %v1399 = vpack.c.b16 %v1383, %v1382
        %1416 = vmatprep.subr.bf16.mxu0 0
        %1417 = vmatpush1.bf16.msra.mxu0 %v1384
        %1418 = vmatprep.subr.bf16.mxu0 0
        %1419 = vmatpush1.bf16.msra.mxu0 %v1385
        %1420 = vmatprep.subr.bf16.mxu0 0
        %1421 = vmatpush1.bf16.msra.mxu0 %v1386
        %1422 = vmatprep.subr.bf16.mxu0 0
        %1423 = vmatpush1.bf16.msra.mxu0 %v1387
        %1424 = vmatprep.subr.bf16.mxu0 0
        %1425 = vmatpush1.bf16.msra.mxu0 %v1388
        %1426 = vmatprep.subr.bf16.mxu0 0
        %1427 = vmatpush1.bf16.msra.mxu0 %v1389
        %1428 = vmatprep.subr.bf16.mxu0 0
        %1429 = vmatpush1.bf16.msra.mxu0 %v1390
        %1430 = vmatprep.subr.bf16.mxu0 0
        %1431 = vmatpush1.bf16.msra.mxu0 %v1391
        %1432 = vmatprep.subr.bf16.mxu0 0
        %1433 = vmatpush1.bf16.msra.mxu0 %v1392
        %1434 = vmatprep.subr.bf16.mxu0 0
        %1435 = vmatpush1.bf16.msra.mxu0 %v1393
        %1436 = vmatprep.subr.bf16.mxu0 0
        %1437 = vmatpush1.bf16.msra.mxu0 %v1394
        %1438 = vmatprep.subr.bf16.mxu0 0
        %1439 = vmatpush1.bf16.msra.mxu0 %v1395
        %1440 = vmatprep.subr.bf16.mxu0 0
        %1441 = vmatpush1.bf16.msra.mxu0 %v1396
        %1442 = vmatprep.subr.bf16.mxu0 0
        %1443 = vmatpush1.bf16.msra.mxu0 %v1397
        %1444 = vmatprep.subr.bf16.mxu0 0
        %1445 = vmatpush1.bf16.msra.mxu0 %v1398
        %1446 = vmatprep.subr.bf16.mxu0 0
        %1447 = vmatpush1.bf16.msra.mxu0 %v1399
        %1448 = vmatprep.mubr.bf16.mxu0 %v1065
        %1449 = vmatmul.mubr.bf16.gmra.mrb[0].mxu0 %v1064
        %v1450 = vpop.f32.mrb[0].mxu0
        %v1451 = vadd.f32 0.0, %v1450
        %v1452 = vpop.f32.mrb[0].mxu0
        %v1453 = vpop.f32.mrb[0].mxu0
        %v1454 = vadd.f32 0.0, %v1453
        %v1455 = vpop.f32.mrb[0].mxu0
        %1456 = vmatprep.mubr.bf16.mxu0 %v1067
        %1457 = vmatmul.mubr.bf16.gmra.mrb[0].mxu0 %v1066
        %v1458 = vpop.f32.mrb[0].mxu0
        %v1459 = vadd.f32 0.0, %v1458
        %v1460 = vpop.f32.mrb[0].mxu0
        %v1461 = vpop.f32.mrb[0].mxu0
        %v1462 = vadd.f32 0.0, %v1461
        %v1463 = vpop.f32.mrb[0].mxu0
        %1464 = vmatprep.mubr.bf16.mxu0 %v1069
        %1465 = vmatmul.mubr.bf16.gmra.mrb[0].mxu0 %v1068
        %v1466 = vpop.f32.mrb[0].mxu0
        %v1467 = vadd.f32 0.0, %v1466
        %v1468 = vpop.f32.mrb[0].mxu0
        %v1469 = vpop.f32.mrb[0].mxu0
        %v1470 = vadd.f32 0.0, %v1469
        %v1471 = vpop.f32.mrb[0].mxu0
        %1472 = vmatprep.mubr.bf16.mxu0 %v1071
        %1473 = vmatmul.mubr.bf16.gmra.mrb[0].mxu0 %v1070
        %v1474 = vpop.f32.mrb[0].mxu0
        %v1475 = vadd.f32 0.0, %v1474
        %v1476 = vpop.f32.mrb[0].mxu0
        %v1477 = vpop.f32.mrb[0].mxu0
        %v1478 = vadd.f32 0.0, %v1477
        %v1479 = vpop.f32.mrb[0].mxu0
        %1480 = vmatprep.mubr.bf16.mxu0 %v1073
        %1481 = vmatmul.mubr.bf16.gmra.mrb[0].mxu0 %v1072
        %v1482 = vpop.f32.mrb[0].mxu0
        %v1483 = vadd.f32 0.0, %v1482
        %v1484 = vpop.f32.mrb[0].mxu0
        %v1485 = vpop.f32.mrb[0].mxu0
        %v1486 = vadd.f32 0.0, %v1485
        %v1487 = vpop.f32.mrb[0].mxu0
        %1488 = vmatprep.mubr.bf16.mxu0 %v1075
        %1489 = vmatmul.mubr.bf16.gmra.mrb[0].mxu0 %v1074
        %v1490 = vpop.f32.mrb[0].mxu0
        %v1491 = vadd.f32 0.0, %v1490
        %v1492 = vpop.f32.mrb[0].mxu0
        %v1493 = vpop.f32.mrb[0].mxu0
        %v1494 = vadd.f32 0.0, %v1493
        %v1495 = vpop.f32.mrb[0].mxu0
        %1496 = vmatprep.mubr.bf16.mxu0 %v1077
        %1497 = vmatmul.mubr.bf16.gmra.mrb[0].mxu0 %v1076
        %v1498 = vpop.f32.mrb[0].mxu0
        %v1499 = vadd.f32 0.0, %v1498
        %v1500 = vpop.f32.mrb[0].mxu0
        %v1501 = vpop.f32.mrb[0].mxu0
        %v1502 = vadd.f32 0.0, %v1501
        %v1503 = vpop.f32.mrb[0].mxu0
        %1504 = vmatprep.mubr.bf16.mxu0 %v1079
        %1505 = vmatmul.mubr.bf16.gmra.mrb[0].mxu0 %v1078
        %v1506 = vpop.f32.mrb[0].mxu0
        %v1507 = vadd.f32 0.0, %v1506
        %v1508 = vpop.f32.mrb[0].mxu0
        %v1509 = vpop.f32.mrb[0].mxu0
        %v1510 = vadd.f32 0.0, %v1509
        %v1511 = vpop.f32.mrb[0].mxu0
        %1512 = vmatprep.mubr.bf16.mxu0 %v1081
        %1513 = vmatmul.mubr.bf16.gmra.mrb[0].mxu0 %v1080
        %v1514 = vpop.f32.mrb[0].mxu0
        %v1515 = vadd.f32 0.0, %v1514
        %v1516 = vpop.f32.mrb[0].mxu0
        %v1517 = vpop.f32.mrb[0].mxu0
        %v1518 = vadd.f32 0.0, %v1517
        %v1519 = vpop.f32.mrb[0].mxu0
        %1520 = vmatprep.mubr.bf16.mxu0 %v1083
        %1521 = vmatmul.mubr.bf16.gmra.mrb[0].mxu0 %v1082
        %v1522 = vpop.f32.mrb[0].mxu0
        %v1523 = vadd.f32 0.0, %v1522
        %v1524 = vpop.f32.mrb[0].mxu0
        %v1525 = vpop.f32.mrb[0].mxu0
        %v1526 = vadd.f32 0.0, %v1525
        %v1527 = vpop.f32.mrb[0].mxu0
        %1528 = vmatprep.mubr.bf16.mxu0 %v1085
        %1529 = vmatmul.mubr.bf16.gmra.mrb[0].mxu0 %v1084
        %v1530 = vpop.f32.mrb[0].mxu0
        %v1531 = vadd.f32 0.0, %v1530
        %v1532 = vpop.f32.mrb[0].mxu0
        %v1533 = vpop.f32.mrb[0].mxu0
        %v1534 = vadd.f32 0.0, %v1533
        %v1535 = vpop.f32.mrb[0].mxu0
        %1536 = vmatprep.mubr.bf16.mxu0 %v1087
        %1537 = vmatmul.mubr.bf16.gmra.mrb[0].mxu0 %v1086
        %v1538 = vpop.f32.mrb[0].mxu0
        %v1539 = vadd.f32 0.0, %v1538
        %v1540 = vpop.f32.mrb[0].mxu0
        %v1541 = vpop.f32.mrb[0].mxu0
        %v1542 = vadd.f32 0.0, %v1541
        %v1543 = vpop.f32.mrb[0].mxu0
        %1544 = vmatprep.mubr.bf16.mxu0 %v1089
        %1545 = vmatmul.mubr.bf16.gmra.mrb[0].mxu0 %v1088
        %v1546 = vpop.f32.mrb[0].mxu0
        %v1547 = vadd.f32 0.0, %v1546
        %v1548 = vpop.f32.mrb[0].mxu0
        %v1549 = vpop.f32.mrb[0].mxu0
        %v1550 = vadd.f32 0.0, %v1549
        %v1551 = vpop.f32.mrb[0].mxu0
        %1552 = vmatprep.mubr.bf16.mxu0 %v1091
        %1553 = vmatmul.mubr.bf16.gmra.mrb[0].mxu0 %v1090
        %v1554 = vpop.f32.mrb[0].mxu0
        %v1555 = vadd.f32 0.0, %v1554
        %v1556 = vpop.f32.mrb[0].mxu0
        %v1557 = vpop.f32.mrb[0].mxu0
        %v1558 = vadd.f32 0.0, %v1557
        %v1559 = vpop.f32.mrb[0].mxu0
        %1560 = vmatprep.mubr.bf16.mxu0 %v1093
        %1561 = vmatmul.mubr.bf16.gmra.mrb[0].mxu0 %v1092
        %v1562 = vpop.f32.mrb[0].mxu0
        %v1563 = vadd.f32 0.0, %v1562
        %v1564 = vpop.f32.mrb[0].mxu0
        %v1565 = vpop.f32.mrb[0].mxu0
        %v1566 = vadd.f32 0.0, %v1565
        %v1567 = vpop.f32.mrb[0].mxu0
        %1568 = vmatprep.mubr.bf16.mxu0 %v1095
        %1569 = vmatmul.mubr.bf16.gmra.mrb[0].mxu0 %v1094
        %v1570 = vpop.f32.mrb[0].mxu0
        %v1571 = vadd.f32 0.0, %v1570
        %v1572 = vpop.f32.mrb[0].mxu0
        %v1573 = vpop.f32.mrb[0].mxu0
        %v1574 = vadd.f32 0.0, %v1573
        %v1575 = vpop.f32.mrb[0].mxu0
        %1576 = vmatprep.mubr.bf16.mxu0 %v1097
        %1577 = vmatmul.mubr.bf16.gmra.mrb[0].mxu0 %v1096
        %v1578 = vpop.f32.mrb[0].mxu0
        %v1579 = vadd.f32 0.0, %v1578
        %v1580 = vpop.f32.mrb[0].mxu0
        %v1581 = vpop.f32.mrb[0].mxu0
        %v1582 = vadd.f32 0.0, %v1581
        %v1583 = vpop.f32.mrb[0].mxu0
        %1584 = vmatprep.mubr.bf16.mxu0 %v1099
        %1585 = vmatmul.mubr.bf16.gmra.mrb[0].mxu0 %v1098
        %v1586 = vpop.f32.mrb[0].mxu0
        %v1587 = vadd.f32 0.0, %v1586
        %v1588 = vpop.f32.mrb[0].mxu0
        %v1589 = vpop.f32.mrb[0].mxu0
        %v1590 = vadd.f32 0.0, %v1589
        %v1591 = vpop.f32.mrb[0].mxu0
        %1592 = vmatprep.mubr.bf16.mxu0 %v1101
        %1593 = vmatmul.mubr.bf16.gmra.mrb[0].mxu0 %v1100
        %v1594 = vpop.f32.mrb[0].mxu0
        %v1595 = vadd.f32 0.0, %v1594
        %v1596 = vpop.f32.mrb[0].mxu0
        %v1597 = vpop.f32.mrb[0].mxu0
        %v1598 = vadd.f32 0.0, %v1597
        %v1599 = vpop.f32.mrb[0].mxu0
        %1600 = vmatprep.mubr.bf16.mxu0 %v1103
        %1601 = vmatmul.mubr.bf16.gmra.mrb[0].mxu0 %v1102
        %v1602 = vpop.f32.mrb[0].mxu0
        %v1603 = vadd.f32 0.0, %v1602
        %v1604 = vpop.f32.mrb[0].mxu0
        %v1605 = vpop.f32.mrb[0].mxu0
        %v1606 = vadd.f32 0.0, %v1605
        %v1607 = vpop.f32.mrb[0].mxu0
        %1608 = vmatprep.mubr.bf16.mxu0 %v1105
        %1609 = vmatmul.mubr.bf16.gmra.mrb[0].mxu0 %v1104
        %v1610 = vpop.f32.mrb[0].mxu0
        %v1611 = vadd.f32 0.0, %v1610
        %v1612 = vpop.f32.mrb[0].mxu0
        %v1613 = vpop.f32.mrb[0].mxu0
        %v1614 = vadd.f32 0.0, %v1613
        %v1615 = vpop.f32.mrb[0].mxu0
        %1616 = vmatprep.mubr.bf16.mxu0 %v1107
        %1617 = vmatmul.mubr.bf16.gmra.mrb[0].mxu0 %v1106
        %v1618 = vpop.f32.mrb[0].mxu0
        %v1619 = vadd.f32 0.0, %v1618
        %v1620 = vpop.f32.mrb[0].mxu0
        %v1621 = vpop.f32.mrb[0].mxu0
        %v1622 = vadd.f32 0.0, %v1621
        %v1623 = vpop.f32.mrb[0].mxu0
        %1624 = vmatprep.mubr.bf16.mxu0 %v1109
        %1625 = vmatmul.mubr.bf16.gmra.mrb[0].mxu0 %v1108
        %v1626 = vpop.f32.mrb[0].mxu0
        %v1627 = vadd.f32 0.0, %v1626
        %v1628 = vpop.f32.mrb[0].mxu0
        %v1629 = vpop.f32.mrb[0].mxu0
        %v1630 = vadd.f32 0.0, %v1629
        %v1631 = vpop.f32.mrb[0].mxu0
        %1632 = vmatprep.mubr.bf16.mxu0 %v1111
        %1633 = vmatmul.mubr.bf16.gmra.mrb[0].mxu0 %v1110
        %v1634 = vpop.f32.mrb[0].mxu0
        %v1635 = vadd.f32 0.0, %v1634
        %v1636 = vpop.f32.mrb[0].mxu0
        %v1637 = vpop.f32.mrb[0].mxu0
        %v1638 = vadd.f32 0.0, %v1637
        %v1639 = vpop.f32.mrb[0].mxu0
        %1640 = vmatprep.mubr.bf16.mxu0 %v1113
        %1641 = vmatmul.mubr.bf16.gmra.mrb[0].mxu0 %v1112
        %v1642 = vpop.f32.mrb[0].mxu0
        %v1643 = vadd.f32 0.0, %v1642
        %v1644 = vpop.f32.mrb[0].mxu0
        %v1645 = vpop.f32.mrb[0].mxu0
        %v1646 = vadd.f32 0.0, %v1645
        %v1647 = vpop.f32.mrb[0].mxu0
        %1648 = vmatprep.mubr.bf16.mxu0 %v1115
        %1649 = vmatmul.mubr.bf16.gmra.mrb[0].mxu0 %v1114
        %v1650 = vpop.f32.mrb[0].mxu0
        %v1651 = vadd.f32 0.0, %v1650
        %v1652 = vpop.f32.mrb[0].mxu0
        %v1653 = vpop.f32.mrb[0].mxu0
        %v1654 = vadd.f32 0.0, %v1653
        %v1655 = vpop.f32.mrb[0].mxu0
        %1656 = vmatprep.mubr.bf16.mxu0 %v1117
        %1657 = vmatmul.mubr.bf16.gmra.mrb[0].mxu0 %v1116
        %v1658 = vpop.f32.mrb[0].mxu0
        %v1659 = vadd.f32 0.0, %v1658
        %v1660 = vpop.f32.mrb[0].mxu0
        %v1661 = vpop.f32.mrb[0].mxu0
        %v1662 = vadd.f32 0.0, %v1661
        %v1663 = vpop.f32.mrb[0].mxu0
        %1664 = vmatprep.mubr.bf16.mxu0 %v1119
        %1665 = vmatmul.mubr.bf16.gmra.mrb[0].mxu0 %v1118
        %v1666 = vpop.f32.mrb[0].mxu0
        %v1667 = vadd.f32 0.0, %v1666
        %v1668 = vpop.f32.mrb[0].mxu0
        %v1669 = vpop.f32.mrb[0].mxu0
        %v1670 = vadd.f32 0.0, %v1669
        %v1671 = vpop.f32.mrb[0].mxu0
        %1672 = vmatprep.mubr.bf16.mxu0 %v1121
        %1673 = vmatmul.mubr.bf16.gmra.mrb[0].mxu0 %v1120
        %v1674 = vpop.f32.mrb[0].mxu0
        %v1675 = vadd.f32 0.0, %v1674
        %v1676 = vpop.f32.mrb[0].mxu0
        %v1677 = vpop.f32.mrb[0].mxu0
        %v1678 = vadd.f32 0.0, %v1677
        %v1679 = vpop.f32.mrb[0].mxu0
        %1680 = vmatprep.mubr.bf16.mxu0 %v1123
        %1681 = vmatmul.mubr.bf16.gmra.mrb[0].mxu0 %v1122
        %v1682 = vpop.f32.mrb[0].mxu0
        %v1683 = vadd.f32 0.0, %v1682
        %v1684 = vpop.f32.mrb[0].mxu0
        %v1685 = vpop.f32.mrb[0].mxu0
        %v1686 = vadd.f32 0.0, %v1685
        %v1687 = vpop.f32.mrb[0].mxu0
        %1688 = vmatprep.mubr.bf16.mxu0 %v1125
        %1689 = vmatmul.mubr.bf16.gmra.mrb[0].mxu0 %v1124
        %v1690 = vpop.f32.mrb[0].mxu0
        %v1691 = vadd.f32 0.0, %v1690
        %v1692 = vpop.f32.mrb[0].mxu0
        %v1693 = vpop.f32.mrb[0].mxu0
        %v1694 = vadd.f32 0.0, %v1693
        %v1695 = vpop.f32.mrb[0].mxu0
        %1696 = vmatprep.mubr.bf16.mxu0 %v1127
        %1697 = vmatmul.mubr.bf16.gmra.mrb[0].mxu0 %v1126
        %v1698 = vpop.f32.mrb[0].mxu0
        %v1699 = vadd.f32 0.0, %v1698
        %v1700 = vpop.f32.mrb[0].mxu0
        %v1701 = vpop.f32.mrb[0].mxu0
        %v1702 = vadd.f32 0.0, %v1701
        %v1703 = vpop.f32.mrb[0].mxu0
        %1704 = vmatprep.mubr.bf16.mxu0 %v1129
        %1705 = vmatmul.mubr.bf16.gmra.mrb[0].mxu0 %v1128
        %v1706 = vpop.f32.mrb[0].mxu0
        %v1707 = vadd.f32 0.0, %v1706
        %v1708 = vpop.f32.mrb[0].mxu0
        %v1709 = vpop.f32.mrb[0].mxu0
        %v1710 = vadd.f32 0.0, %v1709
        %v1711 = vpop.f32.mrb[0].mxu0
        %1712 = vmatprep.mubr.bf16.mxu0 %v1131
        %1713 = vmatmul.mubr.bf16.gmra.mrb[0].mxu0 %v1130
        %v1714 = vpop.f32.mrb[0].mxu0
        %v1715 = vadd.f32 0.0, %v1714
        %v1716 = vpop.f32.mrb[0].mxu0
        %v1717 = vpop.f32.mrb[0].mxu0
        %v1718 = vadd.f32 0.0, %v1717
        %v1719 = vpop.f32.mrb[0].mxu0
        %1720 = vmatprep.mubr.bf16.mxu0 %v1133
        %1721 = vmatmul.mubr.bf16.gmra.mrb[0].mxu0 %v1132
        %v1722 = vpop.f32.mrb[0].mxu0
        %v1723 = vadd.f32 0.0, %v1722
        %v1724 = vpop.f32.mrb[0].mxu0
        %v1725 = vpop.f32.mrb[0].mxu0
        %v1726 = vadd.f32 0.0, %v1725
        %v1727 = vpop.f32.mrb[0].mxu0
        %1728 = vmatprep.mubr.bf16.mxu0 %v1135
        %1729 = vmatmul.mubr.bf16.gmra.mrb[0].mxu0 %v1134
        %v1730 = vpop.f32.mrb[0].mxu0
        %v1731 = vadd.f32 0.0, %v1730
        %v1732 = vpop.f32.mrb[0].mxu0
        %v1733 = vpop.f32.mrb[0].mxu0
        %v1734 = vadd.f32 0.0, %v1733
        %v1735 = vpop.f32.mrb[0].mxu0
        %1736 = vmatprep.mubr.bf16.mxu0 %v1137
        %1737 = vmatmul.mubr.bf16.gmra.mrb[0].mxu0 %v1136
        %v1738 = vpop.f32.mrb[0].mxu0
        %v1739 = vadd.f32 0.0, %v1738
        %v1740 = vpop.f32.mrb[0].mxu0
        %v1741 = vpop.f32.mrb[0].mxu0
        %v1742 = vadd.f32 0.0, %v1741
        %v1743 = vpop.f32.mrb[0].mxu0
        %1744 = vmatprep.mubr.bf16.mxu0 %v1139
        %1745 = vmatmul.mubr.bf16.gmra.mrb[0].mxu0 %v1138
        %v1746 = vpop.f32.mrb[0].mxu0
        %v1747 = vadd.f32 0.0, %v1746
        %v1748 = vpop.f32.mrb[0].mxu0
        %v1749 = vpop.f32.mrb[0].mxu0
        %v1750 = vadd.f32 0.0, %v1749
        %v1751 = vpop.f32.mrb[0].mxu0
        %1752 = vmatprep.mubr.bf16.mxu0 %v1141
        %1753 = vmatmul.mubr.bf16.gmra.mrb[0].mxu0 %v1140
        %v1754 = vpop.f32.mrb[0].mxu0
        %v1755 = vadd.f32 0.0, %v1754
        %v1756 = vpop.f32.mrb[0].mxu0
        %v1757 = vpop.f32.mrb[0].mxu0
        %v1758 = vadd.f32 0.0, %v1757
        %v1759 = vpop.f32.mrb[0].mxu0
        %1760 = vmatprep.mubr.bf16.mxu0 %v1143
        %1761 = vmatmul.mubr.bf16.gmra.mrb[0].mxu0 %v1142
        %v1762 = vpop.f32.mrb[0].mxu0
        %v1763 = vadd.f32 0.0, %v1762
        %v1764 = vpop.f32.mrb[0].mxu0
        %v1765 = vpop.f32.mrb[0].mxu0
        %v1766 = vadd.f32 0.0, %v1765
        %v1767 = vpop.f32.mrb[0].mxu0
        %1768 = vmatprep.mubr.bf16.mxu0 %v1145
        %1769 = vmatmul.mubr.bf16.gmra.mrb[0].mxu0 %v1144
        %v1770 = vpop.f32.mrb[0].mxu0
        %v1771 = vadd.f32 0.0, %v1770
        %v1772 = vpop.f32.mrb[0].mxu0
        %v1773 = vpop.f32.mrb[0].mxu0
        %v1774 = vadd.f32 0.0, %v1773
        %v1775 = vpop.f32.mrb[0].mxu0
        %1776 = vmatprep.mubr.bf16.mxu0 %v1147
        %1777 = vmatmul.mubr.bf16.gmra.mrb[0].mxu0 %v1146
        %v1778 = vpop.f32.mrb[0].mxu0
        %v1779 = vadd.f32 0.0, %v1778
        %v1780 = vpop.f32.mrb[0].mxu0
        %v1781 = vpop.f32.mrb[0].mxu0
        %v1782 = vadd.f32 0.0, %v1781
        %v1783 = vpop.f32.mrb[0].mxu0
        %1784 = vmatprep.mubr.bf16.mxu0 %v1149
        %1785 = vmatmul.mubr.bf16.gmra.mrb[0].mxu0 %v1148
        %v1786 = vpop.f32.mrb[0].mxu0
        %v1787 = vadd.f32 0.0, %v1786
        %v1788 = vpop.f32.mrb[0].mxu0
        %v1789 = vpop.f32.mrb[0].mxu0
        %v1790 = vadd.f32 0.0, %v1789
        %v1791 = vpop.f32.mrb[0].mxu0
        %1792 = vmatprep.mubr.bf16.mxu0 %v1151
        %1793 = vmatmul.mubr.bf16.gmra.mrb[0].mxu0 %v1150
        %v1794 = vpop.f32.mrb[0].mxu0
        %v1795 = vadd.f32 0.0, %v1794
        %v1796 = vpop.f32.mrb[0].mxu0
        %v1797 = vpop.f32.mrb[0].mxu0
        %v1798 = vadd.f32 0.0, %v1797
        %v1799 = vpop.f32.mrb[0].mxu0
        %1800 = vmatprep.mubr.bf16.mxu0 %v1153
        %1801 = vmatmul.mubr.bf16.gmra.mrb[0].mxu0 %v1152
        %v1802 = vpop.f32.mrb[0].mxu0
        %v1803 = vadd.f32 0.0, %v1802
        %v1804 = vpop.f32.mrb[0].mxu0
        %v1805 = vpop.f32.mrb[0].mxu0
        %v1806 = vadd.f32 0.0, %v1805
        %v1807 = vpop.f32.mrb[0].mxu0
        %1808 = vmatprep.mubr.bf16.mxu0 %v1155
        %1809 = vmatmul.mubr.bf16.gmra.mrb[0].mxu0 %v1154
        %v1810 = vpop.f32.mrb[0].mxu0
        %v1811 = vadd.f32 0.0, %v1810
        %v1812 = vpop.f32.mrb[0].mxu0
        %v1813 = vpop.f32.mrb[0].mxu0
        %v1814 = vadd.f32 0.0, %v1813
        %v1815 = vpop.f32.mrb[0].mxu0
        %1816 = vmatprep.mubr.bf16.mxu0 %v1157
        %1817 = vmatmul.mubr.bf16.gmra.mrb[0].mxu0 %v1156
        %v1818 = vpop.f32.mrb[0].mxu0
        %v1819 = vadd.f32 0.0, %v1818
        %v1820 = vpop.f32.mrb[0].mxu0
        %v1821 = vpop.f32.mrb[0].mxu0
        %v1822 = vadd.f32 0.0, %v1821
        %v1823 = vpop.f32.mrb[0].mxu0
        %1824 = vmatprep.mubr.bf16.mxu0 %v1159
        %1825 = vmatmul.mubr.bf16.gmra.mrb[0].mxu0 %v1158
        %v1826 = vpop.f32.mrb[0].mxu0
        %v1827 = vadd.f32 0.0, %v1826
        %v1828 = vpop.f32.mrb[0].mxu0
        %v1829 = vpop.f32.mrb[0].mxu0
        %v1830 = vadd.f32 0.0, %v1829
        %v1831 = vpop.f32.mrb[0].mxu0
        %1832 = vmatprep.mubr.bf16.mxu0 %v1161
        %1833 = vmatmul.mubr.bf16.gmra.mrb[0].mxu0 %v1160
        %v1834 = vpop.f32.mrb[0].mxu0
        %v1835 = vadd.f32 0.0, %v1834
        %v1836 = vpop.f32.mrb[0].mxu0
        %v1837 = vpop.f32.mrb[0].mxu0
        %v1838 = vadd.f32 0.0, %v1837
        %v1839 = vpop.f32.mrb[0].mxu0
        %1840 = vmatprep.mubr.bf16.mxu0 %v1163
        %1841 = vmatmul.mubr.bf16.gmra.mrb[0].mxu0 %v1162
        %v1842 = vpop.f32.mrb[0].mxu0
        %v1843 = vadd.f32 0.0, %v1842
        %v1844 = vpop.f32.mrb[0].mxu0
        %v1845 = vpop.f32.mrb[0].mxu0
        %v1846 = vadd.f32 0.0, %v1845
        %v1847 = vpop.f32.mrb[0].mxu0
        %1848 = vmatprep.mubr.bf16.mxu0 %v1165
        %1849 = vmatmul.mubr.bf16.gmra.mrb[0].mxu0 %v1164
        %v1850 = vpop.f32.mrb[0].mxu0
        %v1851 = vadd.f32 0.0, %v1850
        %v1852 = vpop.f32.mrb[0].mxu0
        %v1853 = vpop.f32.mrb[0].mxu0
        %v1854 = vadd.f32 0.0, %v1853
        %v1855 = vpop.f32.mrb[0].mxu0
        %1856 = vmatprep.mubr.bf16.mxu0 %v1167
        %1857 = vmatmul.mubr.bf16.gmra.mrb[0].mxu0 %v1166
        %v1858 = vpop.f32.mrb[0].mxu0
        %v1859 = vadd.f32 0.0, %v1858
        %v1860 = vpop.f32.mrb[0].mxu0
        %v1861 = vpop.f32.mrb[0].mxu0
        %v1862 = vadd.f32 0.0, %v1861
        %v1863 = vpop.f32.mrb[0].mxu0
        %1864 = vmatprep.mubr.bf16.mxu0 %v1169
        %1865 = vmatmul.mubr.bf16.gmra.mrb[0].mxu0 %v1168
        %v1866 = vpop.f32.mrb[0].mxu0
        %v1867 = vadd.f32 0.0, %v1866
        %v1868 = vpop.f32.mrb[0].mxu0
        %v1869 = vpop.f32.mrb[0].mxu0
        %v1870 = vadd.f32 0.0, %v1869
        %v1871 = vpop.f32.mrb[0].mxu0
        %1872 = vmatprep.mubr.bf16.mxu0 %v1171
        %1873 = vmatmul.mubr.bf16.gmra.mrb[0].mxu0 %v1170
        %v1874 = vpop.f32.mrb[0].mxu0
        %v1875 = vadd.f32 0.0, %v1874
        %v1876 = vpop.f32.mrb[0].mxu0
        %v1877 = vpop.f32.mrb[0].mxu0
        %v1878 = vadd.f32 0.0, %v1877
        %v1879 = vpop.f32.mrb[0].mxu0
        %1880 = vmatprep.mubr.bf16.mxu0 %v1173
        %1881 = vmatmul.mubr.bf16.gmra.mrb[0].mxu0 %v1172
        %v1882 = vpop.f32.mrb[0].mxu0
        %v1883 = vadd.f32 0.0, %v1882
        %v1884 = vpop.f32.mrb[0].mxu0
        %v1885 = vpop.f32.mrb[0].mxu0
        %v1886 = vadd.f32 0.0, %v1885
        %v1887 = vpop.f32.mrb[0].mxu0
        %1888 = vmatprep.mubr.bf16.mxu0 %v1175
        %1889 = vmatmul.mubr.bf16.gmra.mrb[0].mxu0 %v1174
        %v1890 = vpop.f32.mrb[0].mxu0
        %v1891 = vadd.f32 0.0, %v1890
        %v1892 = vpop.f32.mrb[0].mxu0
        %v1893 = vpop.f32.mrb[0].mxu0
        %v1894 = vadd.f32 0.0, %v1893
        %v1895 = vpop.f32.mrb[0].mxu0
        %1896 = vmatprep.mubr.bf16.mxu0 %v1177
        %1897 = vmatmul.mubr.bf16.gmra.mrb[0].mxu0 %v1176
        %v1898 = vpop.f32.mrb[0].mxu0
        %v1899 = vadd.f32 0.0, %v1898
        %v1900 = vpop.f32.mrb[0].mxu0
        %v1901 = vpop.f32.mrb[0].mxu0
        %v1902 = vadd.f32 0.0, %v1901
        %v1903 = vpop.f32.mrb[0].mxu0
        %1904 = vmatprep.mubr.bf16.mxu0 %v1179
        %1905 = vmatmul.mubr.bf16.gmra.mrb[0].mxu0 %v1178
        %v1906 = vpop.f32.mrb[0].mxu0
        %v1907 = vadd.f32 0.0, %v1906
        %v1908 = vpop.f32.mrb[0].mxu0
        %v1909 = vpop.f32.mrb[0].mxu0
        %v1910 = vadd.f32 0.0, %v1909
        %v1911 = vpop.f32.mrb[0].mxu0
        %1912 = vmatprep.mubr.bf16.mxu0 %v1181
        %1913 = vmatmul.mubr.bf16.gmra.mrb[0].mxu0 %v1180
        %v1914 = vpop.f32.mrb[0].mxu0
        %v1915 = vadd.f32 0.0, %v1914
        %v1916 = vpop.f32.mrb[0].mxu0
        %v1917 = vpop.f32.mrb[0].mxu0
        %v1918 = vadd.f32 0.0, %v1917
        %v1919 = vpop.f32.mrb[0].mxu0
        %1920 = vmatprep.mubr.bf16.mxu0 %v1183
        %1921 = vmatmul.mubr.bf16.gmra.mrb[0].mxu0 %v1182
        %v1922 = vpop.f32.mrb[0].mxu0
        %v1923 = vadd.f32 0.0, %v1922
        %v1924 = vpop.f32.mrb[0].mxu0
        %v1925 = vpop.f32.mrb[0].mxu0
        %v1926 = vadd.f32 0.0, %v1925
        %v1927 = vpop.f32.mrb[0].mxu0
        %1928 = vmatprep.mubr.bf16.mxu0 %v1185
        %1929 = vmatmul.mubr.bf16.gmra.mrb[0].mxu0 %v1184
        %v1930 = vpop.f32.mrb[0].mxu0
        %v1931 = vadd.f32 0.0, %v1930
        %v1932 = vpop.f32.mrb[0].mxu0
        %v1933 = vpop.f32.mrb[0].mxu0
        %v1934 = vadd.f32 0.0, %v1933
        %v1935 = vpop.f32.mrb[0].mxu0
        %1936 = vmatprep.mubr.bf16.mxu0 %v1187
        %1937 = vmatmul.mubr.bf16.gmra.mrb[0].mxu0 %v1186
        %v1938 = vpop.f32.mrb[0].mxu0
        %v1939 = vadd.f32 0.0, %v1938
        %v1940 = vpop.f32.mrb[0].mxu0
        %v1941 = vpop.f32.mrb[0].mxu0
        %v1942 = vadd.f32 0.0, %v1941
        %v1943 = vpop.f32.mrb[0].mxu0
        %1944 = vmatprep.mubr.bf16.mxu0 %v1189
        %1945 = vmatmul.mubr.bf16.gmra.mrb[0].mxu0 %v1188
        %v1946 = vpop.f32.mrb[0].mxu0
        %v1947 = vadd.f32 0.0, %v1946
        %v1948 = vpop.f32.mrb[0].mxu0
        %v1949 = vpop.f32.mrb[0].mxu0
        %v1950 = vadd.f32 0.0, %v1949
        %v1951 = vpop.f32.mrb[0].mxu0
        %1952 = vmatprep.mubr.bf16.mxu0 %v1191
        %1953 = vmatmul.mubr.bf16.gmra.mrb[0].mxu0 %v1190
        %v1954 = vpop.f32.mrb[0].mxu0
        %v1955 = vadd.f32 0.0, %v1954
        %v1956 = vpop.f32.mrb[0].mxu0
        %v1957 = vpop.f32.mrb[0].mxu0
        %v1958 = vadd.f32 0.0, %v1957
        %v1959 = vpop.f32.mrb[0].mxu0
        %1960 = vdwg.mxu0
        %v1961 = vadd.f32 %v392, %v1451
        %v1962 = vadd.f32 %v393, %v1454
        %v1963 = vadd.f32 %v394, %v1459
        %v1964 = vadd.f32 %v395, %v1462
        %v1965 = vadd.f32 %v396, %v1467
        %v1966 = vadd.f32 %v397, %v1470
        %v1967 = vadd.f32 %v398, %v1475
        %v1968 = vadd.f32 %v399, %v1478
        %v1969 = vadd.f32 %v400, %v1483
        %v1970 = vadd.f32 %v401, %v1486
        %v1971 = vadd.f32 %v402, %v1491
        %v1972 = vadd.f32 %v403, %v1494
        %v1973 = vadd.f32 %v404, %v1499
        %v1974 = vadd.f32 %v405, %v1502
        %v1975 = vadd.f32 %v406, %v1507
        %v1976 = vadd.f32 %v407, %v1510
        %v1977 = vadd.f32 %v408, %v1515
        %v1978 = vadd.f32 %v409, %v1518
        %v1979 = vadd.f32 %v410, %v1523
        %v1980 = vadd.f32 %v411, %v1526
        %v1981 = vadd.f32 %v412, %v1531
        %v1982 = vadd.f32 %v413, %v1534
        %v1983 = vadd.f32 %v414, %v1539
        %v1984 = vadd.f32 %v415, %v1542
        %v1985 = vadd.f32 %v416, %v1547
        %v1986 = vadd.f32 %v417, %v1550
        %v1987 = vadd.f32 %v418, %v1555
        %v1988 = vadd.f32 %v419, %v1558
        %v1989 = vadd.f32 %v420, %v1563
        %v1990 = vadd.f32 %v421, %v1566
        %v1991 = vadd.f32 %v422, %v1571
        %v1992 = vadd.f32 %v423, %v1574
        %v1993 = vadd.f32 %v424, %v1579
        %v1994 = vadd.f32 %v425, %v1582
        %v1995 = vadd.f32 %v426, %v1587
        %v1996 = vadd.f32 %v427, %v1590
        %v1997 = vadd.f32 %v428, %v1595
        %v1998 = vadd.f32 %v429, %v1598
        %v1999 = vadd.f32 %v430, %v1603
        %v2000 = vadd.f32 %v431, %v1606
        %v2001 = vadd.f32 %v432, %v1611
        %v2002 = vadd.f32 %v433, %v1614
        %v2003 = vadd.f32 %v434, %v1619
        %v2004 = vadd.f32 %v435, %v1622
        %v2005 = vadd.f32 %v436, %v1627
        %v2006 = vadd.f32 %v437, %v1630
        %v2007 = vadd.f32 %v438, %v1635
        %v2008 = vadd.f32 %v439, %v1638
        %v2009 = vadd.f32 %v440, %v1643
        %v2010 = vadd.f32 %v441, %v1646
        %v2011 = vadd.f32 %v442, %v1651
        %v2012 = vadd.f32 %v443, %v1654
        %v2013 = vadd.f32 %v444, %v1659
        %v2014 = vadd.f32 %v445, %v1662
        %v2015 = vadd.f32 %v446, %v1667
        %v2016 = vadd.f32 %v447, %v1670
        %v2017 = vadd.f32 %v448, %v1675
        %v2018 = vadd.f32 %v449, %v1678
        %v2019 = vadd.f32 %v450, %v1683
        %v2020 = vadd.f32 %v451, %v1686
        %v2021 = vadd.f32 %v452, %v1691
        %v2022 = vadd.f32 %v453, %v1694
        %v2023 = vadd.f32 %v454, %v1699
        %v2024 = vadd.f32 %v455, %v1702
        %v2025 = vadd.f32 %v456, %v1707
        %v2026 = vadd.f32 %v457, %v1710
        %v2027 = vadd.f32 %v458, %v1715
        %v2028 = vadd.f32 %v459, %v1718
        %v2029 = vadd.f32 %v460, %v1723
        %v2030 = vadd.f32 %v461, %v1726
        %v2031 = vadd.f32 %v462, %v1731
        %v2032 = vadd.f32 %v463, %v1734
        %v2033 = vadd.f32 %v464, %v1739
        %v2034 = vadd.f32 %v465, %v1742
        %v2035 = vadd.f32 %v466, %v1747
        %v2036 = vadd.f32 %v467, %v1750
        %v2037 = vadd.f32 %v468, %v1755
        %v2038 = vadd.f32 %v469, %v1758
        %v2039 = vadd.f32 %v470, %v1763
        %v2040 = vadd.f32 %v471, %v1766
        %v2041 = vadd.f32 %v472, %v1771
        %v2042 = vadd.f32 %v473, %v1774
        %v2043 = vadd.f32 %v474, %v1779
        %v2044 = vadd.f32 %v475, %v1782
        %v2045 = vadd.f32 %v476, %v1787
        %v2046 = vadd.f32 %v477, %v1790
        %v2047 = vadd.f32 %v478, %v1795
        %v2048 = vadd.f32 %v479, %v1798
        %v2049 = vadd.f32 %v480, %v1803
        %v2050 = vadd.f32 %v481, %v1806
        %v2051 = vadd.f32 %v482, %v1811
        %v2052 = vadd.f32 %v483, %v1814
        %v2053 = vadd.f32 %v484, %v1819
        %v2054 = vadd.f32 %v485, %v1822
        %v2055 = vadd.f32 %v486, %v1827
        %v2056 = vadd.f32 %v487, %v1830
        %v2057 = vadd.f32 %v488, %v1835
        %v2058 = vadd.f32 %v489, %v1838
        %v2059 = vadd.f32 %v490, %v1843
        %v2060 = vadd.f32 %v491, %v1846
        %v2061 = vadd.f32 %v492, %v1851
        %v2062 = vadd.f32 %v493, %v1854
        %v2063 = vadd.f32 %v494, %v1859
        %v2064 = vadd.f32 %v495, %v1862
        %v2065 = vadd.f32 %v496, %v1867
        %v2066 = vadd.f32 %v497, %v1870
        %v2067 = vadd.f32 %v498, %v1875
        %v2068 = vadd.f32 %v499, %v1878
        %v2069 = vadd.f32 %v500, %v1883
        %v2070 = vadd.f32 %v501, %v1886
        %v2071 = vadd.f32 %v502, %v1891
        %v2072 = vadd.f32 %v503, %v1894
        %v2073 = vadd.f32 %v504, %v1899
        %v2074 = vadd.f32 %v505, %v1902
        %v2075 = vadd.f32 %v506, %v1907
        %v2076 = vadd.f32 %v507, %v1910
        %v2077 = vadd.f32 %v508, %v1915
        %v2078 = vadd.f32 %v509, %v1918
        %v2079 = vadd.f32 %v510, %v1923
        %v2080 = vadd.f32 %v511, %v1926
        %v2081 = vadd.f32 %v512, %v1931
        %v2082 = vadd.f32 %v513, %v1934
        %v2083 = vadd.f32 %v514, %v1939
        %v2084 = vadd.f32 %v515, %v1942
        %v2085 = vadd.f32 %v516, %v1947
        %v2086 = vadd.f32 %v517, %v1950
        %v2087 = vadd.f32 %v518, %v1955
        %v2088 = vadd.f32 %v519, %v1958
        %2089 = vst [vmem:[#allocation2] sm:$0xff] %v1961
        %2090 = vst [vmem:[#allocation2 + $0x8] sm:$0xff] %v1962
        %2091 = vst [vmem:[#allocation2 + $0x10] sm:$0xff] %v1963
        %2092 = vst [vmem:[#allocation2 + $0x18] sm:$0xff] %v1964
        %2093 = vst [vmem:[#allocation2 + $0x20] sm:$0xff] %v1965
        %2094 = vst [vmem:[#allocation2 + $0x28] sm:$0xff] %v1966
        %2095 = vst [vmem:[#allocation2 + $0x30] sm:$0xff] %v1967
        %2096 = vst [vmem:[#allocation2 + $0x38] sm:$0xff] %v1968
        %2097 = vst [vmem:[#allocation2 + $0x40] sm:$0xff] %v1969
        %2098 = vst [vmem:[#allocation2 + $0x48] sm:$0xff] %v1970
        %2099 = vst [vmem:[#allocation2 + $0x50] sm:$0xff] %v1971
        %2100 = vst [vmem:[#allocation2 + $0x58] sm:$0xff] %v1972
        %2101 = vst [vmem:[#allocation2 + $0x60] sm:$0xff] %v1973
        %2102 = vst [vmem:[#allocation2 + $0x68] sm:$0xff] %v1974
        %2103 = vst [vmem:[#allocation2 + $0x70] sm:$0xff] %v1975
        %2104 = vst [vmem:[#allocation2 + $0x78] sm:$0xff] %v1976
        %2105 = vst [vmem:[#allocation2 + $0x80] sm:$0xff] %v1977
        %2106 = vst [vmem:[#allocation2 + $0x88] sm:$0xff] %v1978
        %2107 = vst [vmem:[#allocation2 + $0x90] sm:$0xff] %v1979
        %2108 = vst [vmem:[#allocation2 + $0x98] sm:$0xff] %v1980
        %2109 = vst [vmem:[#allocation2 + $0xa0] sm:$0xff] %v1981
        %2110 = vst [vmem:[#allocation2 + $0xa8] sm:$0xff] %v1982
        %2111 = vst [vmem:[#allocation2 + $0xb0] sm:$0xff] %v1983
        %2112 = vst [vmem:[#allocation2 + $0xb8] sm:$0xff] %v1984
        %2113 = vst [vmem:[#allocation2 + $0xc0] sm:$0xff] %v1985
        %2114 = vst [vmem:[#allocation2 + $0xc8] sm:$0xff] %v1986
        %2115 = vst [vmem:[#allocation2 + $0xd0] sm:$0xff] %v1987
        %2116 = vst [vmem:[#allocation2 + $0xd8] sm:$0xff] %v1988
        %2117 = vst [vmem:[#allocation2 + $0xe0] sm:$0xff] %v1989
        %2118 = vst [vmem:[#allocation2 + $0xe8] sm:$0xff] %v1990
        %2119 = vst [vmem:[#allocation2 + $0xf0] sm:$0xff] %v1991
        %2120 = vst [vmem:[#allocation2 + $0xf8] sm:$0xff] %v1992
        %2121 = vst [vmem:[#allocation2 + $0x100] sm:$0xff] %v1993
        %2122 = vst [vmem:[#allocation2 + $0x108] sm:$0xff] %v1994
        %2123 = vst [vmem:[#allocation2 + $0x110] sm:$0xff] %v1995
        %2124 = vst [vmem:[#allocation2 + $0x118] sm:$0xff] %v1996
        %2125 = vst [vmem:[#allocation2 + $0x120] sm:$0xff] %v1997
        %2126 = vst [vmem:[#allocation2 + $0x128] sm:$0xff] %v1998
        %2127 = vst [vmem:[#allocation2 + $0x130] sm:$0xff] %v1999
        %2128 = vst [vmem:[#allocation2 + $0x138] sm:$0xff] %v2000
        %2129 = vst [vmem:[#allocation2 + $0x140] sm:$0xff] %v2001
        %2130 = vst [vmem:[#allocation2 + $0x148] sm:$0xff] %v2002
        %2131 = vst [vmem:[#allocation2 + $0x150] sm:$0xff] %v2003
        %2132 = vst [vmem:[#allocation2 + $0x158] sm:$0xff] %v2004
        %2133 = vst [vmem:[#allocation2 + $0x160] sm:$0xff] %v2005
        %2134 = vst [vmem:[#allocation2 + $0x168] sm:$0xff] %v2006
        %2135 = vst [vmem:[#allocation2 + $0x170] sm:$0xff] %v2007
        %2136 = vst [vmem:[#allocation2 + $0x178] sm:$0xff] %v2008
        %2137 = vst [vmem:[#allocation2 + $0x180] sm:$0xff] %v2009
        %2138 = vst [vmem:[#allocation2 + $0x188] sm:$0xff] %v2010
        %2139 = vst [vmem:[#allocation2 + $0x190] sm:$0xff] %v2011
        %2140 = vst [vmem:[#allocation2 + $0x198] sm:$0xff] %v2012
        %2141 = vst [vmem:[#allocation2 + $0x1a0] sm:$0xff] %v2013
        %2142 = vst [vmem:[#allocation2 + $0x1a8] sm:$0xff] %v2014
        %2143 = vst [vmem:[#allocation2 + $0x1b0] sm:$0xff] %v2015
        %2144 = vst [vmem:[#allocation2 + $0x1b8] sm:$0xff] %v2016
        %2145 = vst [vmem:[#allocation2 + $0x1c0] sm:$0xff] %v2017
        %2146 = vst [vmem:[#allocation2 + $0x1c8] sm:$0xff] %v2018
        %2147 = vst [vmem:[#allocation2 + $0x1d0] sm:$0xff] %v2019
        %2148 = vst [vmem:[#allocation2 + $0x1d8] sm:$0xff] %v2020
        %2149 = vst [vmem:[#allocation2 + $0x1e0] sm:$0xff] %v2021
        %2150 = vst [vmem:[#allocation2 + $0x1e8] sm:$0xff] %v2022
        %2151 = vst [vmem:[#allocation2 + $0x1f0] sm:$0xff] %v2023
        %2152 = vst [vmem:[#allocation2 + $0x1f8] sm:$0xff] %v2024
        %2153 = vst [vmem:[#allocation2 + $0x200] sm:$0xff] %v2025
        %2154 = vst [vmem:[#allocation2 + $0x208] sm:$0xff] %v2026
        %2155 = vst [vmem:[#allocation2 + $0x210] sm:$0xff] %v2027
        %2156 = vst [vmem:[#allocation2 + $0x218] sm:$0xff] %v2028
        %2157 = vst [vmem:[#allocation2 + $0x220] sm:$0xff] %v2029
        %2158 = vst [vmem:[#allocation2 + $0x228] sm:$0xff] %v2030
        %2159 = vst [vmem:[#allocation2 + $0x230] sm:$0xff] %v2031
        %2160 = vst [vmem:[#allocation2 + $0x238] sm:$0xff] %v2032
        %2161 = vst [vmem:[#allocation2 + $0x240] sm:$0xff] %v2033
        %2162 = vst [vmem:[#allocation2 + $0x248] sm:$0xff] %v2034
        %2163 = vst [vmem:[#allocation2 + $0x250] sm:$0xff] %v2035
        %2164 = vst [vmem:[#allocation2 + $0x258] sm:$0xff] %v2036
        %2165 = vst [vmem:[#allocation2 + $0x260] sm:$0xff] %v2037
        %2166 = vst [vmem:[#allocation2 + $0x268] sm:$0xff] %v2038
        %2167 = vst [vmem:[#allocation2 + $0x270] sm:$0xff] %v2039
        %2168 = vst [vmem:[#allocation2 + $0x278] sm:$0xff] %v2040
        %2169 = vst [vmem:[#allocation2 + $0x280] sm:$0xff] %v2041
        %2170 = vst [vmem:[#allocation2 + $0x288] sm:$0xff] %v2042
        %2171 = vst [vmem:[#allocation2 + $0x290] sm:$0xff] %v2043
        %2172 = vst [vmem:[#allocation2 + $0x298] sm:$0xff] %v2044
        %2173 = vst [vmem:[#allocation2 + $0x2a0] sm:$0xff] %v2045
        %2174 = vst [vmem:[#allocation2 + $0x2a8] sm:$0xff] %v2046
        %2175 = vst [vmem:[#allocation2 + $0x2b0] sm:$0xff] %v2047
        %2176 = vst [vmem:[#allocation2 + $0x2b8] sm:$0xff] %v2048
        %2177 = vst [vmem:[#allocation2 + $0x2c0] sm:$0xff] %v2049
        %2178 = vst [vmem:[#allocation2 + $0x2c8] sm:$0xff] %v2050
        %2179 = vst [vmem:[#allocation2 + $0x2d0] sm:$0xff] %v2051
        %2180 = vst [vmem:[#allocation2 + $0x2d8] sm:$0xff] %v2052
        %2181 = vst [vmem:[#allocation2 + $0x2e0] sm:$0xff] %v2053
        %2182 = vst [vmem:[#allocation2 + $0x2e8] sm:$0xff] %v2054
        %2183 = vst [vmem:[#allocation2 + $0x2f0] sm:$0xff] %v2055
        %2184 = vst [vmem:[#allocation2 + $0x2f8] sm:$0xff] %v2056
        %2185 = vst [vmem:[#allocation2 + $0x300] sm:$0xff] %v2057
        %2186 = vst [vmem:[#allocation2 + $0x308] sm:$0xff] %v2058
        %2187 = vst [vmem:[#allocation2 + $0x310] sm:$0xff] %v2059
        %2188 = vst [vmem:[#allocation2 + $0x318] sm:$0xff] %v2060
        %2189 = vst [vmem:[#allocation2 + $0x320] sm:$0xff] %v2061
        %2190 = vst [vmem:[#allocation2 + $0x328] sm:$0xff] %v2062
        %2191 = vst [vmem:[#allocation2 + $0x330] sm:$0xff] %v2063
        %2192 = vst [vmem:[#allocation2 + $0x338] sm:$0xff] %v2064
        %2193 = vst [vmem:[#allocation2 + $0x340] sm:$0xff] %v2065
        %2194 = vst [vmem:[#allocation2 + $0x348] sm:$0xff] %v2066
        %2195 = vst [vmem:[#allocation2 + $0x350] sm:$0xff] %v2067
        %2196 = vst [vmem:[#allocation2 + $0x358] sm:$0xff] %v2068
        %2197 = vst [vmem:[#allocation2 + $0x360] sm:$0xff] %v2069
        %2198 = vst [vmem:[#allocation2 + $0x368] sm:$0xff] %v2070
        %2199 = vst [vmem:[#allocation2 + $0x370] sm:$0xff] %v2071
        %2200 = vst [vmem:[#allocation2 + $0x378] sm:$0xff] %v2072
        %2201 = vst [vmem:[#allocation2 + $0x380] sm:$0xff] %v2073
        %2202 = vst [vmem:[#allocation2 + $0x388] sm:$0xff] %v2074
        %2203 = vst [vmem:[#allocation2 + $0x390] sm:$0xff] %v2075
        %2204 = vst [vmem:[#allocation2 + $0x398] sm:$0xff] %v2076
        %2205 = vst [vmem:[#allocation2 + $0x3a0] sm:$0xff] %v2077
        %2206 = vst [vmem:[#allocation2 + $0x3a8] sm:$0xff] %v2078
        %2207 = vst [vmem:[#allocation2 + $0x3b0] sm:$0xff] %v2079
        %2208 = vst [vmem:[#allocation2 + $0x3b8] sm:$0xff] %v2080
        %2209 = vst [vmem:[#allocation2 + $0x3c0] sm:$0xff] %v2081
        %2210 = vst [vmem:[#allocation2 + $0x3c8] sm:$0xff] %v2082
        %2211 = vst [vmem:[#allocation2 + $0x3d0] sm:$0xff] %v2083
        %2212 = vst [vmem:[#allocation2 + $0x3d8] sm:$0xff] %v2084
        %2213 = vst [vmem:[#allocation2 + $0x3e0] sm:$0xff] %v2085
        %2214 = vst [vmem:[#allocation2 + $0x3e8] sm:$0xff] %v2086
        %2215 = vst [vmem:[#allocation2 + $0x3f0] sm:$0xff] %v2087
        %2216 = vst [vmem:[#allocation2 + $0x3f8] sm:$0xff] %v2088
        // Predicated region
        $region45: #{tpu_custom_call.1} parent=31 // pred_check
          %p2217 = pneg %p260
        $region46: #{tpu_custom_call.1} parent=31 // pred_check_branch
          %2219 = sbr.rel (%p2217) target = $region48
        $region47: #{tpu_custom_call.1} parent=31 // pred_region
          %v2220 = vld [vmem:[#allocation2] sm:$0xff]
          %v2221 = vld [vmem:[#allocation2 + $0x8] sm:$0xff]
          %v2222 = vld [vmem:[#allocation2 + $0x10] sm:$0xff]
          %v2223 = vld [vmem:[#allocation2 + $0x18] sm:$0xff]
          %v2224 = vld [vmem:[#allocation2 + $0x20] sm:$0xff]
          %v2225 = vld [vmem:[#allocation2 + $0x28] sm:$0xff]
          %v2226 = vld [vmem:[#allocation2 + $0x30] sm:$0xff]
          %v2227 = vld [vmem:[#allocation2 + $0x38] sm:$0xff]
          %v2228 = vld [vmem:[#allocation2 + $0x40] sm:$0xff]
          %v2229 = vld [vmem:[#allocation2 + $0x48] sm:$0xff]
          %v2230 = vld [vmem:[#allocation2 + $0x50] sm:$0xff]
          %v2231 = vld [vmem:[#allocation2 + $0x58] sm:$0xff]
          %v2232 = vld [vmem:[#allocation2 + $0x60] sm:$0xff]
          %v2233 = vld [vmem:[#allocation2 + $0x68] sm:$0xff]
          %v2234 = vld [vmem:[#allocation2 + $0x70] sm:$0xff]
          %v2235 = vld [vmem:[#allocation2 + $0x78] sm:$0xff]
          %v2236 = vld [vmem:[#allocation2 + $0x80] sm:$0xff]
          %v2237 = vld [vmem:[#allocation2 + $0x88] sm:$0xff]
          %v2238 = vld [vmem:[#allocation2 + $0x90] sm:$0xff]
          %v2239 = vld [vmem:[#allocation2 + $0x98] sm:$0xff]
          %v2240 = vld [vmem:[#allocation2 + $0xa0] sm:$0xff]
          %v2241 = vld [vmem:[#allocation2 + $0xa8] sm:$0xff]
          %v2242 = vld [vmem:[#allocation2 + $0xb0] sm:$0xff]
          %v2243 = vld [vmem:[#allocation2 + $0xb8] sm:$0xff]
          %v2244 = vld [vmem:[#allocation2 + $0xc0] sm:$0xff]
          %v2245 = vld [vmem:[#allocation2 + $0xc8] sm:$0xff]
          %v2246 = vld [vmem:[#allocation2 + $0xd0] sm:$0xff]
          %v2247 = vld [vmem:[#allocation2 + $0xd8] sm:$0xff]
          %v2248 = vld [vmem:[#allocation2 + $0xe0] sm:$0xff]
          %v2249 = vld [vmem:[#allocation2 + $0xe8] sm:$0xff]
          %v2250 = vld [vmem:[#allocation2 + $0xf0] sm:$0xff]
          %v2251 = vld [vmem:[#allocation2 + $0xf8] sm:$0xff]
          %v2252 = vld [vmem:[#allocation2 + $0x100] sm:$0xff]
          %v2253 = vld [vmem:[#allocation2 + $0x108] sm:$0xff]
          %v2254 = vld [vmem:[#allocation2 + $0x110] sm:$0xff]
          %v2255 = vld [vmem:[#allocation2 + $0x118] sm:$0xff]
          %v2256 = vld [vmem:[#allocation2 + $0x120] sm:$0xff]
          %v2257 = vld [vmem:[#allocation2 + $0x128] sm:$0xff]
          %v2258 = vld [vmem:[#allocation2 + $0x130] sm:$0xff]
          %v2259 = vld [vmem:[#allocation2 + $0x138] sm:$0xff]
          %v2260 = vld [vmem:[#allocation2 + $0x140] sm:$0xff]
          %v2261 = vld [vmem:[#allocation2 + $0x148] sm:$0xff]
          %v2262 = vld [vmem:[#allocation2 + $0x150] sm:$0xff]
          %v2263 = vld [vmem:[#allocation2 + $0x158] sm:$0xff]
          %v2264 = vld [vmem:[#allocation2 + $0x160] sm:$0xff]
          %v2265 = vld [vmem:[#allocation2 + $0x168] sm:$0xff]
          %v2266 = vld [vmem:[#allocation2 + $0x170] sm:$0xff]
          %v2267 = vld [vmem:[#allocation2 + $0x178] sm:$0xff]
          %v2268 = vld [vmem:[#allocation2 + $0x180] sm:$0xff]
          %v2269 = vld [vmem:[#allocation2 + $0x188] sm:$0xff]
          %v2270 = vld [vmem:[#allocation2 + $0x190] sm:$0xff]
          %v2271 = vld [vmem:[#allocation2 + $0x198] sm:$0xff]
          %v2272 = vld [vmem:[#allocation2 + $0x1a0] sm:$0xff]
          %v2273 = vld [vmem:[#allocation2 + $0x1a8] sm:$0xff]
          %v2274 = vld [vmem:[#allocation2 + $0x1b0] sm:$0xff]
          %v2275 = vld [vmem:[#allocation2 + $0x1b8] sm:$0xff]
          %v2276 = vld [vmem:[#allocation2 + $0x1c0] sm:$0xff]
          %v2277 = vld [vmem:[#allocation2 + $0x1c8] sm:$0xff]
          %v2278 = vld [vmem:[#allocation2 + $0x1d0] sm:$0xff]
          %v2279 = vld [vmem:[#allocation2 + $0x1d8] sm:$0xff]
          %v2280 = vld [vmem:[#allocation2 + $0x1e0] sm:$0xff]
          %v2281 = vld [vmem:[#allocation2 + $0x1e8] sm:$0xff]
          %v2282 = vld [vmem:[#allocation2 + $0x1f0] sm:$0xff]
          %v2283 = vld [vmem:[#allocation2 + $0x1f8] sm:$0xff]
          %v2284 = vld [vmem:[#allocation2 + $0x200] sm:$0xff]
          %v2285 = vld [vmem:[#allocation2 + $0x208] sm:$0xff]
          %v2286 = vld [vmem:[#allocation2 + $0x210] sm:$0xff]
          %v2287 = vld [vmem:[#allocation2 + $0x218] sm:$0xff]
          %v2288 = vld [vmem:[#allocation2 + $0x220] sm:$0xff]
          %v2289 = vld [vmem:[#allocation2 + $0x228] sm:$0xff]
          %v2290 = vld [vmem:[#allocation2 + $0x230] sm:$0xff]
          %v2291 = vld [vmem:[#allocation2 + $0x238] sm:$0xff]
          %v2292 = vld [vmem:[#allocation2 + $0x240] sm:$0xff]
          %v2293 = vld [vmem:[#allocation2 + $0x248] sm:$0xff]
          %v2294 = vld [vmem:[#allocation2 + $0x250] sm:$0xff]
          %v2295 = vld [vmem:[#allocation2 + $0x258] sm:$0xff]
          %v2296 = vld [vmem:[#allocation2 + $0x260] sm:$0xff]
          %v2297 = vld [vmem:[#allocation2 + $0x268] sm:$0xff]
          %v2298 = vld [vmem:[#allocation2 + $0x270] sm:$0xff]
          %v2299 = vld [vmem:[#allocation2 + $0x278] sm:$0xff]
          %v2300 = vld [vmem:[#allocation2 + $0x280] sm:$0xff]
          %v2301 = vld [vmem:[#allocation2 + $0x288] sm:$0xff]
          %v2302 = vld [vmem:[#allocation2 + $0x290] sm:$0xff]
          %v2303 = vld [vmem:[#allocation2 + $0x298] sm:$0xff]
          %v2304 = vld [vmem:[#allocation2 + $0x2a0] sm:$0xff]
          %v2305 = vld [vmem:[#allocation2 + $0x2a8] sm:$0xff]
          %v2306 = vld [vmem:[#allocation2 + $0x2b0] sm:$0xff]
          %v2307 = vld [vmem:[#allocation2 + $0x2b8] sm:$0xff]
          %v2308 = vld [vmem:[#allocation2 + $0x2c0] sm:$0xff]
          %v2309 = vld [vmem:[#allocation2 + $0x2c8] sm:$0xff]
          %v2310 = vld [vmem:[#allocation2 + $0x2d0] sm:$0xff]
          %v2311 = vld [vmem:[#allocation2 + $0x2d8] sm:$0xff]
          %v2312 = vld [vmem:[#allocation2 + $0x2e0] sm:$0xff]
          %v2313 = vld [vmem:[#allocation2 + $0x2e8] sm:$0xff]
          %v2314 = vld [vmem:[#allocation2 + $0x2f0] sm:$0xff]
          %v2315 = vld [vmem:[#allocation2 + $0x2f8] sm:$0xff]
          %v2316 = vld [vmem:[#allocation2 + $0x300] sm:$0xff]
          %v2317 = vld [vmem:[#allocation2 + $0x308] sm:$0xff]
          %v2318 = vld [vmem:[#allocation2 + $0x310] sm:$0xff]
          %v2319 = vld [vmem:[#allocation2 + $0x318] sm:$0xff]
          %v2320 = vld [vmem:[#allocation2 + $0x320] sm:$0xff]
          %v2321 = vld [vmem:[#allocation2 + $0x328] sm:$0xff]
          %v2322 = vld [vmem:[#allocation2 + $0x330] sm:$0xff]
          %v2323 = vld [vmem:[#allocation2 + $0x338] sm:$0xff]
          %v2324 = vld [vmem:[#allocation2 + $0x340] sm:$0xff]
          %v2325 = vld [vmem:[#allocation2 + $0x348] sm:$0xff]
          %v2326 = vld [vmem:[#allocation2 + $0x350] sm:$0xff]
          %v2327 = vld [vmem:[#allocation2 + $0x358] sm:$0xff]
          %v2328 = vld [vmem:[#allocation2 + $0x360] sm:$0xff]
          %v2329 = vld [vmem:[#allocation2 + $0x368] sm:$0xff]
          %v2330 = vld [vmem:[#allocation2 + $0x370] sm:$0xff]
          %v2331 = vld [vmem:[#allocation2 + $0x378] sm:$0xff]
          %v2332 = vld [vmem:[#allocation2 + $0x380] sm:$0xff]
          %v2333 = vld [vmem:[#allocation2 + $0x388] sm:$0xff]
          %v2334 = vld [vmem:[#allocation2 + $0x390] sm:$0xff]
          %v2335 = vld [vmem:[#allocation2 + $0x398] sm:$0xff]
          %v2336 = vld [vmem:[#allocation2 + $0x3a0] sm:$0xff]
          %v2337 = vld [vmem:[#allocation2 + $0x3a8] sm:$0xff]
          %v2338 = vld [vmem:[#allocation2 + $0x3b0] sm:$0xff]
          %v2339 = vld [vmem:[#allocation2 + $0x3b8] sm:$0xff]
          %v2340 = vld [vmem:[#allocation2 + $0x3c0] sm:$0xff]
          %v2341 = vld [vmem:[#allocation2 + $0x3c8] sm:$0xff]
          %v2342 = vld [vmem:[#allocation2 + $0x3d0] sm:$0xff]
          %v2343 = vld [vmem:[#allocation2 + $0x3d8] sm:$0xff]
          %v2344 = vld [vmem:[#allocation2 + $0x3e0] sm:$0xff]
          %v2345 = vld [vmem:[#allocation2 + $0x3e8] sm:$0xff]
          %v2346 = vld [vmem:[#allocation2 + $0x3f0] sm:$0xff]
          %v2347 = vld [vmem:[#allocation2 + $0x3f8] sm:$0xff]
          %v2348 = vld [vmem:[%s257] sm:$0x1]
          %v2350 = vlaneseq
          %v2351 = vshrl.u32 %v2350, 7
          %v2352 = vsub.s32 0, %v2351
          %v2353 = vrot.slane %v2348, %v2352
          %v2355 = vadd.f32 %v2220, %v2353
          %v2356 = vadd.f32 %v2221, %v2353
          %v2357 = vadd.f32 %v2222, %v2353
          %v2358 = vadd.f32 %v2223, %v2353
          %v2359 = vadd.f32 %v2224, %v2353
          %v2360 = vadd.f32 %v2225, %v2353
          %v2361 = vadd.f32 %v2226, %v2353
          %v2362 = vadd.f32 %v2227, %v2353
          %v2363 = vadd.f32 %v2228, %v2353
          %v2364 = vadd.f32 %v2229, %v2353
          %v2365 = vadd.f32 %v2230, %v2353
          %v2366 = vadd.f32 %v2231, %v2353
          %v2367 = vadd.f32 %v2232, %v2353
          %v2368 = vadd.f32 %v2233, %v2353
          %v2369 = vadd.f32 %v2234, %v2353
          %v2370 = vadd.f32 %v2235, %v2353
          %v2371 = vadd.f32 %v2236, %v2353
          %v2372 = vadd.f32 %v2237, %v2353
          %v2373 = vadd.f32 %v2238, %v2353
          %v2374 = vadd.f32 %v2239, %v2353
          %v2375 = vadd.f32 %v2240, %v2353
          %v2376 = vadd.f32 %v2241, %v2353
          %v2377 = vadd.f32 %v2242, %v2353
          %v2378 = vadd.f32 %v2243, %v2353
          %v2379 = vadd.f32 %v2244, %v2353
          %v2380 = vadd.f32 %v2245, %v2353
          %v2381 = vadd.f32 %v2246, %v2353
          %v2382 = vadd.f32 %v2247, %v2353
          %v2383 = vadd.f32 %v2248, %v2353
          %v2384 = vadd.f32 %v2249, %v2353
          %v2385 = vadd.f32 %v2250, %v2353
          %v2386 = vadd.f32 %v2251, %v2353
          %v2387 = vadd.f32 %v2252, %v2353
          %v2388 = vadd.f32 %v2253, %v2353
          %v2389 = vadd.f32 %v2254, %v2353
          %v2390 = vadd.f32 %v2255, %v2353
          %v2391 = vadd.f32 %v2256, %v2353
          %v2392 = vadd.f32 %v2257, %v2353
          %v2393 = vadd.f32 %v2258, %v2353
          %v2394 = vadd.f32 %v2259, %v2353
          %v2395 = vadd.f32 %v2260, %v2353
          %v2396 = vadd.f32 %v2261, %v2353
          %v2397 = vadd.f32 %v2262, %v2353
          %v2398 = vadd.f32 %v2263, %v2353
          %v2399 = vadd.f32 %v2264, %v2353
          %v2400 = vadd.f32 %v2265, %v2353
          %v2401 = vadd.f32 %v2266, %v2353
          %v2402 = vadd.f32 %v2267, %v2353
          %v2403 = vadd.f32 %v2268, %v2353
          %v2404 = vadd.f32 %v2269, %v2353
          %v2405 = vadd.f32 %v2270, %v2353
          %v2406 = vadd.f32 %v2271, %v2353
          %v2407 = vadd.f32 %v2272, %v2353
          %v2408 = vadd.f32 %v2273, %v2353
          %v2409 = vadd.f32 %v2274, %v2353
          %v2410 = vadd.f32 %v2275, %v2353
          %v2411 = vadd.f32 %v2276, %v2353
          %v2412 = vadd.f32 %v2277, %v2353
          %v2413 = vadd.f32 %v2278, %v2353
          %v2414 = vadd.f32 %v2279, %v2353
          %v2415 = vadd.f32 %v2280, %v2353
          %v2416 = vadd.f32 %v2281, %v2353
          %v2417 = vadd.f32 %v2282, %v2353
          %v2418 = vadd.f32 %v2283, %v2353
          %v2419 = vadd.f32 %v2284, %v2353
          %v2420 = vadd.f32 %v2285, %v2353
          %v2421 = vadd.f32 %v2286, %v2353
          %v2422 = vadd.f32 %v2287, %v2353
          %v2423 = vadd.f32 %v2288, %v2353
          %v2424 = vadd.f32 %v2289, %v2353
          %v2425 = vadd.f32 %v2290, %v2353
          %v2426 = vadd.f32 %v2291, %v2353
          %v2427 = vadd.f32 %v2292, %v2353
          %v2428 = vadd.f32 %v2293, %v2353
          %v2429 = vadd.f32 %v2294, %v2353
          %v2430 = vadd.f32 %v2295, %v2353
          %v2431 = vadd.f32 %v2296, %v2353
          %v2432 = vadd.f32 %v2297, %v2353
          %v2433 = vadd.f32 %v2298, %v2353
          %v2434 = vadd.f32 %v2299, %v2353
          %v2435 = vadd.f32 %v2300, %v2353
          %v2436 = vadd.f32 %v2301, %v2353
          %v2437 = vadd.f32 %v2302, %v2353
          %v2438 = vadd.f32 %v2303, %v2353
          %v2439 = vadd.f32 %v2304, %v2353
          %v2440 = vadd.f32 %v2305, %v2353
          %v2441 = vadd.f32 %v2306, %v2353
          %v2442 = vadd.f32 %v2307, %v2353
          %v2443 = vadd.f32 %v2308, %v2353
          %v2444 = vadd.f32 %v2309, %v2353
          %v2445 = vadd.f32 %v2310, %v2353
          %v2446 = vadd.f32 %v2311, %v2353
          %v2447 = vadd.f32 %v2312, %v2353
          %v2448 = vadd.f32 %v2313, %v2353
          %v2449 = vadd.f32 %v2314, %v2353
          %v2450 = vadd.f32 %v2315, %v2353
          %v2451 = vadd.f32 %v2316, %v2353
          %v2452 = vadd.f32 %v2317, %v2353
          %v2453 = vadd.f32 %v2318, %v2353
          %v2454 = vadd.f32 %v2319, %v2353
          %v2455 = vadd.f32 %v2320, %v2353
          %v2456 = vadd.f32 %v2321, %v2353
          %v2457 = vadd.f32 %v2322, %v2353
          %v2458 = vadd.f32 %v2323, %v2353
          %v2459 = vadd.f32 %v2324, %v2353
          %v2460 = vadd.f32 %v2325, %v2353
          %v2461 = vadd.f32 %v2326, %v2353
          %v2462 = vadd.f32 %v2327, %v2353
          %v2463 = vadd.f32 %v2328, %v2353
          %v2464 = vadd.f32 %v2329, %v2353
          %v2465 = vadd.f32 %v2330, %v2353
          %v2466 = vadd.f32 %v2331, %v2353
          %v2467 = vadd.f32 %v2332, %v2353
          %v2468 = vadd.f32 %v2333, %v2353
          %v2469 = vadd.f32 %v2334, %v2353
          %v2470 = vadd.f32 %v2335, %v2353
          %v2471 = vadd.f32 %v2336, %v2353
          %v2472 = vadd.f32 %v2337, %v2353
          %v2473 = vadd.f32 %v2338, %v2353
          %v2474 = vadd.f32 %v2339, %v2353
          %v2475 = vadd.f32 %v2340, %v2353
          %v2476 = vadd.f32 %v2341, %v2353
          %v2477 = vadd.f32 %v2342, %v2353
          %v2478 = vadd.f32 %v2343, %v2353
          %v2479 = vadd.f32 %v2344, %v2353
          %v2480 = vadd.f32 %v2345, %v2353
          %v2481 = vadd.f32 %v2346, %v2353
          %v2482 = vadd.f32 %v2347, %v2353
          %v2483 = vmax.f32 %v2355, 0.0
          %v2484 = vmax.f32 %v2356, 0.0
          %v2485 = vmax.f32 %v2357, 0.0
          %v2486 = vmax.f32 %v2358, 0.0
          %v2487 = vmax.f32 %v2359, 0.0
          %v2488 = vmax.f32 %v2360, 0.0
          %v2489 = vmax.f32 %v2361, 0.0
          %v2490 = vmax.f32 %v2362, 0.0
          %v2491 = vmax.f32 %v2363, 0.0
          %v2492 = vmax.f32 %v2364, 0.0
          %v2493 = vmax.f32 %v2365, 0.0
          %v2494 = vmax.f32 %v2366, 0.0
          %v2495 = vmax.f32 %v2367, 0.0
          %v2496 = vmax.f32 %v2368, 0.0
          %v2497 = vmax.f32 %v2369, 0.0
          %v2498 = vmax.f32 %v2370, 0.0
          %v2499 = vmax.f32 %v2371, 0.0
          %v2500 = vmax.f32 %v2372, 0.0
          %v2501 = vmax.f32 %v2373, 0.0
          %v2502 = vmax.f32 %v2374, 0.0
          %v2503 = vmax.f32 %v2375, 0.0
          %v2504 = vmax.f32 %v2376, 0.0
          %v2505 = vmax.f32 %v2377, 0.0
          %v2506 = vmax.f32 %v2378, 0.0
          %v2507 = vmax.f32 %v2379, 0.0
          %v2508 = vmax.f32 %v2380, 0.0
          %v2509 = vmax.f32 %v2381, 0.0
          %v2510 = vmax.f32 %v2382, 0.0
          %v2511 = vmax.f32 %v2383, 0.0
          %v2512 = vmax.f32 %v2384, 0.0
          %v2513 = vmax.f32 %v2385, 0.0
          %v2514 = vmax.f32 %v2386, 0.0
          %v2515 = vmax.f32 %v2387, 0.0
          %v2516 = vmax.f32 %v2388, 0.0
          %v2517 = vmax.f32 %v2389, 0.0
          %v2518 = vmax.f32 %v2390, 0.0
          %v2519 = vmax.f32 %v2391, 0.0
          %v2520 = vmax.f32 %v2392, 0.0
          %v2521 = vmax.f32 %v2393, 0.0
          %v2522 = vmax.f32 %v2394, 0.0
          %v2523 = vmax.f32 %v2395, 0.0
          %v2524 = vmax.f32 %v2396, 0.0
          %v2525 = vmax.f32 %v2397, 0.0
          %v2526 = vmax.f32 %v2398, 0.0
          %v2527 = vmax.f32 %v2399, 0.0
          %v2528 = vmax.f32 %v2400, 0.0
          %v2529 = vmax.f32 %v2401, 0.0
          %v2530 = vmax.f32 %v2402, 0.0
          %v2531 = vmax.f32 %v2403, 0.0
          %v2532 = vmax.f32 %v2404, 0.0
          %v2533 = vmax.f32 %v2405, 0.0
          %v2534 = vmax.f32 %v2406, 0.0
          %v2535 = vmax.f32 %v2407, 0.0
          %v2536 = vmax.f32 %v2408, 0.0
          %v2537 = vmax.f32 %v2409, 0.0
          %v2538 = vmax.f32 %v2410, 0.0
          %v2539 = vmax.f32 %v2411, 0.0
          %v2540 = vmax.f32 %v2412, 0.0
          %v2541 = vmax.f32 %v2413, 0.0
          %v2542 = vmax.f32 %v2414, 0.0
          %v2543 = vmax.f32 %v2415, 0.0
          %v2544 = vmax.f32 %v2416, 0.0
          %v2545 = vmax.f32 %v2417, 0.0
          %v2546 = vmax.f32 %v2418, 0.0
          %v2547 = vmax.f32 %v2419, 0.0
          %v2548 = vmax.f32 %v2420, 0.0
          %v2549 = vmax.f32 %v2421, 0.0
          %v2550 = vmax.f32 %v2422, 0.0
          %v2551 = vmax.f32 %v2423, 0.0
          %v2552 = vmax.f32 %v2424, 0.0
          %v2553 = vmax.f32 %v2425, 0.0
          %v2554 = vmax.f32 %v2426, 0.0
          %v2555 = vmax.f32 %v2427, 0.0
          %v2556 = vmax.f32 %v2428, 0.0
          %v2557 = vmax.f32 %v2429, 0.0
          %v2558 = vmax.f32 %v2430, 0.0
          %v2559 = vmax.f32 %v2431, 0.0
          %v2560 = vmax.f32 %v2432, 0.0
          %v2561 = vmax.f32 %v2433, 0.0
          %v2562 = vmax.f32 %v2434, 0.0
          %v2563 = vmax.f32 %v2435, 0.0
          %v2564 = vmax.f32 %v2436, 0.0
          %v2565 = vmax.f32 %v2437, 0.0
          %v2566 = vmax.f32 %v2438, 0.0
          %v2567 = vmax.f32 %v2439, 0.0
          %v2568 = vmax.f32 %v2440, 0.0
          %v2569 = vmax.f32 %v2441, 0.0
          %v2570 = vmax.f32 %v2442, 0.0
          %v2571 = vmax.f32 %v2443, 0.0
          %v2572 = vmax.f32 %v2444, 0.0
          %v2573 = vmax.f32 %v2445, 0.0
          %v2574 = vmax.f32 %v2446, 0.0
          %v2575 = vmax.f32 %v2447, 0.0
          %v2576 = vmax.f32 %v2448, 0.0
          %v2577 = vmax.f32 %v2449, 0.0
          %v2578 = vmax.f32 %v2450, 0.0
          %v2579 = vmax.f32 %v2451, 0.0
          %v2580 = vmax.f32 %v2452, 0.0
          %v2581 = vmax.f32 %v2453, 0.0
          %v2582 = vmax.f32 %v2454, 0.0
          %v2583 = vmax.f32 %v2455, 0.0
          %v2584 = vmax.f32 %v2456, 0.0
          %v2585 = vmax.f32 %v2457, 0.0
          %v2586 = vmax.f32 %v2458, 0.0
          %v2587 = vmax.f32 %v2459, 0.0
          %v2588 = vmax.f32 %v2460, 0.0
          %v2589 = vmax.f32 %v2461, 0.0
          %v2590 = vmax.f32 %v2462, 0.0
          %v2591 = vmax.f32 %v2463, 0.0
          %v2592 = vmax.f32 %v2464, 0.0
          %v2593 = vmax.f32 %v2465, 0.0
          %v2594 = vmax.f32 %v2466, 0.0
          %v2595 = vmax.f32 %v2467, 0.0
          %v2596 = vmax.f32 %v2468, 0.0
          %v2597 = vmax.f32 %v2469, 0.0
          %v2598 = vmax.f32 %v2470, 0.0
          %v2599 = vmax.f32 %v2471, 0.0
          %v2600 = vmax.f32 %v2472, 0.0
          %v2601 = vmax.f32 %v2473, 0.0
          %v2602 = vmax.f32 %v2474, 0.0
          %v2603 = vmax.f32 %v2475, 0.0
          %v2604 = vmax.f32 %v2476, 0.0
          %v2605 = vmax.f32 %v2477, 0.0
          %v2606 = vmax.f32 %v2478, 0.0
          %v2607 = vmax.f32 %v2479, 0.0
          %v2608 = vmax.f32 %v2480, 0.0
          %v2609 = vmax.f32 %v2481, 0.0
          %v2610 = vmax.f32 %v2482, 0.0
          %v2611 = vpack.c.bf16 %v2484, %v2483
          %v2612 = vpack.c.bf16 %v2486, %v2485
          %v2613 = vpack.c.bf16 %v2488, %v2487
          %v2614 = vpack.c.bf16 %v2490, %v2489
          %v2615 = vpack.c.bf16 %v2492, %v2491
          %v2616 = vpack.c.bf16 %v2494, %v2493
          %v2617 = vpack.c.bf16 %v2496, %v2495
          %v2618 = vpack.c.bf16 %v2498, %v2497
          %v2619 = vpack.c.bf16 %v2500, %v2499
          %v2620 = vpack.c.bf16 %v2502, %v2501
          %v2621 = vpack.c.bf16 %v2504, %v2503
          %v2622 = vpack.c.bf16 %v2506, %v2505
          %v2623 = vpack.c.bf16 %v2508, %v2507
          %v2624 = vpack.c.bf16 %v2510, %v2509
          %v2625 = vpack.c.bf16 %v2512, %v2511
          %v2626 = vpack.c.bf16 %v2514, %v2513
          %v2627 = vpack.c.bf16 %v2516, %v2515
          %v2628 = vpack.c.bf16 %v2518, %v2517
          %v2629 = vpack.c.bf16 %v2520, %v2519
          %v2630 = vpack.c.bf16 %v2522, %v2521
          %v2631 = vpack.c.bf16 %v2524, %v2523
          %v2632 = vpack.c.bf16 %v2526, %v2525
          %v2633 = vpack.c.bf16 %v2528, %v2527
          %v2634 = vpack.c.bf16 %v2530, %v2529
          %v2635 = vpack.c.bf16 %v2532, %v2531
          %v2636 = vpack.c.bf16 %v2534, %v2533
          %v2637 = vpack.c.bf16 %v2536, %v2535
          %v2638 = vpack.c.bf16 %v2538, %v2537
          %v2639 = vpack.c.bf16 %v2540, %v2539
          %v2640 = vpack.c.bf16 %v2542, %v2541
          %v2641 = vpack.c.bf16 %v2544, %v2543
          %v2642 = vpack.c.bf16 %v2546, %v2545
          %v2643 = vpack.c.bf16 %v2548, %v2547
          %v2644 = vpack.c.bf16 %v2550, %v2549
          %v2645 = vpack.c.bf16 %v2552, %v2551
          %v2646 = vpack.c.bf16 %v2554, %v2553
          %v2647 = vpack.c.bf16 %v2556, %v2555
          %v2648 = vpack.c.bf16 %v2558, %v2557
          %v2649 = vpack.c.bf16 %v2560, %v2559
          %v2650 = vpack.c.bf16 %v2562, %v2561
          %v2651 = vpack.c.bf16 %v2564, %v2563
          %v2652 = vpack.c.bf16 %v2566, %v2565
          %v2653 = vpack.c.bf16 %v2568, %v2567
          %v2654 = vpack.c.bf16 %v2570, %v2569
          %v2655 = vpack.c.bf16 %v2572, %v2571
          %v2656 = vpack.c.bf16 %v2574, %v2573
          %v2657 = vpack.c.bf16 %v2576, %v2575
          %v2658 = vpack.c.bf16 %v2578, %v2577
          %v2659 = vpack.c.bf16 %v2580, %v2579
          %v2660 = vpack.c.bf16 %v2582, %v2581
          %v2661 = vpack.c.bf16 %v2584, %v2583
          %v2662 = vpack.c.bf16 %v2586, %v2585
          %v2663 = vpack.c.bf16 %v2588, %v2587
          %v2664 = vpack.c.bf16 %v2590, %v2589
          %v2665 = vpack.c.bf16 %v2592, %v2591
          %v2666 = vpack.c.bf16 %v2594, %v2593
          %v2667 = vpack.c.bf16 %v2596, %v2595
          %v2668 = vpack.c.bf16 %v2598, %v2597
          %v2669 = vpack.c.bf16 %v2600, %v2599
          %v2670 = vpack.c.bf16 %v2602, %v2601
          %v2671 = vpack.c.bf16 %v2604, %v2603
          %v2672 = vpack.c.bf16 %v2606, %v2605
          %v2673 = vpack.c.bf16 %v2608, %v2607
          %v2674 = vpack.c.bf16 %v2610, %v2609
          %v2739 = vunpack.c.l.b16 %v2611
          %v2740 = vunpack.c.h.b16 %v2611
          %v2741 = vunpack.c.l.b16 %v2612
          %v2742 = vunpack.c.h.b16 %v2612
          %v2743 = vunpack.c.l.b16 %v2613
          %v2744 = vunpack.c.h.b16 %v2613
          %v2745 = vunpack.c.l.b16 %v2614
          %v2746 = vunpack.c.h.b16 %v2614
          %v2747 = vunpack.c.l.b16 %v2615
          %v2748 = vunpack.c.h.b16 %v2615
          %v2749 = vunpack.c.l.b16 %v2616
          %v2750 = vunpack.c.h.b16 %v2616
          %v2751 = vunpack.c.l.b16 %v2617
          %v2752 = vunpack.c.h.b16 %v2617
          %v2753 = vunpack.c.l.b16 %v2618
          %v2754 = vunpack.c.h.b16 %v2618
          %v2755 = vunpack.c.l.b16 %v2619
          %v2756 = vunpack.c.h.b16 %v2619
          %v2757 = vunpack.c.l.b16 %v2620
          %v2758 = vunpack.c.h.b16 %v2620
          %v2759 = vunpack.c.l.b16 %v2621
          %v2760 = vunpack.c.h.b16 %v2621
          %v2761 = vunpack.c.l.b16 %v2622
          %v2762 = vunpack.c.h.b16 %v2622
          %v2763 = vunpack.c.l.b16 %v2623
          %v2764 = vunpack.c.h.b16 %v2623
          %v2765 = vunpack.c.l.b16 %v2624
          %v2766 = vunpack.c.h.b16 %v2624
          %v2767 = vunpack.c.l.b16 %v2625
          %v2768 = vunpack.c.h.b16 %v2625
          %v2769 = vunpack.c.l.b16 %v2626
          %v2770 = vunpack.c.h.b16 %v2626
          %v2771 = vunpack.c.l.b16 %v2627
          %v2772 = vunpack.c.h.b16 %v2627
          %v2773 = vunpack.c.l.b16 %v2628
          %v2774 = vunpack.c.h.b16 %v2628
          %v2775 = vunpack.c.l.b16 %v2629
          %v2776 = vunpack.c.h.b16 %v2629
          %v2777 = vunpack.c.l.b16 %v2630
          %v2778 = vunpack.c.h.b16 %v2630
          %v2779 = vunpack.c.l.b16 %v2631
          %v2780 = vunpack.c.h.b16 %v2631
          %v2781 = vunpack.c.l.b16 %v2632
          %v2782 = vunpack.c.h.b16 %v2632
          %v2783 = vunpack.c.l.b16 %v2633
          %v2784 = vunpack.c.h.b16 %v2633
          %v2785 = vunpack.c.l.b16 %v2634
          %v2786 = vunpack.c.h.b16 %v2634
          %v2787 = vunpack.c.l.b16 %v2635
          %v2788 = vunpack.c.h.b16 %v2635
          %v2789 = vunpack.c.l.b16 %v2636
          %v2790 = vunpack.c.h.b16 %v2636
          %v2791 = vunpack.c.l.b16 %v2637
          %v2792 = vunpack.c.h.b16 %v2637
          %v2793 = vunpack.c.l.b16 %v2638
          %v2794 = vunpack.c.h.b16 %v2638
          %v2795 = vunpack.c.l.b16 %v2639
          %v2796 = vunpack.c.h.b16 %v2639
          %v2797 = vunpack.c.l.b16 %v2640
          %v2798 = vunpack.c.h.b16 %v2640
          %v2799 = vunpack.c.l.b16 %v2641
          %v2800 = vunpack.c.h.b16 %v2641
          %v2801 = vunpack.c.l.b16 %v2642
          %v2802 = vunpack.c.h.b16 %v2642
          %v2803 = vunpack.c.l.b16 %v2643
          %v2804 = vunpack.c.h.b16 %v2643
          %v2805 = vunpack.c.l.b16 %v2644
          %v2806 = vunpack.c.h.b16 %v2644
          %v2807 = vunpack.c.l.b16 %v2645
          %v2808 = vunpack.c.h.b16 %v2645
          %v2809 = vunpack.c.l.b16 %v2646
          %v2810 = vunpack.c.h.b16 %v2646
          %v2811 = vunpack.c.l.b16 %v2647
          %v2812 = vunpack.c.h.b16 %v2647
          %v2813 = vunpack.c.l.b16 %v2648
          %v2814 = vunpack.c.h.b16 %v2648
          %v2815 = vunpack.c.l.b16 %v2649
          %v2816 = vunpack.c.h.b16 %v2649
          %v2817 = vunpack.c.l.b16 %v2650
          %v2818 = vunpack.c.h.b16 %v2650
          %v2819 = vunpack.c.l.b16 %v2651
          %v2820 = vunpack.c.h.b16 %v2651
          %v2821 = vunpack.c.l.b16 %v2652
          %v2822 = vunpack.c.h.b16 %v2652
          %v2823 = vunpack.c.l.b16 %v2653
          %v2824 = vunpack.c.h.b16 %v2653
          %v2825 = vunpack.c.l.b16 %v2654
          %v2826 = vunpack.c.h.b16 %v2654
          %v2827 = vunpack.c.l.b16 %v2655
          %v2828 = vunpack.c.h.b16 %v2655
          %v2829 = vunpack.c.l.b16 %v2656
          %v2830 = vunpack.c.h.b16 %v2656
          %v2831 = vunpack.c.l.b16 %v2657
          %v2832 = vunpack.c.h.b16 %v2657
          %v2833 = vunpack.c.l.b16 %v2658
          %v2834 = vunpack.c.h.b16 %v2658
          %v2835 = vunpack.c.l.b16 %v2659
          %v2836 = vunpack.c.h.b16 %v2659
          %v2837 = vunpack.c.l.b16 %v2660
          %v2838 = vunpack.c.h.b16 %v2660
          %v2839 = vunpack.c.l.b16 %v2661
          %v2840 = vunpack.c.h.b16 %v2661
          %v2841 = vunpack.c.l.b16 %v2662
          %v2842 = vunpack.c.h.b16 %v2662
          %v2843 = vunpack.c.l.b16 %v2663
          %v2844 = vunpack.c.h.b16 %v2663
          %v2845 = vunpack.c.l.b16 %v2664
          %v2846 = vunpack.c.h.b16 %v2664
          %v2847 = vunpack.c.l.b16 %v2665
          %v2848 = vunpack.c.h.b16 %v2665
          %v2849 = vunpack.c.l.b16 %v2666
          %v2850 = vunpack.c.h.b16 %v2666
          %v2851 = vunpack.c.l.b16 %v2667
          %v2852 = vunpack.c.h.b16 %v2667
          %v2853 = vunpack.c.l.b16 %v2668
          %v2854 = vunpack.c.h.b16 %v2668
          %v2855 = vunpack.c.l.b16 %v2669
          %v2856 = vunpack.c.h.b16 %v2669
          %v2857 = vunpack.c.l.b16 %v2670
          %v2858 = vunpack.c.h.b16 %v2670
          %v2859 = vunpack.c.l.b16 %v2671
          %v2860 = vunpack.c.h.b16 %v2671
          %v2861 = vunpack.c.l.b16 %v2672
          %v2862 = vunpack.c.h.b16 %v2672
          %v2863 = vunpack.c.l.b16 %v2673
          %v2864 = vunpack.c.h.b16 %v2673
          %v2865 = vunpack.c.l.b16 %v2674
          %v2866 = vunpack.c.h.b16 %v2674
          %v2867 = vpack.c.b16 %v2739, %v2739
          %v2868 = vpack.c.b16 %v2740, %v2740
          %v2869 = vpack.c.b16 %v2741, %v2741
          %v2870 = vpack.c.b16 %v2742, %v2742
          %v2871 = vpack.c.b16 %v2743, %v2743
          %v2872 = vpack.c.b16 %v2744, %v2744
          %v2873 = vpack.c.b16 %v2745, %v2745
          %v2874 = vpack.c.b16 %v2746, %v2746
          %v2875 = vpack.c.b16 %v2747, %v2747
          %v2876 = vpack.c.b16 %v2748, %v2748
          %v2877 = vpack.c.b16 %v2749, %v2749
          %v2878 = vpack.c.b16 %v2750, %v2750
          %v2879 = vpack.c.b16 %v2751, %v2751
          %v2880 = vpack.c.b16 %v2752, %v2752
          %v2881 = vpack.c.b16 %v2753, %v2753
          %v2882 = vpack.c.b16 %v2754, %v2754
          %v2883 = vpack.c.b16 %v2755, %v2755
          %v2884 = vpack.c.b16 %v2756, %v2756
          %v2885 = vpack.c.b16 %v2757, %v2757
          %v2886 = vpack.c.b16 %v2758, %v2758
          %v2887 = vpack.c.b16 %v2759, %v2759
          %v2888 = vpack.c.b16 %v2760, %v2760
          %v2889 = vpack.c.b16 %v2761, %v2761
          %v2890 = vpack.c.b16 %v2762, %v2762
          %v2891 = vpack.c.b16 %v2763, %v2763
          %v2892 = vpack.c.b16 %v2764, %v2764
          %v2893 = vpack.c.b16 %v2765, %v2765
          %v2894 = vpack.c.b16 %v2766, %v2766
          %v2895 = vpack.c.b16 %v2767, %v2767
          %v2896 = vpack.c.b16 %v2768, %v2768
          %v2897 = vpack.c.b16 %v2769, %v2769
          %v2898 = vpack.c.b16 %v2770, %v2770
          %v2899 = vpack.c.b16 %v2771, %v2771
          %v2900 = vpack.c.b16 %v2772, %v2772
          %v2901 = vpack.c.b16 %v2773, %v2773
          %v2902 = vpack.c.b16 %v2774, %v2774
          %v2903 = vpack.c.b16 %v2775, %v2775
          %v2904 = vpack.c.b16 %v2776, %v2776
          %v2905 = vpack.c.b16 %v2777, %v2777
          %v2906 = vpack.c.b16 %v2778, %v2778
          %v2907 = vpack.c.b16 %v2779, %v2779
          %v2908 = vpack.c.b16 %v2780, %v2780
          %v2909 = vpack.c.b16 %v2781, %v2781
          %v2910 = vpack.c.b16 %v2782, %v2782
          %v2911 = vpack.c.b16 %v2783, %v2783
          %v2912 = vpack.c.b16 %v2784, %v2784
          %v2913 = vpack.c.b16 %v2785, %v2785
          %v2914 = vpack.c.b16 %v2786, %v2786
          %v2915 = vpack.c.b16 %v2787, %v2787
          %v2916 = vpack.c.b16 %v2788, %v2788
          %v2917 = vpack.c.b16 %v2789, %v2789
          %v2918 = vpack.c.b16 %v2790, %v2790
          %v2919 = vpack.c.b16 %v2791, %v2791
          %v2920 = vpack.c.b16 %v2792, %v2792
          %v2921 = vpack.c.b16 %v2793, %v2793
          %v2922 = vpack.c.b16 %v2794, %v2794
          %v2923 = vpack.c.b16 %v2795, %v2795
          %v2924 = vpack.c.b16 %v2796, %v2796
          %v2925 = vpack.c.b16 %v2797, %v2797
          %v2926 = vpack.c.b16 %v2798, %v2798
          %v2927 = vpack.c.b16 %v2799, %v2799
          %v2928 = vpack.c.b16 %v2800, %v2800
          %v2929 = vpack.c.b16 %v2801, %v2801
          %v2930 = vpack.c.b16 %v2802, %v2802
          %v2931 = vpack.c.b16 %v2803, %v2803
          %v2932 = vpack.c.b16 %v2804, %v2804
          %v2933 = vpack.c.b16 %v2805, %v2805
          %v2934 = vpack.c.b16 %v2806, %v2806
          %v2935 = vpack.c.b16 %v2807, %v2807
          %v2936 = vpack.c.b16 %v2808, %v2808
          %v2937 = vpack.c.b16 %v2809, %v2809
          %v2938 = vpack.c.b16 %v2810, %v2810
          %v2939 = vpack.c.b16 %v2811, %v2811
          %v2940 = vpack.c.b16 %v2812, %v2812
          %v2941 = vpack.c.b16 %v2813, %v2813
          %v2942 = vpack.c.b16 %v2814, %v2814
          %v2943 = vpack.c.b16 %v2815, %v2815
          %v2944 = vpack.c.b16 %v2816, %v2816
          %v2945 = vpack.c.b16 %v2817, %v2817
          %v2946 = vpack.c.b16 %v2818, %v2818
          %v2947 = vpack.c.b16 %v2819, %v2819
          %v2948 = vpack.c.b16 %v2820, %v2820
          %v2949 = vpack.c.b16 %v2821, %v2821
          %v2950 = vpack.c.b16 %v2822, %v2822
          %v2951 = vpack.c.b16 %v2823, %v2823
          %v2952 = vpack.c.b16 %v2824, %v2824
          %v2953 = vpack.c.b16 %v2825, %v2825
          %v2954 = vpack.c.b16 %v2826, %v2826
          %v2955 = vpack.c.b16 %v2827, %v2827
          %v2956 = vpack.c.b16 %v2828, %v2828
          %v2957 = vpack.c.b16 %v2829, %v2829
          %v2958 = vpack.c.b16 %v2830, %v2830
          %v2959 = vpack.c.b16 %v2831, %v2831
          %v2960 = vpack.c.b16 %v2832, %v2832
          %v2961 = vpack.c.b16 %v2833, %v2833
          %v2962 = vpack.c.b16 %v2834, %v2834
          %v2963 = vpack.c.b16 %v2835, %v2835
          %v2964 = vpack.c.b16 %v2836, %v2836
          %v2965 = vpack.c.b16 %v2837, %v2837
          %v2966 = vpack.c.b16 %v2838, %v2838
          %v2967 = vpack.c.b16 %v2839, %v2839
          %v2968 = vpack.c.b16 %v2840, %v2840
          %v2969 = vpack.c.b16 %v2841, %v2841
          %v2970 = vpack.c.b16 %v2842, %v2842
          %v2971 = vpack.c.b16 %v2843, %v2843
          %v2972 = vpack.c.b16 %v2844, %v2844
          %v2973 = vpack.c.b16 %v2845, %v2845
          %v2974 = vpack.c.b16 %v2846, %v2846
          %v2975 = vpack.c.b16 %v2847, %v2847
          %v2976 = vpack.c.b16 %v2848, %v2848
          %v2977 = vpack.c.b16 %v2849, %v2849
          %v2978 = vpack.c.b16 %v2850, %v2850
          %v2979 = vpack.c.b16 %v2851, %v2851
          %v2980 = vpack.c.b16 %v2852, %v2852
          %v2981 = vpack.c.b16 %v2853, %v2853
          %v2982 = vpack.c.b16 %v2854, %v2854
          %v2983 = vpack.c.b16 %v2855, %v2855
          %v2984 = vpack.c.b16 %v2856, %v2856
          %v2985 = vpack.c.b16 %v2857, %v2857
          %v2986 = vpack.c.b16 %v2858, %v2858
          %v2987 = vpack.c.b16 %v2859, %v2859
          %v2988 = vpack.c.b16 %v2860, %v2860
          %v2989 = vpack.c.b16 %v2861, %v2861
          %v2990 = vpack.c.b16 %v2862, %v2862
          %v2991 = vpack.c.b16 %v2863, %v2863
          %v2992 = vpack.c.b16 %v2864, %v2864
          %v2993 = vpack.c.b16 %v2865, %v2865
          %v2994 = vpack.c.b16 %v2866, %v2866
          %3123 = vst [vmem:[%s251] sm:$0xf] %v2867
          %3124 = vst [vmem:[%s251 + $0x4] sm:$0xf] %v2868
          %3125 = vst [vmem:[%s251 + $0x8] sm:$0xf] %v2869
          %3126 = vst [vmem:[%s251 + $0xc] sm:$0xf] %v2870
          %3127 = vst [vmem:[%s251 + $0x10] sm:$0xf] %v2871
          %3128 = vst [vmem:[%s251 + $0x14] sm:$0xf] %v2872
          %3129 = vst [vmem:[%s251 + $0x18] sm:$0xf] %v2873
          %3130 = vst [vmem:[%s251 + $0x1c] sm:$0xf] %v2874
          %3131 = vst [vmem:[%s251 + $0x20] sm:$0xf] %v2875
          %3132 = vst [vmem:[%s251 + $0x24] sm:$0xf] %v2876
          %3133 = vst [vmem:[%s251 + $0x28] sm:$0xf] %v2877
          %3134 = vst [vmem:[%s251 + $0x2c] sm:$0xf] %v2878
          %3135 = vst [vmem:[%s251 + $0x30] sm:$0xf] %v2879
          %3136 = vst [vmem:[%s251 + $0x34] sm:$0xf] %v2880
          %3137 = vst [vmem:[%s251 + $0x38] sm:$0xf] %v2881
          %3138 = vst [vmem:[%s251 + $0x3c] sm:$0xf] %v2882
          %3139 = vst [vmem:[%s251 + $0x40] sm:$0xf] %v2883
          %3140 = vst [vmem:[%s251 + $0x44] sm:$0xf] %v2884
          %3141 = vst [vmem:[%s251 + $0x48] sm:$0xf] %v2885
          %3142 = vst [vmem:[%s251 + $0x4c] sm:$0xf] %v2886
          %3143 = vst [vmem:[%s251 + $0x50] sm:$0xf] %v2887
          %3144 = vst [vmem:[%s251 + $0x54] sm:$0xf] %v2888
          %3145 = vst [vmem:[%s251 + $0x58] sm:$0xf] %v2889
          %3146 = vst [vmem:[%s251 + $0x5c] sm:$0xf] %v2890
          %3147 = vst [vmem:[%s251 + $0x60] sm:$0xf] %v2891
          %3148 = vst [vmem:[%s251 + $0x64] sm:$0xf] %v2892
          %3149 = vst [vmem:[%s251 + $0x68] sm:$0xf] %v2893
          %3150 = vst [vmem:[%s251 + $0x6c] sm:$0xf] %v2894
          %3151 = vst [vmem:[%s251 + $0x70] sm:$0xf] %v2895
          %3152 = vst [vmem:[%s251 + $0x74] sm:$0xf] %v2896
          %3153 = vst [vmem:[%s251 + $0x78] sm:$0xf] %v2897
          %3154 = vst [vmem:[%s251 + $0x7c] sm:$0xf] %v2898
          %3155 = vst [vmem:[%s251 + $0x80] sm:$0xf] %v2899
          %3156 = vst [vmem:[%s251 + $0x84] sm:$0xf] %v2900
          %3157 = vst [vmem:[%s251 + $0x88] sm:$0xf] %v2901
          %3158 = vst [vmem:[%s251 + $0x8c] sm:$0xf] %v2902
          %3159 = vst [vmem:[%s251 + $0x90] sm:$0xf] %v2903
          %3160 = vst [vmem:[%s251 + $0x94] sm:$0xf] %v2904
          %3161 = vst [vmem:[%s251 + $0x98] sm:$0xf] %v2905
          %3162 = vst [vmem:[%s251 + $0x9c] sm:$0xf] %v2906
          %3163 = vst [vmem:[%s251 + $0xa0] sm:$0xf] %v2907
          %3164 = vst [vmem:[%s251 + $0xa4] sm:$0xf] %v2908
          %3165 = vst [vmem:[%s251 + $0xa8] sm:$0xf] %v2909
          %3166 = vst [vmem:[%s251 + $0xac] sm:$0xf] %v2910
          %3167 = vst [vmem:[%s251 + $0xb0] sm:$0xf] %v2911
          %3168 = vst [vmem:[%s251 + $0xb4] sm:$0xf] %v2912
          %3169 = vst [vmem:[%s251 + $0xb8] sm:$0xf] %v2913
          %3170 = vst [vmem:[%s251 + $0xbc] sm:$0xf] %v2914
          %3171 = vst [vmem:[%s251 + $0xc0] sm:$0xf] %v2915
          %3172 = vst [vmem:[%s251 + $0xc4] sm:$0xf] %v2916
          %3173 = vst [vmem:[%s251 + $0xc8] sm:$0xf] %v2917
          %3174 = vst [vmem:[%s251 + $0xcc] sm:$0xf] %v2918
          %3175 = vst [vmem:[%s251 + $0xd0] sm:$0xf] %v2919
          %3176 = vst [vmem:[%s251 + $0xd4] sm:$0xf] %v2920
          %3177 = vst [vmem:[%s251 + $0xd8] sm:$0xf] %v2921
          %3178 = vst [vmem:[%s251 + $0xdc] sm:$0xf] %v2922
          %3179 = vst [vmem:[%s251 + $0xe0] sm:$0xf] %v2923
          %3180 = vst [vmem:[%s251 + $0xe4] sm:$0xf] %v2924
          %3181 = vst [vmem:[%s251 + $0xe8] sm:$0xf] %v2925
          %3182 = vst [vmem:[%s251 + $0xec] sm:$0xf] %v2926
          %3183 = vst [vmem:[%s251 + $0xf0] sm:$0xf] %v2927
          %3184 = vst [vmem:[%s251 + $0xf4] sm:$0xf] %v2928
          %3185 = vst [vmem:[%s251 + $0xf8] sm:$0xf] %v2929
          %3186 = vst [vmem:[%s251 + $0xfc] sm:$0xf] %v2930
          %3187 = vst [vmem:[%s251 + $0x100] sm:$0xf] %v2931
          %3188 = vst [vmem:[%s251 + $0x104] sm:$0xf] %v2932
          %3189 = vst [vmem:[%s251 + $0x108] sm:$0xf] %v2933
          %3190 = vst [vmem:[%s251 + $0x10c] sm:$0xf] %v2934
          %3191 = vst [vmem:[%s251 + $0x110] sm:$0xf] %v2935
          %3192 = vst [vmem:[%s251 + $0x114] sm:$0xf] %v2936
          %3193 = vst [vmem:[%s251 + $0x118] sm:$0xf] %v2937
          %3194 = vst [vmem:[%s251 + $0x11c] sm:$0xf] %v2938
          %3195 = vst [vmem:[%s251 + $0x120] sm:$0xf] %v2939
          %3196 = vst [vmem:[%s251 + $0x124] sm:$0xf] %v2940
          %3197 = vst [vmem:[%s251 + $0x128] sm:$0xf] %v2941
          %3198 = vst [vmem:[%s251 + $0x12c] sm:$0xf] %v2942
          %3199 = vst [vmem:[%s251 + $0x130] sm:$0xf] %v2943
          %3200 = vst [vmem:[%s251 + $0x134] sm:$0xf] %v2944
          %3201 = vst [vmem:[%s251 + $0x138] sm:$0xf] %v2945
          %3202 = vst [vmem:[%s251 + $0x13c] sm:$0xf] %v2946
          %3203 = vst [vmem:[%s251 + $0x140] sm:$0xf] %v2947
          %3204 = vst [vmem:[%s251 + $0x144] sm:$0xf] %v2948
          %3205 = vst [vmem:[%s251 + $0x148] sm:$0xf] %v2949
          %3206 = vst [vmem:[%s251 + $0x14c] sm:$0xf] %v2950
          %3207 = vst [vmem:[%s251 + $0x150] sm:$0xf] %v2951
          %3208 = vst [vmem:[%s251 + $0x154] sm:$0xf] %v2952
          %3209 = vst [vmem:[%s251 + $0x158] sm:$0xf] %v2953
          %3210 = vst [vmem:[%s251 + $0x15c] sm:$0xf] %v2954
          %3211 = vst [vmem:[%s251 + $0x160] sm:$0xf] %v2955
          %3212 = vst [vmem:[%s251 + $0x164] sm:$0xf] %v2956
          %3213 = vst [vmem:[%s251 + $0x168] sm:$0xf] %v2957
          %3214 = vst [vmem:[%s251 + $0x16c] sm:$0xf] %v2958
          %3215 = vst [vmem:[%s251 + $0x170] sm:$0xf] %v2959
          %3216 = vst [vmem:[%s251 + $0x174] sm:$0xf] %v2960
          %3217 = vst [vmem:[%s251 + $0x178] sm:$0xf] %v2961
          %3218 = vst [vmem:[%s251 + $0x17c] sm:$0xf] %v2962
          %3219 = vst [vmem:[%s251 + $0x180] sm:$0xf] %v2963
          %3220 = vst [vmem:[%s251 + $0x184] sm:$0xf] %v2964
          %3221 = vst [vmem:[%s251 + $0x188] sm:$0xf] %v2965
          %3222 = vst [vmem:[%s251 + $0x18c] sm:$0xf] %v2966
          %3223 = vst [vmem:[%s251 + $0x190] sm:$0xf] %v2967
          %3224 = vst [vmem:[%s251 + $0x194] sm:$0xf] %v2968
          %3225 = vst [vmem:[%s251 + $0x198] sm:$0xf] %v2969
          %3226 = vst [vmem:[%s251 + $0x19c] sm:$0xf] %v2970
          %3227 = vst [vmem:[%s251 + $0x1a0] sm:$0xf] %v2971
          %3228 = vst [vmem:[%s251 + $0x1a4] sm:$0xf] %v2972
          %3229 = vst [vmem:[%s251 + $0x1a8] sm:$0xf] %v2973
          %3230 = vst [vmem:[%s251 + $0x1ac] sm:$0xf] %v2974
          %3231 = vst [vmem:[%s251 + $0x1b0] sm:$0xf] %v2975
          %3232 = vst [vmem:[%s251 + $0x1b4] sm:$0xf] %v2976
          %3233 = vst [vmem:[%s251 + $0x1b8] sm:$0xf] %v2977
          %3234 = vst [vmem:[%s251 + $0x1bc] sm:$0xf] %v2978
          %3235 = vst [vmem:[%s251 + $0x1c0] sm:$0xf] %v2979
          %3236 = vst [vmem:[%s251 + $0x1c4] sm:$0xf] %v2980
          %3237 = vst [vmem:[%s251 + $0x1c8] sm:$0xf] %v2981
          %3238 = vst [vmem:[%s251 + $0x1cc] sm:$0xf] %v2982
          %3239 = vst [vmem:[%s251 + $0x1d0] sm:$0xf] %v2983
          %3240 = vst [vmem:[%s251 + $0x1d4] sm:$0xf] %v2984
          %3241 = vst [vmem:[%s251 + $0x1d8] sm:$0xf] %v2985
          %3242 = vst [vmem:[%s251 + $0x1dc] sm:$0xf] %v2986
          %3243 = vst [vmem:[%s251 + $0x1e0] sm:$0xf] %v2987
          %3244 = vst [vmem:[%s251 + $0x1e4] sm:$0xf] %v2988
          %3245 = vst [vmem:[%s251 + $0x1e8] sm:$0xf] %v2989
          %3246 = vst [vmem:[%s251 + $0x1ec] sm:$0xf] %v2990
          %3247 = vst [vmem:[%s251 + $0x1f0] sm:$0xf] %v2991
          %3248 = vst [vmem:[%s251 + $0x1f4] sm:$0xf] %v2992
          %3249 = vst [vmem:[%s251 + $0x1f8] sm:$0xf] %v2993
          %3250 = vst [vmem:[%s251 + $0x1fc] sm:$0xf] %v2994
        $region48: #{tpu_custom_call.1} parent=31 // pred_fallthru
          _
        %s3251 = sand.u32 %s132, 1
        %s3252 = scalar_lea.sflag [#allocation5], %s3251
        %s3253 = sand.u32 %s132, 1
        %s3254 = smul.addr %s3253, 512
        %s3255 = scalar_lea.vmem [#allocation8], %s3254
        // Predicated region
        $region49: #{tpu_custom_call.1} parent=31 // pred_check
          %p3256 = pneg %p142
        $region50: #{tpu_custom_call.1} parent=31 // pred_check_branch
          %3258 = sbr.rel (%p3256) target = $region52
        $region51: #{tpu_custom_call.1} parent=31 // pred_region
          %s3259 = smul.u32 128, %s26
          %s3261 = ssub.s32 8192, 8192
          %3262 = vsyncadd %s3252, %s3261
          %s3263 = sadd.s32 %s27, %s3259
          %s3264 = smul.addr %s3263, 64
          %s3265 = scalar_lea.hbm %s3, %s3264
          %s3266 = sshll.u32 %s3255, 4
          %s3267 = int_to_ptr.vmem [resolvable:$true] %s3266
          %3272 = dma.vmem_to_hbm [thread:$0]  %s3267, 8192, %s3265, %s3252, 64, 64, 4
        $region52: #{tpu_custom_call.1} parent=31 // pred_fallthru
          _
      $region32: #{tpu_custom_call.1} parent=5 // pred_fallthru
        _
      %p3273 = scmp.le.s32.totalorder 2, %s16
      // Predicated region
      $region53: #{tpu_custom_call.1} parent=5 // pred_check
        %p3274 = pneg %p3273
      $region54: #{tpu_custom_call.1} parent=5 // pred_check_branch
        %3276 = sbr.rel (%p3274) target = $region56
      $region55: #{tpu_custom_call.1} parent=5 // pred_region
        %s3277 = ssub.s32 %s16, 2
        // Predicated region
        $region57: #{tpu_custom_call.1} parent=55 // pred_check
          %p3278 = pneg %p148
        $region58: #{tpu_custom_call.1} parent=55 // pred_check_branch
          %3280 = sbr.rel (%p3278) target = $region60
        $region59: #{tpu_custom_call.1} parent=55 // pred_region
          %s3281 = sand.u32 %s133, 1
          %s3282 = scalar_lea.sflag [#allocation5], %s3281
          %s3283 = sand.u32 %s133, 1
          %s3284 = smul.addr %s3283, 512
          %s3285 = scalar_lea.vmem [#allocation8], %s3284
          %3286 = dma.done %s3282, 8192
        $region60: #{tpu_custom_call.1} parent=55 // pred_fallthru
          _
      $region56: #{tpu_custom_call.1} parent=5 // pred_fallthru
        _
    $region6: #{tpu_custom_call.1} parent=1 // loop_footer
      %s20 = sadd.s32 1, %s16
    $region7: #{tpu_custom_call.1} parent=1 // loop_footer_branch
      %15 = sbr.rel target = $region3
    $region8: #{tpu_custom_call.1} parent=1 // loop_exit
      _
    %3287 = vsyncpa [#allocation4], 1
    %s3288 = scalar_lea.sflag [#allocation4], 1
    %3289 = vsyncpa %s3288, 1
    %3290 = vsyncpa [#allocation7], 1
    %3291 = vsyncpa [#allocation5], 1
    %s3292 = scalar_lea.sflag [#allocation5], 1
    %3293 = vsyncpa %s3292, 1

</llo_original>
